<compile_context>
chip_gen: v6e
topology: v6e:2x2x1
jax: 0.10.0
libtpu: 0.0.40
codegen_flags: <defaults>
</compile_context>

<pallas_src>
import numpy as np

import jax
import jax.numpy as jnp
from jax.experimental import pallas as pl
from jax.experimental.pallas import tpu as pltpu


# ------------------------------ fused kernel --------------------------------

def _mynet_fused_kernel(x_ref, m1_ref, b1_ref, r1_ref, m2_ref, b2_ref, r2_ref,
                        wf1_ref, bf1_ref, wf2_ref, bf2_ref, o_ref):
    f32, bf16 = jnp.float32, jnp.bfloat16
    B = x_ref.shape[1]                          # samples per grid step (mult of 16)

    x = x_ref[...]                              # (28, B, 28) bf16, row-major-y

    # ---- conv1 (1 -> 10ch, k=5): ONE fused Toeplitz GEMM, K = 5*28 = 140 ----
    lhs1 = jnp.concatenate([x[dy:dy + 24] for dy in range(5)], axis=-1)  # (24,B,140)
    a1 = jnp.dot(lhs1.reshape(24 * B, 5 * 28), m1_ref[...],
                 preferred_element_type=f32) + b1_ref[...]               # (24B,384)

    # ---- 2x2 max-pool + relu: row pool = even/odd block max, col pool = 0/1
    #      selector matmuls (batch for free along M) ---------------------------
    a1_4 = a1.reshape(12, 2, B, 16 * 24)
    rm1 = jnp.maximum(a1_4[:, 0], a1_4[:, 1]).astype(bf16).reshape(12 * B, 16 * 24)
    p1 = jnp.maximum(jnp.dot(rm1, r1_ref[0], preferred_element_type=f32),
                     jnp.dot(rm1, r1_ref[1], preferred_element_type=f32))
    p1 = jnp.maximum(p1, 0.0).astype(bf16)                               # (12B,192)

    # ---- conv2 (10 -> 20ch, k=5): ONE fused Toeplitz GEMM, K = 5*192 = 960 --
    # TODO(synk): nn.Dropout2d training-mode channel masking not implemented
    #             (eval / inference path == identity).
    p1_3 = p1.reshape(12, B, 16 * 12)
    lhs2 = jnp.concatenate([p1_3[dy:dy + 8] for dy in range(5)], axis=-1)  # (8,B,960)
    a2 = jnp.dot(lhs2.reshape(8 * B, 5 * 192), m2_ref[...],
                 preferred_element_type=f32) + b2_ref[...]               # (8B,256)

    a2_4 = a2.reshape(4, 2, B, 32 * 8)
    rm2 = jnp.maximum(a2_4[:, 0], a2_4[:, 1]).astype(bf16).reshape(4 * B, 32 * 8)
    p2 = jnp.maximum(jnp.dot(rm2, r2_ref[0], preferred_element_type=f32),
                     jnp.dot(rm2, r2_ref[1], preferred_element_type=f32))
    p2 = jnp.maximum(p2, 0.0).astype(bf16)                               # (4B,128)

    # ---- fc1 (320 -> 50) + relu: single K=512 GEMM; NCHW flatten order is
    #      folded into wf1 host-side; lane concat here is 128-aligned -> free --
    p2_3 = p2.reshape(4, B, 128)
    feat = jnp.concatenate([p2_3[y] for y in range(4)], axis=-1)         # (B,512)
    h = jnp.maximum(jnp.dot(feat, wf1_ref[...], preferred_element_type=f32)
                    + bf1_ref[...], 0.0).astype(bf16)                    # (B,64)

    # ---- fc2 (50 -> 10) + log_softmax ---------------------------------------
    logits = jnp.dot(h, wf2_ref[...], preferred_element_type=f32) + bf2_ref[...]
    lane = jax.lax.broadcasted_iota(jnp.int32, logits.shape, 1)
    masked = jnp.where(lane < 10, logits, -jnp.inf)                      # pad lanes
    mx = jnp.max(masked, axis=-1, keepdims=True)
    sh = masked - mx
    lse = jnp.log(jnp.sum(jnp.exp(sh), axis=-1, keepdims=True))
    o_ref[...] = (sh - lse).astype(o_ref.dtype)                          # (B,128) dense


# ---------------------- host-side weight preprocessing ----------------------

def init_params(key):
    """Deterministic synthetic parameters, PyTorch layouts."""
    ks = jax.random.split(key, 8)

    def norm(k, shape, scale=0.1):
        return scale * jax.random.normal(k, shape, dtype=jnp.float32)

    return {
        "conv1_w": norm(ks[0], (10, 1, 5, 5)),    # (Cout, Cin, kh, kw)
        "conv1_b": norm(ks[1], (10,)),
        "conv2_w": norm(ks[2], (20, 10, 5, 5)),
        "conv2_b": norm(ks[3], (20,)),
        "fc1_w": norm(ks[4], (50, 320)),          # (out, in)
        "fc1_b": norm(ks[5], (50,)),
        "fc2_w": norm(ks[6], (10, 50)),
        "fc2_b": norm(ks[7], (10,)),
    }


def build_kernel_operands(params):
    """One-time host preprocessing of PyTorch-layout params into kernel operands."""
    c1, c1p = 10, 16
    c2, c2p = 20, 32
    f1, f1p = 50, 64
    f2p = 128

    w1 = np.asarray(params["conv1_w"], np.float32)     # (10, 1, 5, 5)
    b1 = np.asarray(params["conv1_b"], np.float32)
    w2 = np.asarray(params["conv2_w"], np.float32)     # (20, 10, 5, 5)
    b2 = np.asarray(params["conv2_b"], np.float32)
    fw1 = np.asarray(params["fc1_w"], np.float32)      # (50, 320)
    fb1 = np.asarray(params["fc1_b"], np.float32)
    fw2 = np.asarray(params["fc2_w"], np.float32)      # (10, 50)
    fb2 = np.asarray(params["fc2_b"], np.float32)

    # conv1 fused Toeplitz: m1[dy*28 + (xo+dx), co*24 + xo] = w1[co, 0, dy, dx]
    m1 = np.zeros((5 * 28, c1p * 24), np.float32)
    for dy in range(5):
        for dx in range(5):
            for xo in range(24):
                m1[dy * 28 + xo + dx, np.arange(c1) * 24 + xo] = w1[:, 0, dy, dx]

    # conv2 fused Toeplitz: m2[dy*192 + ci*12 + (xo+dx), co*8 + xo] = w2[co,ci,dy,dx]
    m2 = np.zeros((5 * c1p * 12, c2p * 8), np.float32)
    for dy in range(5):
        for dx in range(5):
            for ci in range(c1):
                for xo in range(8):
                    m2[dy * c1p * 12 + ci * 12 + xo + dx,
                       np.arange(c2) * 8 + xo] = w2[:, ci, dy, dx]

    def col_pool_selectors(w_in, c_pad):
        wo = w_in // 2
        cols = np.zeros((2, c_pad * w_in, c_pad * wo), np.float32)
        for c in range(c_pad):
            cols[0, c * w_in + 2 * np.arange(wo), c * wo + np.arange(wo)] = 1.0
            cols[1, c * w_in + 2 * np.arange(wo) + 1, c * wo + np.arange(wo)] = 1.0
        return cols

    r1 = col_pool_selectors(24, c1p)                       # (2, 384, 192)
    r2 = col_pool_selectors(8, c2p)                        # (2, 256, 128)

    b1r = np.repeat(np.pad(b1, (0, c1p - c1)), 24)[None, :]   # (1, 384)  [c*24+x]
    b2r = np.repeat(np.pad(b2, (0, c2p - c2)), 8)[None, :]    # (1, 256)  [c*8+x]

    # fc1: fold NCHW flatten (feature = c*16 + y*4 + x) into the kernel feature
    # layout (lane = y*128 + c*4 + x) as one (512, 64) slab.
    wf1 = np.zeros((4 * c2p * 4, f1p), np.float32)
    for y in range(4):
        for c in range(c2):
            for xx in range(4):
                wf1[y * 128 + c * 4 + xx, :f1] = fw1[:, c * 16 + y * 4 + xx]
    bf1 = np.zeros((1, f1p), np.float32)
    bf1[0, :f1] = fb1

    wf2 = np.zeros((f1p, f2p), np.float32)
    wf2[:f1, :10] = fw2.T
    bf2 = np.zeros((1, f2p), np.float32)
    bf2[0, :10] = fb2

    bf = jnp.bfloat16
    return {
        "m1": jnp.asarray(m1, bf), "b1": jnp.asarray(b1r),
        "r1": jnp.asarray(r1, bf),
        "m2": jnp.asarray(m2, bf), "b2": jnp.asarray(b2r),
        "r2": jnp.asarray(r2, bf),
        "wf1": jnp.asarray(wf1, bf), "bf1": jnp.asarray(bf1),
        "wf2": jnp.asarray(wf2, bf), "bf2": jnp.asarray(bf2),
    }


# -------------------------------- forward -----------------------------------

def my_network_forward(kernel_params, x_nchw, block_b=16):
    """Forward pass of MyNetwork (eval mode) — input NCHW (N, 1, 28, 28).

    block_b: samples per grid step (multiple of 16).  The batch is padded up to
    a multiple of block_b; padded rows are discarded on return.
    """
    kp = kernel_params
    n = x_nchw.shape[0]
    n_pad = -(-n // block_b) * block_b

    # Host-side: drop channel dim, bf16 once (halves input DMA), pad batch, and
    # go to row-major-y layout (28, N, 28) so in-kernel sample stacking along M
    # never needs an in-kernel transpose or sublane-misaligned reshape.
    x = x_nchw[:, 0, :, :].astype(jnp.bfloat16)
    if n_pad != n:
        x = jnp.pad(x, ((0, n_pad - n), (0, 0), (0, 0)))
    xr = jnp.transpose(x, (1, 0, 2))                       # (28, n_pad, 28)

    def const(nd):
        return lambda i: (0,) * nd

    flops = n_pad * 2 * (24 * 140 * 384 + 2 * 12 * 384 * 192 + 8 * 960 * 256
                         + 2 * 4 * 256 * 128 + 512 * 64 + 64 * 128)
    weight_bytes = sum(int(np.prod(kp[k].shape)) * kp[k].dtype.itemsize for k in kp)
    bytes_accessed = weight_bytes + n_pad * (28 * 28 * 2 + 128 * 4)

    out = pl.pallas_call(
        _mynet_fused_kernel,
        out_shape=jax.ShapeDtypeStruct((n_pad, 128), jnp.float32),
        grid=(n_pad // block_b,),
        in_specs=[
            pl.BlockSpec((28, block_b, 28), lambda i: (0, i, 0)),   # x block
            pl.BlockSpec(kp["m1"].shape, const(2)),
            pl.BlockSpec(kp["b1"].shape, const(2)),
            pl.BlockSpec(kp["r1"].shape, const(3)),
            pl.BlockSpec(kp["m2"].shape, const(2)),
            pl.BlockSpec(kp["b2"].shape, const(2)),
            pl.BlockSpec(kp["r2"].shape, const(3)),
            pl.BlockSpec(kp["wf1"].shape, const(2)),
            pl.BlockSpec(kp["bf1"].shape, const(2)),
            pl.BlockSpec(kp["wf2"].shape, const(2)),
            pl.BlockSpec(kp["bf2"].shape, const(2)),
        ],
        out_specs=pl.BlockSpec((block_b, 128), lambda i: (i, 0)),
        compiler_params=pltpu.CompilerParams(
            dimension_semantics=("parallel",)),
        cost_estimate=pl.CostEstimate(
            flops=int(flops), transcendentals=int(129 * n_pad),
            bytes_accessed=int(bytes_accessed)),
    )(xr, kp["m1"], kp["b1"], kp["r1"], kp["m2"], kp["b2"], kp["r2"],
      kp["wf1"], kp["bf1"], kp["wf2"], kp["bf2"])

    return out[:n, :10]                                    # (N, 10) log-probs


# ------------------------- pure-JAX reference (check) ------------------------

def _reference_forward(params, x):
    def pool(y):
        return jnp.maximum(jnp.maximum(y[:, :, 0::2, 0::2], y[:, :, 0::2, 1::2]),
                           jnp.maximum(y[:, :, 1::2, 0::2], y[:, :, 1::2, 1::2]))

    dn = ("NCHW", "OIHW", "NCHW")
    y = jax.lax.conv_general_dilated(x, params["conv1_w"], (1, 1), "VALID",
                                     dimension_numbers=dn)
    y = jnp.maximum(pool(y + params["conv1_b"][None, :, None, None]), 0.0)
    y = jax.lax.conv_general_dilated(y, params["conv2_w"], (1, 1), "VALID",
                                     dimension_numbers=dn)
    y = jnp.maximum(pool(y + params["conv2_b"][None, :, None, None]), 0.0)
    y = y.reshape(y.shape[0], -1)                          # NCHW flatten == view(-1,320)
    y = jnp.maximum(y @ params["fc1_w"].T + params["fc1_b"], 0.0)
    y = y @ params["fc2_w"].T + params["fc2_b"]
    return jax.nn.log_softmax(y, axis=-1)


# ---------------------------------- main -------------------------------------

if __name__ == "__main__":
    key = jax.random.PRNGKey(0)
    pkey, xkey = jax.random.split(key)
    params = init_params(pkey)
    kparams = build_kernel_operands(params)

    # Input shape implied by the module (fc1 expects 20*4*4 = 320): (N, 1, 28, 28)
    n, block_b = 32, 16                        # 2 grid steps -> balanced on v7x
    x = jax.random.normal(xkey, (n, 1, 28, 28), dtype=jnp.float32)

    fwd = jax.jit(lambda kp, xx: my_network_forward(kp, xx, block_b=block_b))
    out = jax.block_until_ready(fwd(kparams, x))

    assert out.shape == (n, 10), out.shape
    assert bool(jnp.all(jnp.isfinite(out)))
    # log_softmax rows must exponentiate-sum to ~1
    assert bool(jnp.allclose(jnp.sum(jnp.exp(out), axis=-1), 1.0, atol=1e-4))
    # match the f32 pure-JAX reference (bf16 matmul tolerance)
    ref = _reference_forward(params, x)
    assert bool(jnp.allclose(out, ref, atol=5e-2)), float(jnp.max(jnp.abs(out - ref)))

    print("KERNEL_OK")
</pallas_src>

<mosaic_0001>
module attributes {stable_mosaic.version = 11 : i64} {
  func.func @_mynet_fused_kernel(%arg0: i32, %arg1: memref<28x16x28xbf16, #tpu.memory_space<vmem>>, %arg2: memref<140x384xbf16, #tpu.memory_space<vmem>>, %arg3: memref<1x384xf32, #tpu.memory_space<vmem>>, %arg4: memref<2x384x192xbf16, #tpu.memory_space<vmem>>, %arg5: memref<960x256xbf16, #tpu.memory_space<vmem>>, %arg6: memref<1x256xf32, #tpu.memory_space<vmem>>, %arg7: memref<2x256x128xbf16, #tpu.memory_space<vmem>>, %arg8: memref<512x64xbf16, #tpu.memory_space<vmem>>, %arg9: memref<1x64xf32, #tpu.memory_space<vmem>>, %arg10: memref<64x128xbf16, #tpu.memory_space<vmem>>, %arg11: memref<1x128xf32, #tpu.memory_space<vmem>>, %arg12: memref<16x128xf32, #tpu.memory_space<vmem>>) attributes {dimension_semantics = [#tpu.dimension_semantics<parallel>], iteration_bounds = array<i64: 2>, scalar_prefetch = 0 : i64, scratch_operands = 0 : i64, tpu.core_type = #tpu.core_type<tc>, window_params = [{transform_indices = @transform_0, window_bounds = array<i64: 28, 16, 28>}, {pipeline_mode = #tpu.pipeline_mode<synchronous>, transform_indices = @transform_1, window_bounds = array<i64: 140, 384>}, {pipeline_mode = #tpu.pipeline_mode<synchronous>, transform_indices = @transform_2, window_bounds = array<i64: 1, 384>}, {pipeline_mode = #tpu.pipeline_mode<synchronous>, transform_indices = @transform_3, window_bounds = array<i64: 2, 384, 192>}, {pipeline_mode = #tpu.pipeline_mode<synchronous>, transform_indices = @transform_4, window_bounds = array<i64: 960, 256>}, {pipeline_mode = #tpu.pipeline_mode<synchronous>, transform_indices = @transform_5, window_bounds = array<i64: 1, 256>}, {pipeline_mode = #tpu.pipeline_mode<synchronous>, transform_indices = @transform_6, window_bounds = array<i64: 2, 256, 128>}, {pipeline_mode = #tpu.pipeline_mode<synchronous>, transform_indices = @transform_7, window_bounds = array<i64: 512, 64>}, {pipeline_mode = #tpu.pipeline_mode<synchronous>, transform_indices = @transform_8, window_bounds = array<i64: 1, 64>}, {pipeline_mode = #tpu.pipeline_mode<synchronous>, transform_indices = @transform_9, window_bounds = array<i64: 64, 128>}, {pipeline_mode = #tpu.pipeline_mode<synchronous>, transform_indices = @transform_10, window_bounds = array<i64: 1, 128>}, {transform_indices = @transform_11, window_bounds = array<i64: 16, 128>}]} {
    %c0 = arith.constant 0 : index
    %c0_0 = arith.constant 0 : index
    %c0_1 = arith.constant 0 : index
    %0 = vector.load %arg1[%c0, %c0_0, %c0_1] : memref<28x16x28xbf16, #tpu.memory_space<vmem>>, vector<28x16x28xbf16>
    %1 = vector.extract_strided_slice %0 {offsets = [0, 0, 0], sizes = [24, 16, 28], strides = [1, 1, 1]} : vector<28x16x28xbf16> to vector<24x16x28xbf16>
    %2 = vector.extract_strided_slice %0 {offsets = [1, 0, 0], sizes = [24, 16, 28], strides = [1, 1, 1]} : vector<28x16x28xbf16> to vector<24x16x28xbf16>
    %3 = vector.extract_strided_slice %0 {offsets = [2, 0, 0], sizes = [24, 16, 28], strides = [1, 1, 1]} : vector<28x16x28xbf16> to vector<24x16x28xbf16>
    %4 = vector.extract_strided_slice %0 {offsets = [3, 0, 0], sizes = [24, 16, 28], strides = [1, 1, 1]} : vector<28x16x28xbf16> to vector<24x16x28xbf16>
    %5 = vector.extract_strided_slice %0 {offsets = [4, 0, 0], sizes = [24, 16, 28], strides = [1, 1, 1]} : vector<28x16x28xbf16> to vector<24x16x28xbf16>
    %6 = tpu.concatenate %1, %2, %3, %4, %5 in 2 : vector<24x16x28xbf16>, vector<24x16x28xbf16>, vector<24x16x28xbf16>, vector<24x16x28xbf16>, vector<24x16x28xbf16> -> vector<24x16x140xbf16>
    %7 = vector.shape_cast %6 : vector<24x16x140xbf16> to vector<384x140xbf16>
    %c0_2 = arith.constant 0 : index
    %c0_3 = arith.constant 0 : index
    %8 = vector.load %arg2[%c0_2, %c0_3] : memref<140x384xbf16, #tpu.memory_space<vmem>>, vector<140x384xbf16>
    %cst = arith.constant dense<0.000000e+00> : vector<384x384xf32>
    %9 = tpu.matmul %7, %8, %cst {dimension_numbers = #tpu.dot_dimension_numbers<[1], [0], [0], [1], [0, 0, 1, 1], [], []>} : vector<384x140xbf16>, vector<140x384xbf16>, vector<384x384xf32> -> vector<384x384xf32>
    %c0_4 = arith.constant 0 : index
    %c0_5 = arith.constant 0 : index
    %10 = vector.load %arg3[%c0_4, %c0_5] : memref<1x384xf32, #tpu.memory_space<vmem>>, vector<1x384xf32>
    %11 = vector.broadcast %10 : vector<1x384xf32> to vector<384x384xf32>
    %12 = arith.addf %9, %11 : vector<384x384xf32>
    %13 = vector.shape_cast %12 : vector<384x384xf32> to vector<12x2x16x384xf32>
    %14 = vector.extract_strided_slice %13 {offsets = [0, 0, 0, 0], sizes = [12, 1, 16, 384], strides = [1, 1, 1, 1]} : vector<12x2x16x384xf32> to vector<12x1x16x384xf32>
    %15 = vector.shape_cast %14 : vector<12x1x16x384xf32> to vector<12x16x384xf32>
    %16 = vector.extract_strided_slice %13 {offsets = [0, 1, 0, 0], sizes = [12, 1, 16, 384], strides = [1, 1, 1, 1]} : vector<12x2x16x384xf32> to vector<12x1x16x384xf32>
    %17 = vector.shape_cast %16 : vector<12x1x16x384xf32> to vector<12x16x384xf32>
    %18 = arith.maximumf %15, %17 : vector<12x16x384xf32>
    %19 = arith.truncf %18 : vector<12x16x384xf32> to vector<12x16x384xbf16>
    %20 = vector.shape_cast %19 : vector<12x16x384xbf16> to vector<192x384xbf16>
    %c0_6 = arith.constant 0 : index
    %c0_7 = arith.constant 0 : index
    %c0_8 = arith.constant 0 : index
    %21 = vector.load %arg4[%c0_6, %c0_7, %c0_8] : memref<2x384x192xbf16, #tpu.memory_space<vmem>>, vector<1x384x192xbf16>
    %22 = vector.shape_cast %21 : vector<1x384x192xbf16> to vector<384x192xbf16>
    %cst_9 = arith.constant dense<0.000000e+00> : vector<192x192xf32>
    %23 = tpu.matmul %20, %22, %cst_9 {dimension_numbers = #tpu.dot_dimension_numbers<[1], [0], [0], [1], [0, 0, 1, 1], [], []>} : vector<192x384xbf16>, vector<384x192xbf16>, vector<192x192xf32> -> vector<192x192xf32>
    %c1 = arith.constant 1 : index
    %c0_10 = arith.constant 0 : index
    %c0_11 = arith.constant 0 : index
    %24 = vector.load %arg4[%c1, %c0_10, %c0_11] : memref<2x384x192xbf16, #tpu.memory_space<vmem>>, vector<1x384x192xbf16>
    %25 = vector.shape_cast %24 : vector<1x384x192xbf16> to vector<384x192xbf16>
    %cst_12 = arith.constant dense<0.000000e+00> : vector<192x192xf32>
    %26 = tpu.matmul %20, %25, %cst_12 {dimension_numbers = #tpu.dot_dimension_numbers<[1], [0], [0], [1], [0, 0, 1, 1], [], []>} : vector<192x384xbf16>, vector<384x192xbf16>, vector<192x192xf32> -> vector<192x192xf32>
    %27 = arith.maximumf %23, %26 : vector<192x192xf32>
    %cst_13 = arith.constant 0.000000e+00 : f32
    %28 = vector.broadcast %cst_13 : f32 to vector<192x192xf32>
    %29 = arith.maximumf %27, %28 : vector<192x192xf32>
    %30 = arith.truncf %29 : vector<192x192xf32> to vector<192x192xbf16>
    %31 = vector.shape_cast %30 : vector<192x192xbf16> to vector<12x16x192xbf16>
    %32 = vector.extract_strided_slice %31 {offsets = [0, 0, 0], sizes = [8, 16, 192], strides = [1, 1, 1]} : vector<12x16x192xbf16> to vector<8x16x192xbf16>
    %33 = vector.extract_strided_slice %31 {offsets = [1, 0, 0], sizes = [8, 16, 192], strides = [1, 1, 1]} : vector<12x16x192xbf16> to vector<8x16x192xbf16>
    %34 = vector.extract_strided_slice %31 {offsets = [2, 0, 0], sizes = [8, 16, 192], strides = [1, 1, 1]} : vector<12x16x192xbf16> to vector<8x16x192xbf16>
    %35 = vector.extract_strided_slice %31 {offsets = [3, 0, 0], sizes = [8, 16, 192], strides = [1, 1, 1]} : vector<12x16x192xbf16> to vector<8x16x192xbf16>
    %36 = vector.extract_strided_slice %31 {offsets = [4, 0, 0], sizes = [8, 16, 192], strides = [1, 1, 1]} : vector<12x16x192xbf16> to vector<8x16x192xbf16>
    %37 = tpu.concatenate %32, %33, %34, %35, %36 in 2 : vector<8x16x192xbf16>, vector<8x16x192xbf16>, vector<8x16x192xbf16>, vector<8x16x192xbf16>, vector<8x16x192xbf16> -> vector<8x16x960xbf16>
    %38 = vector.shape_cast %37 : vector<8x16x960xbf16> to vector<128x960xbf16>
    %c0_14 = arith.constant 0 : index
    %c0_15 = arith.constant 0 : index
    %39 = vector.load %arg5[%c0_14, %c0_15] : memref<960x256xbf16, #tpu.memory_space<vmem>>, vector<960x256xbf16>
    %cst_16 = arith.constant dense<0.000000e+00> : vector<128x256xf32>
    %40 = tpu.matmul %38, %39, %cst_16 {dimension_numbers = #tpu.dot_dimension_numbers<[1], [0], [0], [1], [0, 0, 1, 1], [], []>} : vector<128x960xbf16>, vector<960x256xbf16>, vector<128x256xf32> -> vector<128x256xf32>
    %c0_17 = arith.constant 0 : index
    %c0_18 = arith.constant 0 : index
    %41 = vector.load %arg6[%c0_17, %c0_18] : memref<1x256xf32, #tpu.memory_space<vmem>>, vector<1x256xf32>
    %42 = vector.broadcast %41 : vector<1x256xf32> to vector<128x256xf32>
    %43 = arith.addf %40, %42 : vector<128x256xf32>
    %44 = vector.shape_cast %43 : vector<128x256xf32> to vector<4x2x16x256xf32>
    %45 = vector.extract_strided_slice %44 {offsets = [0, 0, 0, 0], sizes = [4, 1, 16, 256], strides = [1, 1, 1, 1]} : vector<4x2x16x256xf32> to vector<4x1x16x256xf32>
    %46 = vector.shape_cast %45 : vector<4x1x16x256xf32> to vector<4x16x256xf32>
    %47 = vector.extract_strided_slice %44 {offsets = [0, 1, 0, 0], sizes = [4, 1, 16, 256], strides = [1, 1, 1, 1]} : vector<4x2x16x256xf32> to vector<4x1x16x256xf32>
    %48 = vector.shape_cast %47 : vector<4x1x16x256xf32> to vector<4x16x256xf32>
    %49 = arith.maximumf %46, %48 : vector<4x16x256xf32>
    %50 = arith.truncf %49 : vector<4x16x256xf32> to vector<4x16x256xbf16>
    %51 = vector.shape_cast %50 : vector<4x16x256xbf16> to vector<64x256xbf16>
    %c0_19 = arith.constant 0 : index
    %c0_20 = arith.constant 0 : index
    %c0_21 = arith.constant 0 : index
    %52 = vector.load %arg7[%c0_19, %c0_20, %c0_21] : memref<2x256x128xbf16, #tpu.memory_space<vmem>>, vector<1x256x128xbf16>
    %53 = vector.shape_cast %52 : vector<1x256x128xbf16> to vector<256x128xbf16>
    %cst_22 = arith.constant dense<0.000000e+00> : vector<64x128xf32>
    %54 = tpu.matmul %51, %53, %cst_22 {dimension_numbers = #tpu.dot_dimension_numbers<[1], [0], [0], [1], [0, 0, 1, 1], [], []>} : vector<64x256xbf16>, vector<256x128xbf16>, vector<64x128xf32> -> vector<64x128xf32>
    %c1_23 = arith.constant 1 : index
    %c0_24 = arith.constant 0 : index
    %c0_25 = arith.constant 0 : index
    %55 = vector.load %arg7[%c1_23, %c0_24, %c0_25] : memref<2x256x128xbf16, #tpu.memory_space<vmem>>, vector<1x256x128xbf16>
    %56 = vector.shape_cast %55 : vector<1x256x128xbf16> to vector<256x128xbf16>
    %cst_26 = arith.constant dense<0.000000e+00> : vector<64x128xf32>
    %57 = tpu.matmul %51, %56, %cst_26 {dimension_numbers = #tpu.dot_dimension_numbers<[1], [0], [0], [1], [0, 0, 1, 1], [], []>} : vector<64x256xbf16>, vector<256x128xbf16>, vector<64x128xf32> -> vector<64x128xf32>
    %58 = arith.maximumf %54, %57 : vector<64x128xf32>
    %cst_27 = arith.constant 0.000000e+00 : f32
    %59 = vector.broadcast %cst_27 : f32 to vector<64x128xf32>
    %60 = arith.maximumf %58, %59 : vector<64x128xf32>
    %61 = arith.truncf %60 : vector<64x128xf32> to vector<64x128xbf16>
    %62 = vector.shape_cast %61 : vector<64x128xbf16> to vector<4x16x128xbf16>
    %63 = vector.extract_strided_slice %62 {offsets = [0, 0, 0], sizes = [1, 16, 128], strides = [1, 1, 1]} : vector<4x16x128xbf16> to vector<1x16x128xbf16>
    %64 = vector.shape_cast %63 : vector<1x16x128xbf16> to vector<16x128xbf16>
    %65 = vector.extract_strided_slice %62 {offsets = [1, 0, 0], sizes = [1, 16, 128], strides = [1, 1, 1]} : vector<4x16x128xbf16> to vector<1x16x128xbf16>
    %66 = vector.shape_cast %65 : vector<1x16x128xbf16> to vector<16x128xbf16>
    %67 = vector.extract_strided_slice %62 {offsets = [2, 0, 0], sizes = [1, 16, 128], strides = [1, 1, 1]} : vector<4x16x128xbf16> to vector<1x16x128xbf16>
    %68 = vector.shape_cast %67 : vector<1x16x128xbf16> to vector<16x128xbf16>
    %69 = vector.extract_strided_slice %62 {offsets = [3, 0, 0], sizes = [1, 16, 128], strides = [1, 1, 1]} : vector<4x16x128xbf16> to vector<1x16x128xbf16>
    %70 = vector.shape_cast %69 : vector<1x16x128xbf16> to vector<16x128xbf16>
    %71 = tpu.concatenate %64, %66, %68, %70 in 1 : vector<16x128xbf16>, vector<16x128xbf16>, vector<16x128xbf16>, vector<16x128xbf16> -> vector<16x512xbf16>
    %c0_28 = arith.constant 0 : index
    %c0_29 = arith.constant 0 : index
    %72 = vector.load %arg8[%c0_28, %c0_29] : memref<512x64xbf16, #tpu.memory_space<vmem>>, vector<512x64xbf16>
    %cst_30 = arith.constant dense<0.000000e+00> : vector<16x64xf32>
    %73 = tpu.matmul %71, %72, %cst_30 {dimension_numbers = #tpu.dot_dimension_numbers<[1], [0], [0], [1], [0, 0, 1, 1], [], []>} : vector<16x512xbf16>, vector<512x64xbf16>, vector<16x64xf32> -> vector<16x64xf32>
    %c0_31 = arith.constant 0 : index
    %c0_32 = arith.constant 0 : index
    %74 = vector.load %arg9[%c0_31, %c0_32] : memref<1x64xf32, #tpu.memory_space<vmem>>, vector<1x64xf32>
    %75 = vector.broadcast %74 : vector<1x64xf32> to vector<16x64xf32>
    %76 = arith.addf %73, %75 : vector<16x64xf32>
    %cst_33 = arith.constant 0.000000e+00 : f32
    %77 = vector.broadcast %cst_33 : f32 to vector<16x64xf32>
    %78 = arith.maximumf %76, %77 : vector<16x64xf32>
    %79 = arith.truncf %78 : vector<16x64xf32> to vector<16x64xbf16>
    %c0_34 = arith.constant 0 : index
    %c0_35 = arith.constant 0 : index
    %80 = vector.load %arg10[%c0_34, %c0_35] : memref<64x128xbf16, #tpu.memory_space<vmem>>, vector<64x128xbf16>
    %cst_36 = arith.constant dense<0.000000e+00> : vector<16x128xf32>
    %81 = tpu.matmul %79, %80, %cst_36 {dimension_numbers = #tpu.dot_dimension_numbers<[1], [0], [0], [1], [0, 0, 1, 1], [], []>} : vector<16x64xbf16>, vector<64x128xbf16>, vector<16x128xf32> -> vector<16x128xf32>
    %c0_37 = arith.constant 0 : index
    %c0_38 = arith.constant 0 : index
    %82 = vector.load %arg11[%c0_37, %c0_38] : memref<1x128xf32, #tpu.memory_space<vmem>>, vector<1x128xf32>
    %83 = vector.broadcast %82 : vector<1x128xf32> to vector<16x128xf32>
    %84 = arith.addf %81, %83 : vector<16x128xf32>
    %85 = tpu.iota {dimensions = array<i32: 1>} : vector<16x128xi32>
    %c10_i32 = arith.constant 10 : i32
    %86 = vector.broadcast %c10_i32 : i32 to vector<16x128xi32>
    %87 = arith.cmpi slt, %85, %86 : vector<16x128xi32>
    %cst_39 = arith.constant 0xFF800000 : f32
    %88 = vector.broadcast %cst_39 : f32 to vector<16x128xf32>
    %89 = arith.select %87, %84, %88 : vector<16x128xi1>, vector<16x128xf32>
    %cst_40 = arith.constant dense<0xFF800000> : vector<16xf32>
    %90 = vector.multi_reduction <maximumf>, %89, %cst_40 [1] : vector<16x128xf32> to vector<16xf32>
    %91 = vector.shape_cast %90 : vector<16xf32> to vector<16x1xf32>
    %92 = vector.broadcast %91 : vector<16x1xf32> to vector<16x128xf32>
    %93 = arith.subf %89, %92 : vector<16x128xf32>
    %94 = math.exp %93 : vector<16x128xf32>
    %cst_41 = arith.constant dense<0.000000e+00> : vector<16xf32>
    %95 = vector.multi_reduction <add>, %94, %cst_41 [1] : vector<16x128xf32> to vector<16xf32>
    %96 = vector.shape_cast %95 : vector<16xf32> to vector<16x1xf32>
    %97 = math.log %96 : vector<16x1xf32>
    %98 = vector.broadcast %97 : vector<16x1xf32> to vector<16x128xf32>
    %99 = arith.subf %93, %98 : vector<16x128xf32>
    %c0_42 = arith.constant 0 : index
    %c0_43 = arith.constant 0 : index
    %100 = vector.load %arg12[%c0_42, %c0_43] : memref<16x128xf32, #tpu.memory_space<vmem>>, vector<16x128xf32>
    tpu.vector_store %arg12[%c0_42, %c0_43], %99 {strides = array<i32>} : memref<16x128xf32, #tpu.memory_space<vmem>>, vector<16x128xf32>,
    return
  }
  func.func @transform_0(%arg0: i32) -> (i32, i32, i32) {
    %c0_i32 = arith.constant 0 : i32
    %c0_i32_0 = arith.constant 0 : i32
    %c0_i32_1 = arith.constant 0 : i32
    return %c0_i32, %arg0, %c0_i32_0 : i32, i32, i32
  }
  func.func @transform_1(%arg0: i32) -> (i32, i32) {
    %c0_i32 = arith.constant 0 : i32
    %c0_i32_0 = arith.constant 0 : i32
    %c0_i32_1 = arith.constant 0 : i32
    return %c0_i32, %c0_i32_0 : i32, i32
  }
  func.func @transform_2(%arg0: i32) -> (i32, i32) {
    %c0_i32 = arith.constant 0 : i32
    %c0_i32_0 = arith.constant 0 : i32
    %c0_i32_1 = arith.constant 0 : i32
    return %c0_i32, %c0_i32_0 : i32, i32
  }
  func.func @transform_3(%arg0: i32) -> (i32, i32, i32) {
    %c0_i32 = arith.constant 0 : i32
    %c0_i32_0 = arith.constant 0 : i32
    %c0_i32_1 = arith.constant 0 : i32
    %c0_i32_2 = arith.constant 0 : i32
    return %c0_i32, %c0_i32_0, %c0_i32_1 : i32, i32, i32
  }
  func.func @transform_4(%arg0: i32) -> (i32, i32) {
    %c0_i32 = arith.constant 0 : i32
    %c0_i32_0 = arith.constant 0 : i32
    %c0_i32_1 = arith.constant 0 : i32
    return %c0_i32, %c0_i32_0 : i32, i32
  }
  func.func @transform_5(%arg0: i32) -> (i32, i32) {
    %c0_i32 = arith.constant 0 : i32
    %c0_i32_0 = arith.constant 0 : i32
    %c0_i32_1 = arith.constant 0 : i32
    return %c0_i32, %c0_i32_0 : i32, i32
  }
  func.func @transform_6(%arg0: i32) -> (i32, i32, i32) {
    %c0_i32 = arith.constant 0 : i32
    %c0_i32_0 = arith.constant 0 : i32
    %c0_i32_1 = arith.constant 0 : i32
    %c0_i32_2 = arith.constant 0 : i32
    return %c0_i32, %c0_i32_0, %c0_i32_1 : i32, i32, i32
  }
  func.func @transform_7(%arg0: i32) -> (i32, i32) {
    %c0_i32 = arith.constant 0 : i32
    %c0_i32_0 = arith.constant 0 : i32
    %c0_i32_1 = arith.constant 0 : i32
    return %c0_i32, %c0_i32_0 : i32, i32
  }
  func.func @transform_8(%arg0: i32) -> (i32, i32) {
    %c0_i32 = arith.constant 0 : i32
    %c0_i32_0 = arith.constant 0 : i32
    %c0_i32_1 = arith.constant 0 : i32
    return %c0_i32, %c0_i32_0 : i32, i32
  }
  func.func @transform_9(%arg0: i32) -> (i32, i32) {
    %c0_i32 = arith.constant 0 : i32
    %c0_i32_0 = arith.constant 0 : i32
    %c0_i32_1 = arith.constant 0 : i32
    return %c0_i32, %c0_i32_0 : i32, i32
  }
  func.func @transform_10(%arg0: i32) -> (i32, i32) {
    %c0_i32 = arith.constant 0 : i32
    %c0_i32_0 = arith.constant 0 : i32
    %c0_i32_1 = arith.constant 0 : i32
    return %c0_i32, %c0_i32_0 : i32, i32
  }
  func.func @transform_11(%arg0: i32) -> (i32, i32) {
    %c0_i32 = arith.constant 0 : i32
    %c0_i32_0 = arith.constant 0 : i32
    return %arg0, %c0_i32 : i32, i32
  }
}

</mosaic_0001>

<llo_original>
// kernel: _lambda_.1
$region0: #{_lambda_.1}
  #allocation0 [shape = 'u32[]', space=smem, size = 0x4, offset = 0x4, fixed_abs, tag = 'smem constant byte address 0x4 - core index']
  #allocation1 [shape = 'u32[144,128]{1,0:T(1,128)}', space=vmem, size = 0x12000, scoped, tag = 'internal scratch']
  %s0 = inlined_call_operand.vmem [shape: bf16[28,32,28], index: 0, kind: input, shape index: {}]
  %s1 = inlined_call_operand.vmem [shape: bf16[140,384], index: 1, kind: input, shape index: {}]
  %s2 = inlined_call_operand.vmem [shape: f32[1,384], index: 2, kind: input, shape index: {}]
  %s3 = inlined_call_operand.vmem [shape: bf16[2,384,192], index: 3, kind: input, shape index: {}]
  %s4 = inlined_call_operand.vmem [shape: bf16[960,256], index: 4, kind: input, shape index: {}]
  %s5 = inlined_call_operand.vmem [shape: f32[1,256], index: 5, kind: input, shape index: {}]
  %s6 = inlined_call_operand.vmem [shape: bf16[2,256,128], index: 6, kind: input, shape index: {}]
  %s7 = inlined_call_operand.vmem [shape: bf16[512,64], index: 7, kind: input, shape index: {}]
  %s8 = inlined_call_operand.vmem [shape: f32[1,64], index: 8, kind: input, shape index: {}]
  %s9 = inlined_call_operand.vmem [shape: bf16[64,128], index: 9, kind: input, shape index: {}]
  %s10 = inlined_call_operand.vmem [shape: f32[1,128], index: 10, kind: input, shape index: {}]
  %s11 = inlined_call_operand.vmem [shape: f32[32,128], index: 11, kind: output, shape index: {}]
  %s12 = sld [smem:[#allocation0]]
  $region118: #{_lambda_.1} parent=0
    _
  %s14 = ssub.s32 1, %s12
  %s15 = scalar_select 0, %s14, %s12
  $region1: #{_lambda_.1} parent=0
    #allocation2 [shape = 'u8[229376]{0}', space=vmem, size = 0x38000, scoped, tag = 'input window, operand 0']
    loop: start=0, step=1, limit=4
    $region2: #{_lambda_.1} parent=1 // loop_pre_header
      _
    $region3: #{_lambda_.1} parent=1 // loop_header
      %s17 = sphi 0, %s21
      %p18 = scmp.ge.s32.totalorder %s17, 4
      %s27 = sphi 0, %s29
      %s30 = sphi 0, %s27
      %s31 = sphi 0, %s30
      %s47 = sphi 0, %s31
      %s51 = sphi 0, %s51
      %s53 = sphi 0, %s51
      %s54 = sphi 0, %s53
      %s68 = sphi 0, %s54
      %s72 = sphi 0, %s72
      %s74 = sphi 0, %s72
      %s75 = sphi 0, %s74
      %s89 = sphi 0, %s75
      %s93 = sphi 0, %s93
      %s95 = sphi 0, %s93
      %s96 = sphi 0, %s95
      %s110 = sphi 0, %s96
      %s114 = sphi 0, %s114
      %s116 = sphi 0, %s114
      %s117 = sphi 0, %s116
      %s131 = sphi 0, %s117
      %s135 = sphi 0, %s135
      %s137 = sphi 0, %s135
      %s138 = sphi 0, %s137
      %s152 = sphi 0, %s138
      %s156 = sphi 0, %s156
      %s158 = sphi 0, %s156
      %s159 = sphi 0, %s158
      %s173 = sphi 0, %s159
      %s177 = sphi 0, %s177
      %s179 = sphi 0, %s177
      %s180 = sphi 0, %s179
      %s194 = sphi 0, %s180
      %s198 = sphi 0, %s198
      %s200 = sphi 0, %s198
      %s201 = sphi 0, %s200
      %s215 = sphi 0, %s201
      %s219 = sphi 0, %s219
      %s221 = sphi 0, %s219
      %s222 = sphi 0, %s221
      %s236 = sphi 0, %s222
      %s240 = sphi 0, %s240
      %s242 = sphi 0, %s240
      %s243 = sphi 0, %s242
      %s257 = sphi 0, %s243
      %s263 = sphi 0, %s265
      %s266 = sphi 0, %s263
      %s267 = sphi 0, %s266
      %s283 = sphi 0, %s267
    $region4: #{_lambda_.1} parent=1 // loop_header_branch
      %20 = sbr.rel (%p18) target = $region8
    $region5: #{_lambda_.1} parent=1 // loop_body
      %s22 = ssub.s32 %s17, 1
      %s23 = ssub.s32 %s17, 2
      %s24 = sadd.s32 %s17, 1
      %s25 = ssub.s32 %s17, %s24
      %p26 = scmp.eq.s32.totalorder %s25, 0
      %s28 = sadd.s32 %s27, 1
      %s29 = scalar_select %p26, %s27, %s28
      %p32 = pneg %p26
      %p33 = scmp.eq.s32.totalorder %s17, 1
      %p34 = por %p32, %p33
      %p35 = scmp.ne.s32.totalorder %s27, %s30
      %p36 = scmp.eq.s32.totalorder %s17, 0
      %p37 = por %p35, %p36
      %p38 = scmp.ne.s32.totalorder %s27, %s30
      %p39 = scmp.eq.s32.totalorder %s22, 1
      %p40 = por %p38, %p39
      %p41 = scmp.ne.s32.totalorder %s30, %s31
      %p42 = scmp.eq.s32.totalorder %s22, 0
      %p43 = por %p41, %p42
      %p44 = scmp.ne.s32.totalorder %s30, %s31
      %p45 = scmp.eq.s32.totalorder %s23, 1
      %p46 = por %p44, %p45
      %p48 = scmp.ne.s32.totalorder %s31, %s47
      %p49 = scmp.eq.s32.totalorder %s23, 0
      %p50 = por %p48, %p49
      %s52 = sadd.s32 %s51, 1
      %p55 = scmp.eq.s32.totalorder %s17, 1
      %p56 = scmp.ne.s32.totalorder %s51, %s53
      %p57 = scmp.eq.s32.totalorder %s17, 0
      %p58 = por %p56, %p57
      %p59 = scmp.ne.s32.totalorder %s51, %s53
      %p60 = scmp.eq.s32.totalorder %s22, 1
      %p61 = por %p59, %p60
      %p62 = scmp.ne.s32.totalorder %s53, %s54
      %p63 = scmp.eq.s32.totalorder %s22, 0
      %p64 = por %p62, %p63
      %p65 = scmp.ne.s32.totalorder %s53, %s54
      %p66 = scmp.eq.s32.totalorder %s23, 1
      %p67 = por %p65, %p66
      %p69 = scmp.ne.s32.totalorder %s54, %s68
      %p70 = scmp.eq.s32.totalorder %s23, 0
      %p71 = por %p69, %p70
      %s73 = sadd.s32 %s72, 1
      %p76 = scmp.eq.s32.totalorder %s17, 1
      %p77 = scmp.ne.s32.totalorder %s72, %s74
      %p78 = scmp.eq.s32.totalorder %s17, 0
      %p79 = por %p77, %p78
      %p80 = scmp.ne.s32.totalorder %s72, %s74
      %p81 = scmp.eq.s32.totalorder %s22, 1
      %p82 = por %p80, %p81
      %p83 = scmp.ne.s32.totalorder %s74, %s75
      %p84 = scmp.eq.s32.totalorder %s22, 0
      %p85 = por %p83, %p84
      %p86 = scmp.ne.s32.totalorder %s74, %s75
      %p87 = scmp.eq.s32.totalorder %s23, 1
      %p88 = por %p86, %p87
      %p90 = scmp.ne.s32.totalorder %s75, %s89
      %p91 = scmp.eq.s32.totalorder %s23, 0
      %p92 = por %p90, %p91
      %s94 = sadd.s32 %s93, 1
      %p97 = scmp.eq.s32.totalorder %s17, 1
      %p98 = scmp.ne.s32.totalorder %s93, %s95
      %p99 = scmp.eq.s32.totalorder %s17, 0
      %p100 = por %p98, %p99
      %p101 = scmp.ne.s32.totalorder %s93, %s95
      %p102 = scmp.eq.s32.totalorder %s22, 1
      %p103 = por %p101, %p102
      %p104 = scmp.ne.s32.totalorder %s95, %s96
      %p105 = scmp.eq.s32.totalorder %s22, 0
      %p106 = por %p104, %p105
      %p107 = scmp.ne.s32.totalorder %s95, %s96
      %p108 = scmp.eq.s32.totalorder %s23, 1
      %p109 = por %p107, %p108
      %p111 = scmp.ne.s32.totalorder %s96, %s110
      %p112 = scmp.eq.s32.totalorder %s23, 0
      %p113 = por %p111, %p112
      %s115 = sadd.s32 %s114, 1
      %p118 = scmp.eq.s32.totalorder %s17, 1
      %p119 = scmp.ne.s32.totalorder %s114, %s116
      %p120 = scmp.eq.s32.totalorder %s17, 0
      %p121 = por %p119, %p120
      %p122 = scmp.ne.s32.totalorder %s114, %s116
      %p123 = scmp.eq.s32.totalorder %s22, 1
      %p124 = por %p122, %p123
      %p125 = scmp.ne.s32.totalorder %s116, %s117
      %p126 = scmp.eq.s32.totalorder %s22, 0
      %p127 = por %p125, %p126
      %p128 = scmp.ne.s32.totalorder %s116, %s117
      %p129 = scmp.eq.s32.totalorder %s23, 1
      %p130 = por %p128, %p129
      %p132 = scmp.ne.s32.totalorder %s117, %s131
      %p133 = scmp.eq.s32.totalorder %s23, 0
      %p134 = por %p132, %p133
      %s136 = sadd.s32 %s135, 1
      %p139 = scmp.eq.s32.totalorder %s17, 1
      %p140 = scmp.ne.s32.totalorder %s135, %s137
      %p141 = scmp.eq.s32.totalorder %s17, 0
      %p142 = por %p140, %p141
      %p143 = scmp.ne.s32.totalorder %s135, %s137
      %p144 = scmp.eq.s32.totalorder %s22, 1
      %p145 = por %p143, %p144
      %p146 = scmp.ne.s32.totalorder %s137, %s138
      %p147 = scmp.eq.s32.totalorder %s22, 0
      %p148 = por %p146, %p147
      %p149 = scmp.ne.s32.totalorder %s137, %s138
      %p150 = scmp.eq.s32.totalorder %s23, 1
      %p151 = por %p149, %p150
      %p153 = scmp.ne.s32.totalorder %s138, %s152
      %p154 = scmp.eq.s32.totalorder %s23, 0
      %p155 = por %p153, %p154
      %s157 = sadd.s32 %s156, 1
      %p160 = scmp.eq.s32.totalorder %s17, 1
      %p161 = scmp.ne.s32.totalorder %s156, %s158
      %p162 = scmp.eq.s32.totalorder %s17, 0
      %p163 = por %p161, %p162
      %p164 = scmp.ne.s32.totalorder %s156, %s158
      %p165 = scmp.eq.s32.totalorder %s22, 1
      %p166 = por %p164, %p165
      %p167 = scmp.ne.s32.totalorder %s158, %s159
      %p168 = scmp.eq.s32.totalorder %s22, 0
      %p169 = por %p167, %p168
      %p170 = scmp.ne.s32.totalorder %s158, %s159
      %p171 = scmp.eq.s32.totalorder %s23, 1
      %p172 = por %p170, %p171
      %p174 = scmp.ne.s32.totalorder %s159, %s173
      %p175 = scmp.eq.s32.totalorder %s23, 0
      %p176 = por %p174, %p175
      %s178 = sadd.s32 %s177, 1
      %p181 = scmp.eq.s32.totalorder %s17, 1
      %p182 = scmp.ne.s32.totalorder %s177, %s179
      %p183 = scmp.eq.s32.totalorder %s17, 0
      %p184 = por %p182, %p183
      %p185 = scmp.ne.s32.totalorder %s177, %s179
      %p186 = scmp.eq.s32.totalorder %s22, 1
      %p187 = por %p185, %p186
      %p188 = scmp.ne.s32.totalorder %s179, %s180
      %p189 = scmp.eq.s32.totalorder %s22, 0
      %p190 = por %p188, %p189
      %p191 = scmp.ne.s32.totalorder %s179, %s180
      %p192 = scmp.eq.s32.totalorder %s23, 1
      %p193 = por %p191, %p192
      %p195 = scmp.ne.s32.totalorder %s180, %s194
      %p196 = scmp.eq.s32.totalorder %s23, 0
      %p197 = por %p195, %p196
      %s199 = sadd.s32 %s198, 1
      %p202 = scmp.eq.s32.totalorder %s17, 1
      %p203 = scmp.ne.s32.totalorder %s198, %s200
      %p204 = scmp.eq.s32.totalorder %s17, 0
      %p205 = por %p203, %p204
      %p206 = scmp.ne.s32.totalorder %s198, %s200
      %p207 = scmp.eq.s32.totalorder %s22, 1
      %p208 = por %p206, %p207
      %p209 = scmp.ne.s32.totalorder %s200, %s201
      %p210 = scmp.eq.s32.totalorder %s22, 0
      %p211 = por %p209, %p210
      %p212 = scmp.ne.s32.totalorder %s200, %s201
      %p213 = scmp.eq.s32.totalorder %s23, 1
      %p214 = por %p212, %p213
      %p216 = scmp.ne.s32.totalorder %s201, %s215
      %p217 = scmp.eq.s32.totalorder %s23, 0
      %p218 = por %p216, %p217
      %s220 = sadd.s32 %s219, 1
      %p223 = scmp.eq.s32.totalorder %s17, 1
      %p224 = scmp.ne.s32.totalorder %s219, %s221
      %p225 = scmp.eq.s32.totalorder %s17, 0
      %p226 = por %p224, %p225
      %p227 = scmp.ne.s32.totalorder %s219, %s221
      %p228 = scmp.eq.s32.totalorder %s22, 1
      %p229 = por %p227, %p228
      %p230 = scmp.ne.s32.totalorder %s221, %s222
      %p231 = scmp.eq.s32.totalorder %s22, 0
      %p232 = por %p230, %p231
      %p233 = scmp.ne.s32.totalorder %s221, %s222
      %p234 = scmp.eq.s32.totalorder %s23, 1
      %p235 = por %p233, %p234
      %p237 = scmp.ne.s32.totalorder %s222, %s236
      %p238 = scmp.eq.s32.totalorder %s23, 0
      %p239 = por %p237, %p238
      %s241 = sadd.s32 %s240, 1
      %p244 = scmp.eq.s32.totalorder %s17, 1
      %p245 = scmp.ne.s32.totalorder %s240, %s242
      %p246 = scmp.eq.s32.totalorder %s17, 0
      %p247 = por %p245, %p246
      %p248 = scmp.ne.s32.totalorder %s240, %s242
      %p249 = scmp.eq.s32.totalorder %s22, 1
      %p250 = por %p248, %p249
      %p251 = scmp.ne.s32.totalorder %s242, %s243
      %p252 = scmp.eq.s32.totalorder %s22, 0
      %p253 = por %p251, %p252
      %p254 = scmp.ne.s32.totalorder %s242, %s243
      %p255 = scmp.eq.s32.totalorder %s23, 1
      %p256 = por %p254, %p255
      %p258 = scmp.ne.s32.totalorder %s243, %s257
      %p259 = scmp.eq.s32.totalorder %s23, 0
      %p260 = por %p258, %p259
      %s261 = ssub.s32 %s17, %s24
      %p262 = scmp.eq.s32.totalorder %s261, 0
      %s264 = sadd.s32 %s263, 1
      %s265 = scalar_select %p262, %s263, %s264
      %p268 = pneg %p262
      %p269 = scmp.eq.s32.totalorder %s17, 1
      %p270 = por %p268, %p269
      %p271 = scmp.ne.s32.totalorder %s263, %s266
      %p272 = scmp.eq.s32.totalorder %s17, 0
      %p273 = por %p271, %p272
      %p274 = scmp.ne.s32.totalorder %s263, %s266
      %p275 = scmp.eq.s32.totalorder %s22, 1
      %p276 = por %p274, %p275
      %p277 = scmp.ne.s32.totalorder %s266, %s267
      %p278 = scmp.eq.s32.totalorder %s22, 0
      %p279 = por %p277, %p278
      %p280 = scmp.ne.s32.totalorder %s266, %s267
      %p281 = scmp.eq.s32.totalorder %s23, 1
      %p282 = por %p280, %p281
      %p284 = scmp.ne.s32.totalorder %s267, %s283
      %p285 = scmp.eq.s32.totalorder %s23, 0
      %p286 = por %p284, %p285
      %p287 = scmp.le.s32.totalorder 1, %s17
      %p288 = scmp.lt.s32.totalorder %s17, 3
      %p289 = pnand %p287, %p288
      %p290 = pneg %p289
      // Predicated region
      $region9: #{_lambda_.1} parent=5 // pred_check
        _
      $region10: #{_lambda_.1} parent=5 // pred_check_branch
        %292 = sbr.rel (%p289) target = $region12
      $region11: #{_lambda_.1} parent=5 // pred_region
        %s293 = ssub.s32 %s17, 1
        // Predicated region
        $region13: #{_lambda_.1} parent=11 // pred_check
          %p294 = pneg %p64
        $region14: #{_lambda_.1} parent=11 // pred_check_branch
          %296 = sbr.rel (%p294) target = $region16
        $region15: #{_lambda_.1} parent=11 // pred_region
          _
        $region16: #{_lambda_.1} parent=11 // pred_fallthru
          _
        // Predicated region
        $region17: #{_lambda_.1} parent=11 // pred_check
          %p297 = pneg %p85
        $region18: #{_lambda_.1} parent=11 // pred_check_branch
          %299 = sbr.rel (%p297) target = $region20
        $region19: #{_lambda_.1} parent=11 // pred_region
          _
        $region20: #{_lambda_.1} parent=11 // pred_fallthru
          _
        // Predicated region
        $region21: #{_lambda_.1} parent=11 // pred_check
          %p300 = pneg %p106
        $region22: #{_lambda_.1} parent=11 // pred_check_branch
          %302 = sbr.rel (%p300) target = $region24
        $region23: #{_lambda_.1} parent=11 // pred_region
          _
        $region24: #{_lambda_.1} parent=11 // pred_fallthru
          _
        // Predicated region
        $region25: #{_lambda_.1} parent=11 // pred_check
          %p303 = pneg %p127
        $region26: #{_lambda_.1} parent=11 // pred_check_branch
          %305 = sbr.rel (%p303) target = $region28
        $region27: #{_lambda_.1} parent=11 // pred_region
          _
        $region28: #{_lambda_.1} parent=11 // pred_fallthru
          _
        // Predicated region
        $region29: #{_lambda_.1} parent=11 // pred_check
          %p306 = pneg %p148
        $region30: #{_lambda_.1} parent=11 // pred_check_branch
          %308 = sbr.rel (%p306) target = $region32
        $region31: #{_lambda_.1} parent=11 // pred_region
          _
        $region32: #{_lambda_.1} parent=11 // pred_fallthru
          _
        // Predicated region
        $region33: #{_lambda_.1} parent=11 // pred_check
          %p309 = pneg %p169
        $region34: #{_lambda_.1} parent=11 // pred_check_branch
          %311 = sbr.rel (%p309) target = $region36
        $region35: #{_lambda_.1} parent=11 // pred_region
          _
        $region36: #{_lambda_.1} parent=11 // pred_fallthru
          _
        // Predicated region
        $region37: #{_lambda_.1} parent=11 // pred_check
          %p312 = pneg %p190
        $region38: #{_lambda_.1} parent=11 // pred_check_branch
          %314 = sbr.rel (%p312) target = $region40
        $region39: #{_lambda_.1} parent=11 // pred_region
          _
        $region40: #{_lambda_.1} parent=11 // pred_fallthru
          _
        // Predicated region
        $region41: #{_lambda_.1} parent=11 // pred_check
          %p315 = pneg %p211
        $region42: #{_lambda_.1} parent=11 // pred_check_branch
          %317 = sbr.rel (%p315) target = $region44
        $region43: #{_lambda_.1} parent=11 // pred_region
          _
        $region44: #{_lambda_.1} parent=11 // pred_fallthru
          _
        // Predicated region
        $region45: #{_lambda_.1} parent=11 // pred_check
          %p318 = pneg %p232
        $region46: #{_lambda_.1} parent=11 // pred_check_branch
          %320 = sbr.rel (%p318) target = $region48
        $region47: #{_lambda_.1} parent=11 // pred_region
          _
        $region48: #{_lambda_.1} parent=11 // pred_fallthru
          _
        // Predicated region
        $region49: #{_lambda_.1} parent=11 // pred_check
          %p321 = pneg %p253
        $region50: #{_lambda_.1} parent=11 // pred_check_branch
          %323 = sbr.rel (%p321) target = $region52
        $region51: #{_lambda_.1} parent=11 // pred_region
          _
        $region52: #{_lambda_.1} parent=11 // pred_fallthru
          _
      $region12: #{_lambda_.1} parent=5 // pred_fallthru
        _
      %p324 = scmp.lt.s32.totalorder %s17, 2
      // Predicated region
      $region53: #{_lambda_.1} parent=5 // pred_check
        %p325 = pneg %p324
      $region54: #{_lambda_.1} parent=5 // pred_check_branch
        %327 = sbr.rel (%p325) target = $region56
      $region55: #{_lambda_.1} parent=5 // pred_region
        // Predicated region
        $region57: #{_lambda_.1} parent=55 // pred_check
          %p328 = pneg %p37
        $region58: #{_lambda_.1} parent=55 // pred_check_branch
          %330 = sbr.rel (%p328) target = $region60
        $region59: #{_lambda_.1} parent=55 // pred_region
          %s331 = sand.u32 %s27, 1
          %s332 = sand.u32 %s27, 1
          %s333 = smul.addr %s332, 224
          %s334 = scalar_lea.vmem [#allocation2], %s333
          %s335 = smul.u32 2, %s17
          %s336 = smul.addr %s335, 4
          %s337 = scalar_lea.vmem %s0, %s336
          // Predicated region
          $region61: #{_lambda_.1} parent=59 // pred_check
            _
          $region62: #{_lambda_.1} parent=59 // pred_check_branch
            %339 = sbr.rel (0) target = $region64
          $region63: #{_lambda_.1} parent=59 // pred_region
            // Predicated region
            $region65: #{_lambda_.1} parent=63 // pred_check
              _
            $region66: #{_lambda_.1} parent=63 // pred_check_branch
              %341 = sbr.rel target = $region68
            $region67: #{_lambda_.1} parent=63 // pred_region
              // Predicated region
              $region80: #{_lambda_.1} parent=67 // pred_check
                _
              $region81: #{_lambda_.1} parent=67 // pred_check_branch
                %467 = sbr.rel (0) target = $region83
              $region82: #{_lambda_.1} parent=67 // pred_region
                loop: start=0, step=1, limit=1
                $region84: #{_lambda_.1} parent=82 // loop_pre_header
                  _
                $region85: #{_lambda_.1} parent=82 // loop_header
                  %s469 = sphi 0, %s473
                  %p470 = scmp.ge.s32.totalorder %s469, 1
                  %s474 = sphi %s337, %s337
                  %s475 = sphi %s334, %s334
                $region86: #{_lambda_.1} parent=82 // loop_header_branch
                  %472 = sbr.rel (%p470) target = $region90
                $region87: #{_lambda_.1} parent=82 // loop_body
                  _
                $region88: #{_lambda_.1} parent=82 // loop_footer
                  %s473 = sadd.s32 1, %s469
                $region89: #{_lambda_.1} parent=82 // loop_footer_branch
                  %468 = sbr.rel target = $region85
                $region90: #{_lambda_.1} parent=82 // loop_exit
                  _
                %s477 = ssub.s32 16, 1
                loop: start=0, step=1, limit=1
                $region91: #{_lambda_.1} parent=82 // loop_pre_header
                  _
                $region92: #{_lambda_.1} parent=82 // loop_header
                  %s479 = sphi 0, %s483
                  %p480 = scmp.ge.s32.totalorder %s479, 1
                  %s484 = sphi %s337, %s337
                  %s485 = sphi %s334, %s334
                $region93: #{_lambda_.1} parent=82 // loop_header_branch
                  %482 = sbr.rel (%p480) target = $region97
                $region94: #{_lambda_.1} parent=82 // loop_body
                  %v486 = vld [vmem:[%s484] sm:%s477]
                  %487 = vst [vmem:[%s485] sm:%s477] %v486
                  %v488 = vld [vmem:[%s484 + $0x4] sm:%s477]
                  %489 = vst [vmem:[%s485 + $0x4] sm:%s477] %v488
                  %v490 = vld [vmem:[%s484 + $0x10] sm:%s477]
                  %491 = vst [vmem:[%s485 + $0x8] sm:%s477] %v490
                  %v492 = vld [vmem:[%s484 + $0x14] sm:%s477]
                  %493 = vst [vmem:[%s485 + $0xc] sm:%s477] %v492
                  %v494 = vld [vmem:[%s484 + $0x20] sm:%s477]
                  %495 = vst [vmem:[%s485 + $0x10] sm:%s477] %v494
                  %v496 = vld [vmem:[%s484 + $0x24] sm:%s477]
                  %497 = vst [vmem:[%s485 + $0x14] sm:%s477] %v496
                  %v498 = vld [vmem:[%s484 + $0x30] sm:%s477]
                  %499 = vst [vmem:[%s485 + $0x18] sm:%s477] %v498
                  %v500 = vld [vmem:[%s484 + $0x34] sm:%s477]
                  %501 = vst [vmem:[%s485 + $0x1c] sm:%s477] %v500
                  %v502 = vld [vmem:[%s484 + $0x40] sm:%s477]
                  %503 = vst [vmem:[%s485 + $0x20] sm:%s477] %v502
                  %v504 = vld [vmem:[%s484 + $0x44] sm:%s477]
                  %505 = vst [vmem:[%s485 + $0x24] sm:%s477] %v504
                  %v506 = vld [vmem:[%s484 + $0x50] sm:%s477]
                  %507 = vst [vmem:[%s485 + $0x28] sm:%s477] %v506
                  %v508 = vld [vmem:[%s484 + $0x54] sm:%s477]
                  %509 = vst [vmem:[%s485 + $0x2c] sm:%s477] %v508
                  %v510 = vld [vmem:[%s484 + $0x60] sm:%s477]
                  %511 = vst [vmem:[%s485 + $0x30] sm:%s477] %v510
                  %v512 = vld [vmem:[%s484 + $0x64] sm:%s477]
                  %513 = vst [vmem:[%s485 + $0x34] sm:%s477] %v512
                  %v514 = vld [vmem:[%s484 + $0x70] sm:%s477]
                  %515 = vst [vmem:[%s485 + $0x38] sm:%s477] %v514
                  %v516 = vld [vmem:[%s484 + $0x74] sm:%s477]
                  %517 = vst [vmem:[%s485 + $0x3c] sm:%s477] %v516
                  %v518 = vld [vmem:[%s484 + $0x80] sm:%s477]
                  %519 = vst [vmem:[%s485 + $0x40] sm:%s477] %v518
                  %v520 = vld [vmem:[%s484 + $0x84] sm:%s477]
                  %521 = vst [vmem:[%s485 + $0x44] sm:%s477] %v520
                  %v522 = vld [vmem:[%s484 + $0x90] sm:%s477]
                  %523 = vst [vmem:[%s485 + $0x48] sm:%s477] %v522
                  %v524 = vld [vmem:[%s484 + $0x94] sm:%s477]
                  %525 = vst [vmem:[%s485 + $0x4c] sm:%s477] %v524
                  %v526 = vld [vmem:[%s484 + $0xa0] sm:%s477]
                  %527 = vst [vmem:[%s485 + $0x50] sm:%s477] %v526
                  %v528 = vld [vmem:[%s484 + $0xa4] sm:%s477]
                  %529 = vst [vmem:[%s485 + $0x54] sm:%s477] %v528
                  %v530 = vld [vmem:[%s484 + $0xb0] sm:%s477]
                  %531 = vst [vmem:[%s485 + $0x58] sm:%s477] %v530
                  %v532 = vld [vmem:[%s484 + $0xb4] sm:%s477]
                  %533 = vst [vmem:[%s485 + $0x5c] sm:%s477] %v532
                  %v534 = vld [vmem:[%s484 + $0xc0] sm:%s477]
                  %535 = vst [vmem:[%s485 + $0x60] sm:%s477] %v534
                  %v536 = vld [vmem:[%s484 + $0xc4] sm:%s477]
                  %537 = vst [vmem:[%s485 + $0x64] sm:%s477] %v536
                  %v538 = vld [vmem:[%s484 + $0xd0] sm:%s477]
                  %539 = vst [vmem:[%s485 + $0x68] sm:%s477] %v538
                  %v540 = vld [vmem:[%s484 + $0xd4] sm:%s477]
                  %541 = vst [vmem:[%s485 + $0x6c] sm:%s477] %v540
                  %v542 = vld [vmem:[%s484 + $0xe0] sm:%s477]
                  %543 = vst [vmem:[%s485 + $0x70] sm:%s477] %v542
                  %v544 = vld [vmem:[%s484 + $0xe4] sm:%s477]
                  %545 = vst [vmem:[%s485 + $0x74] sm:%s477] %v544
                  %v546 = vld [vmem:[%s484 + $0xf0] sm:%s477]
                  %547 = vst [vmem:[%s485 + $0x78] sm:%s477] %v546
                  %v548 = vld [vmem:[%s484 + $0xf4] sm:%s477]
                  %549 = vst [vmem:[%s485 + $0x7c] sm:%s477] %v548
                  %v550 = vld [vmem:[%s484 + $0x100] sm:%s477]
                  %551 = vst [vmem:[%s485 + $0x80] sm:%s477] %v550
                  %v552 = vld [vmem:[%s484 + $0x104] sm:%s477]
                  %553 = vst [vmem:[%s485 + $0x84] sm:%s477] %v552
                  %v554 = vld [vmem:[%s484 + $0x110] sm:%s477]
                  %555 = vst [vmem:[%s485 + $0x88] sm:%s477] %v554
                  %v556 = vld [vmem:[%s484 + $0x114] sm:%s477]
                  %557 = vst [vmem:[%s485 + $0x8c] sm:%s477] %v556
                  %v558 = vld [vmem:[%s484 + $0x120] sm:%s477]
                  %559 = vst [vmem:[%s485 + $0x90] sm:%s477] %v558
                  %v560 = vld [vmem:[%s484 + $0x124] sm:%s477]
                  %561 = vst [vmem:[%s485 + $0x94] sm:%s477] %v560
                  %v562 = vld [vmem:[%s484 + $0x130] sm:%s477]
                  %563 = vst [vmem:[%s485 + $0x98] sm:%s477] %v562
                  %v564 = vld [vmem:[%s484 + $0x134] sm:%s477]
                  %565 = vst [vmem:[%s485 + $0x9c] sm:%s477] %v564
                  %v566 = vld [vmem:[%s484 + $0x140] sm:%s477]
                  %567 = vst [vmem:[%s485 + $0xa0] sm:%s477] %v566
                  %v568 = vld [vmem:[%s484 + $0x144] sm:%s477]
                  %569 = vst [vmem:[%s485 + $0xa4] sm:%s477] %v568
                  %v570 = vld [vmem:[%s484 + $0x150] sm:%s477]
                  %571 = vst [vmem:[%s485 + $0xa8] sm:%s477] %v570
                  %v572 = vld [vmem:[%s484 + $0x154] sm:%s477]
                  %573 = vst [vmem:[%s485 + $0xac] sm:%s477] %v572
                  %v574 = vld [vmem:[%s484 + $0x160] sm:%s477]
                  %575 = vst [vmem:[%s485 + $0xb0] sm:%s477] %v574
                  %v576 = vld [vmem:[%s484 + $0x164] sm:%s477]
                  %577 = vst [vmem:[%s485 + $0xb4] sm:%s477] %v576
                  %v578 = vld [vmem:[%s484 + $0x170] sm:%s477]
                  %579 = vst [vmem:[%s485 + $0xb8] sm:%s477] %v578
                  %v580 = vld [vmem:[%s484 + $0x174] sm:%s477]
                  %581 = vst [vmem:[%s485 + $0xbc] sm:%s477] %v580
                  %v582 = vld [vmem:[%s484 + $0x180] sm:%s477]
                  %583 = vst [vmem:[%s485 + $0xc0] sm:%s477] %v582
                  %v584 = vld [vmem:[%s484 + $0x184] sm:%s477]
                  %585 = vst [vmem:[%s485 + $0xc4] sm:%s477] %v584
                  %v586 = vld [vmem:[%s484 + $0x190] sm:%s477]
                  %587 = vst [vmem:[%s485 + $0xc8] sm:%s477] %v586
                  %v588 = vld [vmem:[%s484 + $0x194] sm:%s477]
                  %589 = vst [vmem:[%s485 + $0xcc] sm:%s477] %v588
                  %v590 = vld [vmem:[%s484 + $0x1a0] sm:%s477]
                  %591 = vst [vmem:[%s485 + $0xd0] sm:%s477] %v590
                  %v592 = vld [vmem:[%s484 + $0x1a4] sm:%s477]
                  %593 = vst [vmem:[%s485 + $0xd4] sm:%s477] %v592
                  %v594 = vld [vmem:[%s484 + $0x1b0] sm:%s477]
                  %595 = vst [vmem:[%s485 + $0xd8] sm:%s477] %v594
                  %v596 = vld [vmem:[%s484 + $0x1b4] sm:%s477]
                  %597 = vst [vmem:[%s485 + $0xdc] sm:%s477] %v596
                $region95: #{_lambda_.1} parent=82 // loop_footer
                  %s483 = sadd.s32 1, %s479
                $region96: #{_lambda_.1} parent=82 // loop_footer_branch
                  %478 = sbr.rel target = $region92
                $region97: #{_lambda_.1} parent=82 // loop_exit
                  _
              $region83: #{_lambda_.1} parent=67 // pred_fallthru
                _
            $region68: #{_lambda_.1} parent=63 // pred_fallthru
              _
            // Predicated region
            $region69: #{_lambda_.1} parent=63 // pred_check
              _
            $region70: #{_lambda_.1} parent=63 // pred_check_branch
              %343 = sbr.rel (0) target = $region72
            $region71: #{_lambda_.1} parent=63 // pred_region
              %s345 = ssub.s32 16, 1
              loop: start=0, step=1, limit=1
              $region73: #{_lambda_.1} parent=71 // loop_pre_header
                _
              $region74: #{_lambda_.1} parent=71 // loop_header
                %s347 = sphi 0, %s351
                %p348 = scmp.ge.s32.totalorder %s347, 1
                %s352 = sphi %s337, %s337
                %s353 = sphi %s334, %s334
              $region75: #{_lambda_.1} parent=71 // loop_header_branch
                %350 = sbr.rel (%p348) target = $region79
              $region76: #{_lambda_.1} parent=71 // loop_body
                %v354 = vld [vmem:[%s352] sm:%s345]
                %355 = vst [vmem:[%s353] sm:%s345] %v354
                %v356 = vld [vmem:[%s352 + $0x4] sm:%s345]
                %357 = vst [vmem:[%s353 + $0x4] sm:%s345] %v356
                %v358 = vld [vmem:[%s352 + $0x10] sm:%s345]
                %359 = vst [vmem:[%s353 + $0x8] sm:%s345] %v358
                %v360 = vld [vmem:[%s352 + $0x14] sm:%s345]
                %361 = vst [vmem:[%s353 + $0xc] sm:%s345] %v360
                %v362 = vld [vmem:[%s352 + $0x20] sm:%s345]
                %363 = vst [vmem:[%s353 + $0x10] sm:%s345] %v362
                %v364 = vld [vmem:[%s352 + $0x24] sm:%s345]
                %365 = vst [vmem:[%s353 + $0x14] sm:%s345] %v364
                %v366 = vld [vmem:[%s352 + $0x30] sm:%s345]
                %367 = vst [vmem:[%s353 + $0x18] sm:%s345] %v366
                %v368 = vld [vmem:[%s352 + $0x34] sm:%s345]
                %369 = vst [vmem:[%s353 + $0x1c] sm:%s345] %v368
                %v370 = vld [vmem:[%s352 + $0x40] sm:%s345]
                %371 = vst [vmem:[%s353 + $0x20] sm:%s345] %v370
                %v372 = vld [vmem:[%s352 + $0x44] sm:%s345]
                %373 = vst [vmem:[%s353 + $0x24] sm:%s345] %v372
                %v374 = vld [vmem:[%s352 + $0x50] sm:%s345]
                %375 = vst [vmem:[%s353 + $0x28] sm:%s345] %v374
                %v376 = vld [vmem:[%s352 + $0x54] sm:%s345]
                %377 = vst [vmem:[%s353 + $0x2c] sm:%s345] %v376
                %v378 = vld [vmem:[%s352 + $0x60] sm:%s345]
                %379 = vst [vmem:[%s353 + $0x30] sm:%s345] %v378
                %v380 = vld [vmem:[%s352 + $0x64] sm:%s345]
                %381 = vst [vmem:[%s353 + $0x34] sm:%s345] %v380
                %v382 = vld [vmem:[%s352 + $0x70] sm:%s345]
                %383 = vst [vmem:[%s353 + $0x38] sm:%s345] %v382
                %v384 = vld [vmem:[%s352 + $0x74] sm:%s345]
                %385 = vst [vmem:[%s353 + $0x3c] sm:%s345] %v384
                %v386 = vld [vmem:[%s352 + $0x80] sm:%s345]
                %387 = vst [vmem:[%s353 + $0x40] sm:%s345] %v386
                %v388 = vld [vmem:[%s352 + $0x84] sm:%s345]
                %389 = vst [vmem:[%s353 + $0x44] sm:%s345] %v388
                %v390 = vld [vmem:[%s352 + $0x90] sm:%s345]
                %391 = vst [vmem:[%s353 + $0x48] sm:%s345] %v390
                %v392 = vld [vmem:[%s352 + $0x94] sm:%s345]
                %393 = vst [vmem:[%s353 + $0x4c] sm:%s345] %v392
                %v394 = vld [vmem:[%s352 + $0xa0] sm:%s345]
                %395 = vst [vmem:[%s353 + $0x50] sm:%s345] %v394
                %v396 = vld [vmem:[%s352 + $0xa4] sm:%s345]
                %397 = vst [vmem:[%s353 + $0x54] sm:%s345] %v396
                %v398 = vld [vmem:[%s352 + $0xb0] sm:%s345]
                %399 = vst [vmem:[%s353 + $0x58] sm:%s345] %v398
                %v400 = vld [vmem:[%s352 + $0xb4] sm:%s345]
                %401 = vst [vmem:[%s353 + $0x5c] sm:%s345] %v400
                %v402 = vld [vmem:[%s352 + $0xc0] sm:%s345]
                %403 = vst [vmem:[%s353 + $0x60] sm:%s345] %v402
                %v404 = vld [vmem:[%s352 + $0xc4] sm:%s345]
                %405 = vst [vmem:[%s353 + $0x64] sm:%s345] %v404
                %v406 = vld [vmem:[%s352 + $0xd0] sm:%s345]
                %407 = vst [vmem:[%s353 + $0x68] sm:%s345] %v406
                %v408 = vld [vmem:[%s352 + $0xd4] sm:%s345]
                %409 = vst [vmem:[%s353 + $0x6c] sm:%s345] %v408
                %v410 = vld [vmem:[%s352 + $0xe0] sm:%s345]
                %411 = vst [vmem:[%s353 + $0x70] sm:%s345] %v410
                %v412 = vld [vmem:[%s352 + $0xe4] sm:%s345]
                %413 = vst [vmem:[%s353 + $0x74] sm:%s345] %v412
                %v414 = vld [vmem:[%s352 + $0xf0] sm:%s345]
                %415 = vst [vmem:[%s353 + $0x78] sm:%s345] %v414
                %v416 = vld [vmem:[%s352 + $0xf4] sm:%s345]
                %417 = vst [vmem:[%s353 + $0x7c] sm:%s345] %v416
                %v418 = vld [vmem:[%s352 + $0x100] sm:%s345]
                %419 = vst [vmem:[%s353 + $0x80] sm:%s345] %v418
                %v420 = vld [vmem:[%s352 + $0x104] sm:%s345]
                %421 = vst [vmem:[%s353 + $0x84] sm:%s345] %v420
                %v422 = vld [vmem:[%s352 + $0x110] sm:%s345]
                %423 = vst [vmem:[%s353 + $0x88] sm:%s345] %v422
                %v424 = vld [vmem:[%s352 + $0x114] sm:%s345]
                %425 = vst [vmem:[%s353 + $0x8c] sm:%s345] %v424
                %v426 = vld [vmem:[%s352 + $0x120] sm:%s345]
                %427 = vst [vmem:[%s353 + $0x90] sm:%s345] %v426
                %v428 = vld [vmem:[%s352 + $0x124] sm:%s345]
                %429 = vst [vmem:[%s353 + $0x94] sm:%s345] %v428
                %v430 = vld [vmem:[%s352 + $0x130] sm:%s345]
                %431 = vst [vmem:[%s353 + $0x98] sm:%s345] %v430
                %v432 = vld [vmem:[%s352 + $0x134] sm:%s345]
                %433 = vst [vmem:[%s353 + $0x9c] sm:%s345] %v432
                %v434 = vld [vmem:[%s352 + $0x140] sm:%s345]
                %435 = vst [vmem:[%s353 + $0xa0] sm:%s345] %v434
                %v436 = vld [vmem:[%s352 + $0x144] sm:%s345]
                %437 = vst [vmem:[%s353 + $0xa4] sm:%s345] %v436
                %v438 = vld [vmem:[%s352 + $0x150] sm:%s345]
                %439 = vst [vmem:[%s353 + $0xa8] sm:%s345] %v438
                %v440 = vld [vmem:[%s352 + $0x154] sm:%s345]
                %441 = vst [vmem:[%s353 + $0xac] sm:%s345] %v440
                %v442 = vld [vmem:[%s352 + $0x160] sm:%s345]
                %443 = vst [vmem:[%s353 + $0xb0] sm:%s345] %v442
                %v444 = vld [vmem:[%s352 + $0x164] sm:%s345]
                %445 = vst [vmem:[%s353 + $0xb4] sm:%s345] %v444
                %v446 = vld [vmem:[%s352 + $0x170] sm:%s345]
                %447 = vst [vmem:[%s353 + $0xb8] sm:%s345] %v446
                %v448 = vld [vmem:[%s352 + $0x174] sm:%s345]
                %449 = vst [vmem:[%s353 + $0xbc] sm:%s345] %v448
                %v450 = vld [vmem:[%s352 + $0x180] sm:%s345]
                %451 = vst [vmem:[%s353 + $0xc0] sm:%s345] %v450
                %v452 = vld [vmem:[%s352 + $0x184] sm:%s345]
                %453 = vst [vmem:[%s353 + $0xc4] sm:%s345] %v452
                %v454 = vld [vmem:[%s352 + $0x190] sm:%s345]
                %455 = vst [vmem:[%s353 + $0xc8] sm:%s345] %v454
                %v456 = vld [vmem:[%s352 + $0x194] sm:%s345]
                %457 = vst [vmem:[%s353 + $0xcc] sm:%s345] %v456
                %v458 = vld [vmem:[%s352 + $0x1a0] sm:%s345]
                %459 = vst [vmem:[%s353 + $0xd0] sm:%s345] %v458
                %v460 = vld [vmem:[%s352 + $0x1a4] sm:%s345]
                %461 = vst [vmem:[%s353 + $0xd4] sm:%s345] %v460
                %v462 = vld [vmem:[%s352 + $0x1b0] sm:%s345]
                %463 = vst [vmem:[%s353 + $0xd8] sm:%s345] %v462
                %v464 = vld [vmem:[%s352 + $0x1b4] sm:%s345]
                %465 = vst [vmem:[%s353 + $0xdc] sm:%s345] %v464
              $region77: #{_lambda_.1} parent=71 // loop_footer
                %s351 = sadd.s32 1, %s347
              $region78: #{_lambda_.1} parent=71 // loop_footer_branch
                %346 = sbr.rel target = $region74
              $region79: #{_lambda_.1} parent=71 // loop_exit
                _
            $region72: #{_lambda_.1} parent=63 // pred_fallthru
              _
          $region64: #{_lambda_.1} parent=59 // pred_fallthru
            _
          %598 = vnop
        $region60: #{_lambda_.1} parent=55 // pred_fallthru
          _
      $region56: #{_lambda_.1} parent=5 // pred_fallthru
        _
      %p599 = scmp.le.s32.totalorder 1, %s17
      %p600 = scmp.lt.s32.totalorder %s17, 3
      %p601 = pnand %p599, %p600
      %p602 = pneg %p601
      // Predicated region
      $region98: #{_lambda_.1} parent=5 // pred_check
        _
      $region99: #{_lambda_.1} parent=5 // pred_check_branch
        %604 = sbr.rel (%p601) target = $region101
      $region100: #{_lambda_.1} parent=5 // pred_region
        %s605 = ssub.s32 %s17, 1
        %s606 = sand.u32 %s30, 1
        %s607 = sand.u32 %s30, 1
        %s608 = smul.addr %s607, 224
        %s609 = scalar_lea.vmem [#allocation2], %s608
        // Predicated region
        $region102: #{_lambda_.1} parent=100 // pred_check
          %p610 = pneg %p43
        $region103: #{_lambda_.1} parent=100 // pred_check_branch
          %612 = sbr.rel (%p610) target = $region105
        $region104: #{_lambda_.1} parent=100 // pred_region
          _
        $region105: #{_lambda_.1} parent=100 // pred_fallthru
          _
        %s613 = sand.u32 %s30, 1
        %s614 = sand.u32 %s30, 1
        %s615 = smul.addr %s614, 224
        %s616 = scalar_lea.vmem [#allocation2], %s615
        %p617 = pneg %p43
        %p618 = pneg %p40
        %p619 = pneg %p64
        %p620 = pneg %p61
        %p621 = pneg %p85
        %p622 = pneg %p82
        %p623 = pneg %p106
        %p624 = pneg %p103
        %p625 = pneg %p127
        %p626 = pneg %p124
        %p627 = pneg %p148
        %p628 = pneg %p145
        %p629 = pneg %p169
        %p630 = pneg %p166
        %p631 = pneg %p190
        %p632 = pneg %p187
        %p633 = pneg %p211
        %p634 = pneg %p208
        %p635 = pneg %p232
        %p636 = pneg %p229
        %p637 = pneg %p253
        %p638 = pneg %p250
        %p639 = pneg %p279
        %p640 = pneg %p276
        %s641 = smul.u32 2, %s22
        %p642 = scmp.lt.s32.totalorder %s641, 3
        %s643 = scalar_select %p642, %s641, 3
        %s644 = smul.addr %s643, 8
        %s645 = scalar_lea.vmem %s11, %s644
        %s646 = smul.u32 2, %s22
        %s647 = smul.u32 2, %s22
        %p648 = scmp.lt.s32.totalorder %s647, 3
        %s649 = scalar_select %p648, %s647, 3
        %s650 = smul.addr %s649, 8
        %s651 = scalar_lea.vmem %s11, %s650
        %s652 = smul.u32 2, %s22
        %v654 = vld [vmem:[%s609] sm:$0xf]
        %v655 = vld [vmem:[%s609 + $0x4] sm:$0xf]
        %v656 = vld [vmem:[%s609 + $0x8] sm:$0xf]
        %v657 = vld [vmem:[%s609 + $0xc] sm:$0xf]
        %v658 = vld [vmem:[%s609 + $0x10] sm:$0xf]
        %v659 = vld [vmem:[%s609 + $0x14] sm:$0xf]
        %v660 = vld [vmem:[%s609 + $0x18] sm:$0xf]
        %v661 = vld [vmem:[%s609 + $0x1c] sm:$0xf]
        %v662 = vld [vmem:[%s609 + $0x20] sm:$0xf]
        %v663 = vld [vmem:[%s609 + $0x24] sm:$0xf]
        %v664 = vld [vmem:[%s609 + $0x28] sm:$0xf]
        %v665 = vld [vmem:[%s609 + $0x2c] sm:$0xf]
        %v666 = vld [vmem:[%s609 + $0x30] sm:$0xf]
        %v667 = vld [vmem:[%s609 + $0x34] sm:$0xf]
        %v668 = vld [vmem:[%s609 + $0x38] sm:$0xf]
        %v669 = vld [vmem:[%s609 + $0x3c] sm:$0xf]
        %v670 = vld [vmem:[%s609 + $0x40] sm:$0xf]
        %v671 = vld [vmem:[%s609 + $0x44] sm:$0xf]
        %v672 = vld [vmem:[%s609 + $0x48] sm:$0xf]
        %v673 = vld [vmem:[%s609 + $0x4c] sm:$0xf]
        %v674 = vld [vmem:[%s609 + $0x50] sm:$0xf]
        %v675 = vld [vmem:[%s609 + $0x54] sm:$0xf]
        %v676 = vld [vmem:[%s609 + $0x58] sm:$0xf]
        %v677 = vld [vmem:[%s609 + $0x5c] sm:$0xf]
        %v678 = vld [vmem:[%s609 + $0x60] sm:$0xf]
        %v679 = vld [vmem:[%s609 + $0x64] sm:$0xf]
        %v680 = vld [vmem:[%s609 + $0x68] sm:$0xf]
        %v681 = vld [vmem:[%s609 + $0x6c] sm:$0xf]
        %v682 = vld [vmem:[%s609 + $0x70] sm:$0xf]
        %v683 = vld [vmem:[%s609 + $0x74] sm:$0xf]
        %v684 = vld [vmem:[%s609 + $0x78] sm:$0xf]
        %v685 = vld [vmem:[%s609 + $0x7c] sm:$0xf]
        %v686 = vld [vmem:[%s609 + $0x80] sm:$0xf]
        %v687 = vld [vmem:[%s609 + $0x84] sm:$0xf]
        %v688 = vld [vmem:[%s609 + $0x88] sm:$0xf]
        %v689 = vld [vmem:[%s609 + $0x8c] sm:$0xf]
        %v690 = vld [vmem:[%s609 + $0x90] sm:$0xf]
        %v691 = vld [vmem:[%s609 + $0x94] sm:$0xf]
        %v692 = vld [vmem:[%s609 + $0x98] sm:$0xf]
        %v693 = vld [vmem:[%s609 + $0x9c] sm:$0xf]
        %v694 = vld [vmem:[%s609 + $0xa0] sm:$0xf]
        %v695 = vld [vmem:[%s609 + $0xa4] sm:$0xf]
        %v696 = vld [vmem:[%s609 + $0xa8] sm:$0xf]
        %v697 = vld [vmem:[%s609 + $0xac] sm:$0xf]
        %v698 = vld [vmem:[%s609 + $0xb0] sm:$0xf]
        %v699 = vld [vmem:[%s609 + $0xb4] sm:$0xf]
        %v700 = vld [vmem:[%s609 + $0xb8] sm:$0xf]
        %v701 = vld [vmem:[%s609 + $0xbc] sm:$0xf]
        %v702 = vld [vmem:[%s609 + $0xc0] sm:$0xf]
        %v703 = vld [vmem:[%s609 + $0xc4] sm:$0xf]
        %v704 = vld [vmem:[%s609 + $0xc8] sm:$0xf]
        %v705 = vld [vmem:[%s609 + $0xcc] sm:$0xf]
        %v706 = vld [vmem:[%s609 + $0xd0] sm:$0xf]
        %v707 = vld [vmem:[%s609 + $0xd4] sm:$0xf]
        %v708 = vld [vmem:[%s609 + $0xd8] sm:$0xf]
        %v709 = vld [vmem:[%s609 + $0xdc] sm:$0xf]
        %v758 = vunpack.c.l.b16 %v654
        %v759 = vunpack.c.l.b16 %v655
        %v760 = vunpack.c.l.b16 %v656
        %v761 = vunpack.c.l.b16 %v657
        %v762 = vunpack.c.l.b16 %v658
        %v763 = vunpack.c.l.b16 %v659
        %v764 = vunpack.c.l.b16 %v660
        %v765 = vunpack.c.l.b16 %v661
        %v766 = vunpack.c.l.b16 %v662
        %v767 = vunpack.c.l.b16 %v663
        %v768 = vunpack.c.l.b16 %v664
        %v769 = vunpack.c.l.b16 %v665
        %v770 = vunpack.c.l.b16 %v666
        %v771 = vunpack.c.l.b16 %v667
        %v772 = vunpack.c.l.b16 %v668
        %v773 = vunpack.c.l.b16 %v669
        %v774 = vunpack.c.l.b16 %v670
        %v775 = vunpack.c.l.b16 %v671
        %v776 = vunpack.c.l.b16 %v672
        %v777 = vunpack.c.l.b16 %v673
        %v778 = vunpack.c.l.b16 %v674
        %v779 = vunpack.c.l.b16 %v675
        %v780 = vunpack.c.l.b16 %v676
        %v781 = vunpack.c.l.b16 %v677
        %v782 = vunpack.c.l.b16 %v678
        %v783 = vunpack.c.l.b16 %v679
        %v784 = vunpack.c.l.b16 %v680
        %v785 = vunpack.c.l.b16 %v681
        %v786 = vunpack.c.l.b16 %v682
        %v787 = vunpack.c.l.b16 %v683
        %v788 = vunpack.c.l.b16 %v684
        %v789 = vunpack.c.l.b16 %v685
        %v790 = vunpack.c.l.b16 %v686
        %v791 = vunpack.c.l.b16 %v687
        %v792 = vunpack.c.l.b16 %v688
        %v793 = vunpack.c.l.b16 %v689
        %v794 = vunpack.c.l.b16 %v690
        %v795 = vunpack.c.l.b16 %v691
        %v796 = vunpack.c.l.b16 %v692
        %v797 = vunpack.c.l.b16 %v693
        %v798 = vunpack.c.l.b16 %v694
        %v799 = vunpack.c.l.b16 %v695
        %v800 = vunpack.c.l.b16 %v696
        %v801 = vunpack.c.l.b16 %v697
        %v802 = vunpack.c.l.b16 %v698
        %v803 = vunpack.c.l.b16 %v699
        %v804 = vunpack.c.l.b16 %v700
        %v805 = vunpack.c.l.b16 %v701
        %v806 = vpack.c.b16 %v759, %v758
        %v807 = vpack.c.b16 %v761, %v760
        %v808 = vpack.c.b16 %v763, %v762
        %v809 = vpack.c.b16 %v765, %v764
        %v810 = vpack.c.b16 %v767, %v766
        %v811 = vpack.c.b16 %v769, %v768
        %v812 = vpack.c.b16 %v771, %v770
        %v813 = vpack.c.b16 %v773, %v772
        %v814 = vpack.c.b16 %v775, %v774
        %v815 = vpack.c.b16 %v777, %v776
        %v816 = vpack.c.b16 %v779, %v778
        %v817 = vpack.c.b16 %v781, %v780
        %v818 = vpack.c.b16 %v783, %v782
        %v819 = vpack.c.b16 %v785, %v784
        %v820 = vpack.c.b16 %v787, %v786
        %v821 = vpack.c.b16 %v789, %v788
        %v822 = vpack.c.b16 %v791, %v790
        %v823 = vpack.c.b16 %v793, %v792
        %v824 = vpack.c.b16 %v795, %v794
        %v825 = vpack.c.b16 %v797, %v796
        %v826 = vpack.c.b16 %v799, %v798
        %v827 = vpack.c.b16 %v801, %v800
        %v828 = vpack.c.b16 %v803, %v802
        %v829 = vpack.c.b16 %v805, %v804
        %v832 = vunpack.c.l.b16 %v702
        %v833 = vunpack.c.l.b16 %v703
        %v834 = vpack.c.b16 %v833, %v832
        %835 = vrot.lane.b32.xlu0 %v807, 28
        %v836 = vpop.permute.xlu0 %835
        %837 = vrot.lane.b32.xlu0 %v808, 28
        %v838 = vpop.permute.xlu0 %837
        %839 = vrot.lane.b32.xlu0 %v809, 28
        %v840 = vpop.permute.xlu0 %839
        %841 = vrot.lane.b32.xlu0 %v810, 28
        %v842 = vpop.permute.xlu0 %841
        %843 = vrot.lane.b32.xlu0 %v811, 28
        %v844 = vpop.permute.xlu0 %843
        %845 = vrot.lane.b32.xlu0 %v812, 28
        %v846 = vpop.permute.xlu0 %845
        %847 = vrot.lane.b32.xlu0 %v813, 28
        %v848 = vpop.permute.xlu0 %847
        %849 = vrot.lane.b32.xlu0 %v814, 28
        %v850 = vpop.permute.xlu0 %849
        %851 = vrot.lane.b32.xlu0 %v815, 28
        %v852 = vpop.permute.xlu0 %851
        %853 = vrot.lane.b32.xlu0 %v816, 28
        %v854 = vpop.permute.xlu0 %853
        %855 = vrot.lane.b32.xlu0 %v817, 28
        %v856 = vpop.permute.xlu0 %855
        %857 = vrot.lane.b32.xlu0 %v818, 28
        %v858 = vpop.permute.xlu0 %857
        %859 = vrot.lane.b32.xlu0 %v819, 28
        %v860 = vpop.permute.xlu0 %859
        %861 = vrot.lane.b32.xlu0 %v820, 28
        %v862 = vpop.permute.xlu0 %861
        %863 = vrot.lane.b32.xlu0 %v821, 28
        %v864 = vpop.permute.xlu0 %863
        %865 = vrot.lane.b32.xlu0 %v822, 28
        %v866 = vpop.permute.xlu0 %865
        %867 = vrot.lane.b32.xlu0 %v823, 28
        %v868 = vpop.permute.xlu0 %867
        %869 = vrot.lane.b32.xlu0 %v824, 28
        %v870 = vpop.permute.xlu0 %869
        %871 = vrot.lane.b32.xlu0 %v825, 28
        %v872 = vpop.permute.xlu0 %871
        %873 = vrot.lane.b32.xlu0 %v826, 28
        %v874 = vpop.permute.xlu0 %873
        %875 = vrot.lane.b32.xlu0 %v827, 28
        %v876 = vpop.permute.xlu0 %875
        %877 = vrot.lane.b32.xlu0 %v828, 28
        %v878 = vpop.permute.xlu0 %877
        %879 = vrot.lane.b32.xlu0 %v829, 28
        %v880 = vpop.permute.xlu0 %879
        %881 = vrot.lane.b32.xlu0 %v834, 28
        %v882 = vpop.permute.xlu0 %881
        %v885 = vunpack.c.l.b16 %v704
        %v886 = vunpack.c.l.b16 %v705
        %v887 = vpack.c.b16 %v886, %v885
        %888 = vrot.lane.b32.xlu0 %v808, 56
        %v889 = vpop.permute.xlu0 %888
        %890 = vrot.lane.b32.xlu0 %v809, 56
        %v891 = vpop.permute.xlu0 %890
        %892 = vrot.lane.b32.xlu0 %v810, 56
        %v893 = vpop.permute.xlu0 %892
        %894 = vrot.lane.b32.xlu0 %v811, 56
        %v895 = vpop.permute.xlu0 %894
        %896 = vrot.lane.b32.xlu0 %v812, 56
        %v897 = vpop.permute.xlu0 %896
        %898 = vrot.lane.b32.xlu0 %v813, 56
        %v899 = vpop.permute.xlu0 %898
        %900 = vrot.lane.b32.xlu0 %v814, 56
        %v901 = vpop.permute.xlu0 %900
        %902 = vrot.lane.b32.xlu0 %v815, 56
        %v903 = vpop.permute.xlu0 %902
        %904 = vrot.lane.b32.xlu0 %v816, 56
        %v905 = vpop.permute.xlu0 %904
        %906 = vrot.lane.b32.xlu0 %v817, 56
        %v907 = vpop.permute.xlu0 %906
        %908 = vrot.lane.b32.xlu0 %v818, 56
        %v909 = vpop.permute.xlu0 %908
        %910 = vrot.lane.b32.xlu0 %v819, 56
        %v911 = vpop.permute.xlu0 %910
        %912 = vrot.lane.b32.xlu0 %v820, 56
        %v913 = vpop.permute.xlu0 %912
        %914 = vrot.lane.b32.xlu0 %v821, 56
        %v915 = vpop.permute.xlu0 %914
        %916 = vrot.lane.b32.xlu0 %v822, 56
        %v917 = vpop.permute.xlu0 %916
        %918 = vrot.lane.b32.xlu0 %v823, 56
        %v919 = vpop.permute.xlu0 %918
        %920 = vrot.lane.b32.xlu0 %v824, 56
        %v921 = vpop.permute.xlu0 %920
        %922 = vrot.lane.b32.xlu0 %v825, 56
        %v923 = vpop.permute.xlu0 %922
        %924 = vrot.lane.b32.xlu0 %v826, 56
        %v925 = vpop.permute.xlu0 %924
        %926 = vrot.lane.b32.xlu0 %v827, 56
        %v927 = vpop.permute.xlu0 %926
        %928 = vrot.lane.b32.xlu0 %v828, 56
        %v929 = vpop.permute.xlu0 %928
        %930 = vrot.lane.b32.xlu0 %v829, 56
        %v931 = vpop.permute.xlu0 %930
        %932 = vrot.lane.b32.xlu0 %v834, 56
        %v933 = vpop.permute.xlu0 %932
        %934 = vrot.lane.b32.xlu0 %v887, 56
        %v935 = vpop.permute.xlu0 %934
        %v938 = vunpack.c.l.b16 %v706
        %v939 = vunpack.c.l.b16 %v707
        %v940 = vpack.c.b16 %v939, %v938
        %941 = vrot.lane.b32.xlu0 %v809, 84
        %v942 = vpop.permute.xlu0 %941
        %943 = vrot.lane.b32.xlu0 %v810, 84
        %v944 = vpop.permute.xlu0 %943
        %945 = vrot.lane.b32.xlu0 %v811, 84
        %v946 = vpop.permute.xlu0 %945
        %947 = vrot.lane.b32.xlu0 %v812, 84
        %v948 = vpop.permute.xlu0 %947
        %949 = vrot.lane.b32.xlu0 %v813, 84
        %v950 = vpop.permute.xlu0 %949
        %951 = vrot.lane.b32.xlu0 %v814, 84
        %v952 = vpop.permute.xlu0 %951
        %953 = vrot.lane.b32.xlu0 %v815, 84
        %v954 = vpop.permute.xlu0 %953
        %955 = vrot.lane.b32.xlu0 %v816, 84
        %v956 = vpop.permute.xlu0 %955
        %957 = vrot.lane.b32.xlu0 %v817, 84
        %v958 = vpop.permute.xlu0 %957
        %959 = vrot.lane.b32.xlu0 %v818, 84
        %v960 = vpop.permute.xlu0 %959
        %961 = vrot.lane.b32.xlu0 %v819, 84
        %v962 = vpop.permute.xlu0 %961
        %963 = vrot.lane.b32.xlu0 %v820, 84
        %v964 = vpop.permute.xlu0 %963
        %965 = vrot.lane.b32.xlu0 %v821, 84
        %v966 = vpop.permute.xlu0 %965
        %967 = vrot.lane.b32.xlu0 %v822, 84
        %v968 = vpop.permute.xlu0 %967
        %969 = vrot.lane.b32.xlu0 %v823, 84
        %v970 = vpop.permute.xlu0 %969
        %971 = vrot.lane.b32.xlu0 %v824, 84
        %v972 = vpop.permute.xlu0 %971
        %973 = vrot.lane.b32.xlu0 %v825, 84
        %v974 = vpop.permute.xlu0 %973
        %975 = vrot.lane.b32.xlu0 %v826, 84
        %v976 = vpop.permute.xlu0 %975
        %977 = vrot.lane.b32.xlu0 %v827, 84
        %v978 = vpop.permute.xlu0 %977
        %979 = vrot.lane.b32.xlu0 %v828, 84
        %v980 = vpop.permute.xlu0 %979
        %981 = vrot.lane.b32.xlu0 %v829, 84
        %v982 = vpop.permute.xlu0 %981
        %983 = vrot.lane.b32.xlu0 %v834, 84
        %v984 = vpop.permute.xlu0 %983
        %985 = vrot.lane.b32.xlu0 %v887, 84
        %v986 = vpop.permute.xlu0 %985
        %987 = vrot.lane.b32.xlu0 %v940, 84
        %v988 = vpop.permute.xlu0 %987
        %v991 = vunpack.c.l.b16 %v708
        %v992 = vunpack.c.l.b16 %v709
        %v993 = vpack.c.b16 %v992, %v991
        %994 = vrot.lane.b32.xlu0 %v810, 112
        %v995 = vpop.permute.xlu0 %994
        %996 = vrot.lane.b32.xlu0 %v811, 112
        %v997 = vpop.permute.xlu0 %996
        %998 = vrot.lane.b32.xlu0 %v812, 112
        %v999 = vpop.permute.xlu0 %998
        %1000 = vrot.lane.b32.xlu0 %v813, 112
        %v1001 = vpop.permute.xlu0 %1000
        %1002 = vrot.lane.b32.xlu0 %v814, 112
        %v1003 = vpop.permute.xlu0 %1002
        %1004 = vrot.lane.b32.xlu0 %v815, 112
        %v1005 = vpop.permute.xlu0 %1004
        %1006 = vrot.lane.b32.xlu0 %v816, 112
        %v1007 = vpop.permute.xlu0 %1006
        %1008 = vrot.lane.b32.xlu0 %v817, 112
        %v1009 = vpop.permute.xlu0 %1008
        %1010 = vrot.lane.b32.xlu0 %v818, 112
        %v1011 = vpop.permute.xlu0 %1010
        %1012 = vrot.lane.b32.xlu0 %v819, 112
        %v1013 = vpop.permute.xlu0 %1012
        %1014 = vrot.lane.b32.xlu0 %v820, 112
        %v1015 = vpop.permute.xlu0 %1014
        %1016 = vrot.lane.b32.xlu0 %v821, 112
        %v1017 = vpop.permute.xlu0 %1016
        %1018 = vrot.lane.b32.xlu0 %v822, 112
        %v1019 = vpop.permute.xlu0 %1018
        %1020 = vrot.lane.b32.xlu0 %v823, 112
        %v1021 = vpop.permute.xlu0 %1020
        %1022 = vrot.lane.b32.xlu0 %v824, 112
        %v1023 = vpop.permute.xlu0 %1022
        %1024 = vrot.lane.b32.xlu0 %v825, 112
        %v1025 = vpop.permute.xlu0 %1024
        %1026 = vrot.lane.b32.xlu0 %v826, 112
        %v1027 = vpop.permute.xlu0 %1026
        %1028 = vrot.lane.b32.xlu0 %v827, 112
        %v1029 = vpop.permute.xlu0 %1028
        %1030 = vrot.lane.b32.xlu0 %v828, 112
        %v1031 = vpop.permute.xlu0 %1030
        %1032 = vrot.lane.b32.xlu0 %v829, 112
        %v1033 = vpop.permute.xlu0 %1032
        %1034 = vrot.lane.b32.xlu0 %v834, 112
        %v1035 = vpop.permute.xlu0 %1034
        %1036 = vrot.lane.b32.xlu0 %v887, 112
        %v1037 = vpop.permute.xlu0 %1036
        %1038 = vrot.lane.b32.xlu0 %v940, 112
        %v1039 = vpop.permute.xlu0 %1038
        %1040 = vrot.lane.b32.xlu0 %v993, 112
        %v1041 = vpop.permute.xlu0 %1040
        %vm1042 = vcmask 228352
        %v1045 = vsel %vm1042, %v806, %v836
        %v1048 = vsel %vm1042, %v807, %v838
        %v1051 = vsel %vm1042, %v808, %v840
        %v1054 = vsel %vm1042, %v809, %v842
        %v1057 = vsel %vm1042, %v810, %v844
        %v1060 = vsel %vm1042, %v811, %v846
        %v1063 = vsel %vm1042, %v812, %v848
        %v1066 = vsel %vm1042, %v813, %v850
        %v1069 = vsel %vm1042, %v814, %v852
        %v1072 = vsel %vm1042, %v815, %v854
        %v1075 = vsel %vm1042, %v816, %v856
        %v1078 = vsel %vm1042, %v817, %v858
        %v1081 = vsel %vm1042, %v818, %v860
        %v1084 = vsel %vm1042, %v819, %v862
        %v1087 = vsel %vm1042, %v820, %v864
        %v1090 = vsel %vm1042, %v821, %v866
        %v1093 = vsel %vm1042, %v822, %v868
        %v1096 = vsel %vm1042, %v823, %v870
        %v1099 = vsel %vm1042, %v824, %v872
        %v1102 = vsel %vm1042, %v825, %v874
        %v1105 = vsel %vm1042, %v826, %v876
        %v1108 = vsel %vm1042, %v827, %v878
        %v1111 = vsel %vm1042, %v828, %v880
        %v1114 = vsel %vm1042, %v829, %v882
        %vm1115 = vcmask 457728
        %v1117 = vsel %vm1115, %v1045, %v889
        %v1119 = vsel %vm1115, %v1048, %v891
        %v1121 = vsel %vm1115, %v1051, %v893
        %v1123 = vsel %vm1115, %v1054, %v895
        %v1125 = vsel %vm1115, %v1057, %v897
        %v1127 = vsel %vm1115, %v1060, %v899
        %v1129 = vsel %vm1115, %v1063, %v901
        %v1131 = vsel %vm1115, %v1066, %v903
        %v1133 = vsel %vm1115, %v1069, %v905
        %v1135 = vsel %vm1115, %v1072, %v907
        %v1137 = vsel %vm1115, %v1075, %v909
        %v1139 = vsel %vm1115, %v1078, %v911
        %v1141 = vsel %vm1115, %v1081, %v913
        %v1143 = vsel %vm1115, %v1084, %v915
        %v1145 = vsel %vm1115, %v1087, %v917
        %v1147 = vsel %vm1115, %v1090, %v919
        %v1149 = vsel %vm1115, %v1093, %v921
        %v1151 = vsel %vm1115, %v1096, %v923
        %v1153 = vsel %vm1115, %v1099, %v925
        %v1155 = vsel %vm1115, %v1102, %v927
        %v1157 = vsel %vm1115, %v1105, %v929
        %v1159 = vsel %vm1115, %v1108, %v931
        %v1161 = vsel %vm1115, %v1111, %v933
        %v1163 = vsel %vm1115, %v1114, %v935
        %vm1164 = vcmask 687104
        %v1166 = vsel %vm1164, %v1117, %v942
        %v1168 = vsel %vm1164, %v1119, %v944
        %v1170 = vsel %vm1164, %v1121, %v946
        %v1172 = vsel %vm1164, %v1123, %v948
        %v1174 = vsel %vm1164, %v1125, %v950
        %v1176 = vsel %vm1164, %v1127, %v952
        %v1178 = vsel %vm1164, %v1129, %v954
        %v1180 = vsel %vm1164, %v1131, %v956
        %v1182 = vsel %vm1164, %v1133, %v958
        %v1184 = vsel %vm1164, %v1135, %v960
        %v1186 = vsel %vm1164, %v1137, %v962
        %v1188 = vsel %vm1164, %v1139, %v964
        %v1190 = vsel %vm1164, %v1141, %v966
        %v1192 = vsel %vm1164, %v1143, %v968
        %v1194 = vsel %vm1164, %v1145, %v970
        %v1196 = vsel %vm1164, %v1147, %v972
        %v1198 = vsel %vm1164, %v1149, %v974
        %v1200 = vsel %vm1164, %v1151, %v976
        %v1202 = vsel %vm1164, %v1153, %v978
        %v1204 = vsel %vm1164, %v1155, %v980
        %v1206 = vsel %vm1164, %v1157, %v982
        %v1208 = vsel %vm1164, %v1159, %v984
        %v1210 = vsel %vm1164, %v1161, %v986
        %v1212 = vsel %vm1164, %v1163, %v988
        %vm1213 = vcmask 916480
        %v1215 = vsel %vm1213, %v1166, %v995
        %v1218 = vsel %vm1213, %v1168, %v997
        %v1221 = vsel %vm1213, %v1170, %v999
        %v1224 = vsel %vm1213, %v1172, %v1001
        %v1227 = vsel %vm1213, %v1174, %v1003
        %v1230 = vsel %vm1213, %v1176, %v1005
        %v1233 = vsel %vm1213, %v1178, %v1007
        %v1236 = vsel %vm1213, %v1180, %v1009
        %v1239 = vsel %vm1213, %v1182, %v1011
        %v1242 = vsel %vm1213, %v1184, %v1013
        %v1245 = vsel %vm1213, %v1186, %v1015
        %v1248 = vsel %vm1213, %v1188, %v1017
        %v1251 = vsel %vm1213, %v1190, %v1019
        %v1254 = vsel %vm1213, %v1192, %v1021
        %v1257 = vsel %vm1213, %v1194, %v1023
        %v1260 = vsel %vm1213, %v1196, %v1025
        %v1263 = vsel %vm1213, %v1198, %v1027
        %v1266 = vsel %vm1213, %v1200, %v1029
        %v1269 = vsel %vm1213, %v1202, %v1031
        %v1272 = vsel %vm1213, %v1204, %v1033
        %v1275 = vsel %vm1213, %v1206, %v1035
        %v1278 = vsel %vm1213, %v1208, %v1037
        %v1281 = vsel %vm1213, %v1210, %v1039
        %v1284 = vsel %vm1213, %v1212, %v1041
        %v1286 = vld [vmem:[%s1] sm:$0xff]
        %v1287 = vld [vmem:[%s1 + $0x8] sm:$0xf]
        %v1288 = vld [vmem:[%s1 + $0xc] sm:$0xff]
        %v1289 = vld [vmem:[%s1 + $0x14] sm:$0xf]
        %v1290 = vld [vmem:[%s1 + $0x18] sm:$0xff]
        %v1291 = vld [vmem:[%s1 + $0x20] sm:$0xf]
        %v1292 = vld [vmem:[%s1 + $0x24] sm:$0xff]
        %v1293 = vld [vmem:[%s1 + $0x2c] sm:$0xf]
        %v1294 = vld [vmem:[%s1 + $0x30] sm:$0xff]
        %v1295 = vld [vmem:[%s1 + $0x38] sm:$0xf]
        %v1296 = vld [vmem:[%s1 + $0x3c] sm:$0xff]
        %v1297 = vld [vmem:[%s1 + $0x44] sm:$0xf]
        %v1298 = vld [vmem:[%s1 + $0x48] sm:$0xff]
        %v1299 = vld [vmem:[%s1 + $0x50] sm:$0xf]
        %v1300 = vld [vmem:[%s1 + $0x54] sm:$0xff]
        %v1301 = vld [vmem:[%s1 + $0x5c] sm:$0xf]
        %v1302 = vld [vmem:[%s1 + $0x60] sm:$0xff]
        %v1303 = vld [vmem:[%s1 + $0x68] sm:$0xf]
        %v1304 = vld [vmem:[%s1 + $0x6c] sm:$0xff]
        %v1305 = vld [vmem:[%s1 + $0x74] sm:$0xf]
        %v1306 = vld [vmem:[%s1 + $0x78] sm:$0xff]
        %v1307 = vld [vmem:[%s1 + $0x80] sm:$0xf]
        %v1308 = vld [vmem:[%s1 + $0x84] sm:$0xff]
        %v1309 = vld [vmem:[%s1 + $0x8c] sm:$0xf]
        %v1310 = vld [vmem:[%s1 + $0x90] sm:$0xff]
        %v1311 = vld [vmem:[%s1 + $0x98] sm:$0xf]
        %v1312 = vld [vmem:[%s1 + $0x9c] sm:$0xff]
        %v1313 = vld [vmem:[%s1 + $0xa4] sm:$0xf]
        %v1314 = vld [vmem:[%s1 + $0xa8] sm:$0xff]
        %v1315 = vld [vmem:[%s1 + $0xb0] sm:$0xf]
        %v1316 = vld [vmem:[%s1 + $0xb4] sm:$0xff]
        %v1317 = vld [vmem:[%s1 + $0xbc] sm:$0xf]
        %v1318 = vld [vmem:[%s1 + $0xc0] sm:$0xff]
        %v1319 = vld [vmem:[%s1 + $0xc8] sm:$0xf]
        %v1320 = vld [vmem:[%s1 + $0xcc] sm:$0x33]
        %v1321 = vld [vmem:[%s1 + $0xd4] sm:$0x3]
        %v1322 = vld [vmem:[%s2] sm:$0x7]
        %v1324 = vlaneseq
        %v1325 = vshrl.u32 %v1324, 7
        %v1326 = vsub.s32 0, %v1325
        %v1327 = vrot.slane %v1322, %v1326
        %v1328 = vlaneseq
        %v1329 = vshrl.u32 %v1328, 7
        %v1330 = vsub.s32 1, %v1329
        %v1331 = vrot.slane %v1322, %v1330
        %v1332 = vlaneseq
        %v1333 = vshrl.u32 %v1332, 7
        %v1334 = vsub.s32 2, %v1333
        %v1335 = vrot.slane %v1322, %v1334
        %v1375 = vunpack.c.l.b16 %v1286
        %v1376 = vunpack.c.h.b16 %v1286
        %v1377 = vunpack.c.l.b16 %v1287
        %v1378 = vunpack.c.l.b16 %v1288
        %v1379 = vunpack.c.h.b16 %v1288
        %v1380 = vunpack.c.l.b16 %v1289
        %v1381 = vunpack.c.l.b16 %v1290
        %v1382 = vunpack.c.h.b16 %v1290
        %v1383 = vunpack.c.l.b16 %v1291
        %v1384 = vunpack.c.l.b16 %v1292
        %v1385 = vunpack.c.h.b16 %v1292
        %v1386 = vunpack.c.l.b16 %v1293
        %v1387 = vunpack.c.l.b16 %v1294
        %v1388 = vunpack.c.h.b16 %v1294
        %v1389 = vunpack.c.l.b16 %v1295
        %v1390 = vunpack.c.l.b16 %v1296
        %v1391 = vunpack.c.h.b16 %v1296
        %v1392 = vunpack.c.l.b16 %v1297
        %v1393 = vunpack.c.l.b16 %v1298
        %v1394 = vunpack.c.h.b16 %v1298
        %v1395 = vunpack.c.l.b16 %v1299
        %v1396 = vunpack.c.l.b16 %v1300
        %v1397 = vunpack.c.h.b16 %v1300
        %v1398 = vunpack.c.l.b16 %v1301
        %v1399 = vunpack.c.l.b16 %v1302
        %v1400 = vunpack.c.h.b16 %v1302
        %v1401 = vunpack.c.l.b16 %v1303
        %v1402 = vunpack.c.l.b16 %v1304
        %v1403 = vunpack.c.h.b16 %v1304
        %v1404 = vunpack.c.l.b16 %v1305
        %v1405 = vunpack.c.l.b16 %v1306
        %v1406 = vunpack.c.h.b16 %v1306
        %v1407 = vunpack.c.l.b16 %v1307
        %v1408 = vunpack.c.l.b16 %v1308
        %v1409 = vunpack.c.h.b16 %v1308
        %v1410 = vunpack.c.l.b16 %v1309
        %v1411 = vunpack.c.l.b16 %v1310
        %v1412 = vunpack.c.h.b16 %v1310
        %v1413 = vunpack.c.l.b16 %v1311
        %v1414 = vunpack.c.l.b16 %v1312
        %v1415 = vunpack.c.h.b16 %v1312
        %v1416 = vunpack.c.l.b16 %v1313
        %v1417 = vunpack.c.l.b16 %v1314
        %v1418 = vunpack.c.h.b16 %v1314
        %v1419 = vunpack.c.l.b16 %v1315
        %v1420 = vunpack.c.l.b16 %v1316
        %v1421 = vunpack.c.h.b16 %v1316
        %v1422 = vunpack.c.l.b16 %v1317
        %v1423 = vunpack.c.l.b16 %v1318
        %v1424 = vunpack.c.h.b16 %v1318
        %v1425 = vunpack.c.l.b16 %v1319
        %v1426 = vunpack.c.l.b16 %v1320
        %v1427 = vunpack.c.h.b16 %v1320
        %v1428 = vunpack.c.l.b16 %v1321
        %v1429 = vpack.c.b16 %v1378, %v1375
        %v1430 = vpack.c.b16 %v1379, %v1376
        %v1431 = vpack.c.b16 %v1380, %v1377
        %v1432 = vpack.c.b16 %v1384, %v1381
        %v1433 = vpack.c.b16 %v1385, %v1382
        %v1434 = vpack.c.b16 %v1386, %v1383
        %v1435 = vpack.c.b16 %v1390, %v1387
        %v1436 = vpack.c.b16 %v1391, %v1388
        %v1437 = vpack.c.b16 %v1392, %v1389
        %v1438 = vpack.c.b16 %v1396, %v1393
        %v1439 = vpack.c.b16 %v1397, %v1394
        %v1440 = vpack.c.b16 %v1398, %v1395
        %v1441 = vpack.c.b16 %v1402, %v1399
        %v1442 = vpack.c.b16 %v1403, %v1400
        %v1443 = vpack.c.b16 %v1404, %v1401
        %v1444 = vpack.c.b16 %v1408, %v1405
        %v1445 = vpack.c.b16 %v1409, %v1406
        %v1446 = vpack.c.b16 %v1410, %v1407
        %v1447 = vpack.c.b16 %v1414, %v1411
        %v1448 = vpack.c.b16 %v1415, %v1412
        %v1449 = vpack.c.b16 %v1416, %v1413
        %v1450 = vpack.c.b16 %v1420, %v1417
        %v1451 = vpack.c.b16 %v1421, %v1418
        %v1452 = vpack.c.b16 %v1422, %v1419
        %v1453 = vpack.c.b16 %v1426, %v1423
        %v1454 = vpack.c.b16 %v1427, %v1424
        %v1455 = vpack.c.b16 %v1428, %v1425
        %vm1480 = vcmask 97280
        %v1481 = vsel %vm1480, %v995, 0
        %v1483 = vsel %vm1480, %v997, 0
        %v1485 = vsel %vm1480, %v999, 0
        %v1487 = vsel %vm1480, %v1001, 0
        %v1489 = vsel %vm1480, %v1003, 0
        %v1491 = vsel %vm1480, %v1005, 0
        %v1493 = vsel %vm1480, %v1007, 0
        %v1495 = vsel %vm1480, %v1009, 0
        %v1497 = vsel %vm1480, %v1011, 0
        %v1499 = vsel %vm1480, %v1013, 0
        %v1501 = vsel %vm1480, %v1015, 0
        %v1503 = vsel %vm1480, %v1017, 0
        %v1505 = vsel %vm1480, %v1019, 0
        %v1507 = vsel %vm1480, %v1021, 0
        %v1509 = vsel %vm1480, %v1023, 0
        %v1511 = vsel %vm1480, %v1025, 0
        %v1513 = vsel %vm1480, %v1027, 0
        %v1515 = vsel %vm1480, %v1029, 0
        %v1517 = vsel %vm1480, %v1031, 0
        %v1519 = vsel %vm1480, %v1033, 0
        %v1521 = vsel %vm1480, %v1035, 0
        %v1523 = vsel %vm1480, %v1037, 0
        %v1525 = vsel %vm1480, %v1039, 0
        %v1527 = vsel %vm1480, %v1041, 0
        %vm1529 = vcmask 1045504
        %v1531 = vsel %vm1529, %v1453, 0
        %v1534 = vsel %vm1529, %v1454, 0
        %v1537 = vsel %vm1529, %v1455, 0
        %1539 = vmatprep.subr.bf16.mxu0 %v1451
        %1540 = vmatpush1.bf16.msra.mxu0 %v1450
        %1541 = vmatprep.subr.bf16.mxu0 %v1448
        %1542 = vmatpush1.bf16.msra.mxu0 %v1447
        %1543 = vmatprep.subr.bf16.mxu0 %v1445
        %1544 = vmatpush1.bf16.msra.mxu0 %v1444
        %1545 = vmatprep.subr.bf16.mxu0 %v1442
        %1546 = vmatpush1.bf16.msra.mxu0 %v1441
        %1547 = vmatprep.subr.bf16.mxu0 %v1439
        %1548 = vmatpush1.bf16.msra.mxu0 %v1438
        %1549 = vmatprep.subr.bf16.mxu0 %v1436
        %1550 = vmatpush1.bf16.msra.mxu0 %v1435
        %1551 = vmatprep.subr.bf16.mxu0 %v1433
        %1552 = vmatpush1.bf16.msra.mxu0 %v1432
        %1553 = vmatprep.subr.bf16.mxu0 %v1430
        %1554 = vmatpush1.bf16.msra.mxu0 %v1429
        %1555 = vmatprep.subr.bf16.mxu0 0
        %1556 = vmatpush2.bf16.msra.mxu0 0
        %1557 = vmatprep.subr.bf16.mxu0 0
        %1558 = vmatpush2.bf16.msra.mxu0 0
        %1559 = vmatprep.subr.bf16.mxu0 0
        %1560 = vmatpush2.bf16.msra.mxu0 0
        %1561 = vmatprep.subr.bf16.mxu0 0
        %1562 = vmatpush2.bf16.msra.mxu0 0
        %1563 = vmatprep.subr.bf16.mxu0 0
        %1564 = vmatpush2.bf16.msra.mxu0 0
        %1565 = vmatprep.subr.bf16.mxu0 0
        %1566 = vmatpush2.bf16.msra.mxu0 0
        %1567 = vmatprep.subr.bf16.mxu0 0
        %1568 = vmatpush2.bf16.msra.mxu0 0
        %1569 = vmatprep.subr.bf16.mxu0 %v1534
        %1570 = vmatpush2.bf16.msra.mxu0 %v1531
        %1571 = vmatprep.mubr.bf16.mxu0 %v1481
        %1572 = vmatmul.mubr.bf16.gmra.mxu0 %v1215
        %v1573 = vpop.f32.mrf.mxu0
        %v1574 = vadd.f32 %v1327, %v1573
        %v1575 = vpop.f32.mrf.mxu0
        %v1576 = vadd.f32 %v1331, %v1575
        %v1577 = vpop.f32.mrf.mxu0
        %v1578 = vadd.f32 %v1327, %v1577
        %v1579 = vpop.f32.mrf.mxu0
        %v1580 = vadd.f32 %v1331, %v1579
        %1581 = vmatprep.mubr.bf16.mxu0 %v1483
        %1582 = vmatmul.mubr.bf16.gmra.mxu0 %v1218
        %v1583 = vpop.f32.mrf.mxu0
        %v1584 = vadd.f32 %v1327, %v1583
        %v1585 = vpop.f32.mrf.mxu0
        %v1586 = vadd.f32 %v1331, %v1585
        %v1587 = vpop.f32.mrf.mxu0
        %v1588 = vadd.f32 %v1327, %v1587
        %v1589 = vpop.f32.mrf.mxu0
        %v1590 = vadd.f32 %v1331, %v1589
        %1591 = vmatprep.mubr.bf16.mxu0 %v1485
        %1592 = vmatmul.mubr.bf16.gmra.mxu0 %v1221
        %v1593 = vpop.f32.mrf.mxu0
        %v1594 = vadd.f32 %v1327, %v1593
        %v1595 = vpop.f32.mrf.mxu0
        %v1596 = vadd.f32 %v1331, %v1595
        %v1597 = vpop.f32.mrf.mxu0
        %v1598 = vadd.f32 %v1327, %v1597
        %v1599 = vpop.f32.mrf.mxu0
        %v1600 = vadd.f32 %v1331, %v1599
        %1601 = vmatprep.mubr.bf16.mxu0 %v1487
        %1602 = vmatmul.mubr.bf16.gmra.mxu0 %v1224
        %v1603 = vpop.f32.mrf.mxu0
        %v1604 = vadd.f32 %v1327, %v1603
        %v1605 = vpop.f32.mrf.mxu0
        %v1606 = vadd.f32 %v1331, %v1605
        %v1607 = vpop.f32.mrf.mxu0
        %v1608 = vadd.f32 %v1327, %v1607
        %v1609 = vpop.f32.mrf.mxu0
        %v1610 = vadd.f32 %v1331, %v1609
        %1611 = vmatprep.mubr.bf16.mxu0 %v1489
        %1612 = vmatmul.mubr.bf16.gmra.mxu0 %v1227
        %v1613 = vpop.f32.mrf.mxu0
        %v1614 = vadd.f32 %v1327, %v1613
        %v1615 = vpop.f32.mrf.mxu0
        %v1616 = vadd.f32 %v1331, %v1615
        %v1617 = vpop.f32.mrf.mxu0
        %v1618 = vadd.f32 %v1327, %v1617
        %v1619 = vpop.f32.mrf.mxu0
        %v1620 = vadd.f32 %v1331, %v1619
        %1621 = vmatprep.mubr.bf16.mxu0 %v1491
        %1622 = vmatmul.mubr.bf16.gmra.mxu0 %v1230
        %v1623 = vpop.f32.mrf.mxu0
        %v1624 = vadd.f32 %v1327, %v1623
        %v1625 = vpop.f32.mrf.mxu0
        %v1626 = vadd.f32 %v1331, %v1625
        %v1627 = vpop.f32.mrf.mxu0
        %v1628 = vadd.f32 %v1327, %v1627
        %v1629 = vpop.f32.mrf.mxu0
        %v1630 = vadd.f32 %v1331, %v1629
        %1631 = vmatprep.mubr.bf16.mxu0 %v1493
        %1632 = vmatmul.mubr.bf16.gmra.mxu0 %v1233
        %v1633 = vpop.f32.mrf.mxu0
        %v1634 = vadd.f32 %v1327, %v1633
        %v1635 = vpop.f32.mrf.mxu0
        %v1636 = vadd.f32 %v1331, %v1635
        %v1637 = vpop.f32.mrf.mxu0
        %v1638 = vadd.f32 %v1327, %v1637
        %v1639 = vpop.f32.mrf.mxu0
        %v1640 = vadd.f32 %v1331, %v1639
        %1641 = vmatprep.mubr.bf16.mxu0 %v1495
        %1642 = vmatmul.mubr.bf16.gmra.mxu0 %v1236
        %v1643 = vpop.f32.mrf.mxu0
        %v1644 = vadd.f32 %v1327, %v1643
        %v1645 = vpop.f32.mrf.mxu0
        %v1646 = vadd.f32 %v1331, %v1645
        %v1647 = vpop.f32.mrf.mxu0
        %v1648 = vadd.f32 %v1327, %v1647
        %v1649 = vpop.f32.mrf.mxu0
        %v1650 = vadd.f32 %v1331, %v1649
        %1651 = vmatprep.mubr.bf16.mxu0 %v1497
        %1652 = vmatmul.mubr.bf16.gmra.mxu0 %v1239
        %v1653 = vpop.f32.mrf.mxu0
        %v1654 = vadd.f32 %v1327, %v1653
        %v1655 = vpop.f32.mrf.mxu0
        %v1656 = vadd.f32 %v1331, %v1655
        %v1657 = vpop.f32.mrf.mxu0
        %v1658 = vadd.f32 %v1327, %v1657
        %v1659 = vpop.f32.mrf.mxu0
        %v1660 = vadd.f32 %v1331, %v1659
        %1661 = vmatprep.mubr.bf16.mxu0 %v1499
        %1662 = vmatmul.mubr.bf16.gmra.mxu0 %v1242
        %v1663 = vpop.f32.mrf.mxu0
        %v1664 = vadd.f32 %v1327, %v1663
        %v1665 = vpop.f32.mrf.mxu0
        %v1666 = vadd.f32 %v1331, %v1665
        %v1667 = vpop.f32.mrf.mxu0
        %v1668 = vadd.f32 %v1327, %v1667
        %v1669 = vpop.f32.mrf.mxu0
        %v1670 = vadd.f32 %v1331, %v1669
        %1671 = vmatprep.mubr.bf16.mxu0 %v1501
        %1672 = vmatmul.mubr.bf16.gmra.mxu0 %v1245
        %v1673 = vpop.f32.mrf.mxu0
        %v1674 = vadd.f32 %v1327, %v1673
        %v1675 = vpop.f32.mrf.mxu0
        %v1676 = vadd.f32 %v1331, %v1675
        %v1677 = vpop.f32.mrf.mxu0
        %v1678 = vadd.f32 %v1327, %v1677
        %v1679 = vpop.f32.mrf.mxu0
        %v1680 = vadd.f32 %v1331, %v1679
        %1681 = vmatprep.mubr.bf16.mxu0 %v1503
        %1682 = vmatmul.mubr.bf16.gmra.mxu0 %v1248
        %v1683 = vpop.f32.mrf.mxu0
        %v1684 = vadd.f32 %v1327, %v1683
        %v1685 = vpop.f32.mrf.mxu0
        %v1686 = vadd.f32 %v1331, %v1685
        %v1687 = vpop.f32.mrf.mxu0
        %v1688 = vadd.f32 %v1327, %v1687
        %v1689 = vpop.f32.mrf.mxu0
        %v1690 = vadd.f32 %v1331, %v1689
        %1691 = vmatprep.mubr.bf16.mxu0 %v1505
        %1692 = vmatmul.mubr.bf16.gmra.mxu0 %v1251
        %v1693 = vpop.f32.mrf.mxu0
        %v1694 = vadd.f32 %v1327, %v1693
        %v1695 = vpop.f32.mrf.mxu0
        %v1696 = vadd.f32 %v1331, %v1695
        %v1697 = vpop.f32.mrf.mxu0
        %v1698 = vadd.f32 %v1327, %v1697
        %v1699 = vpop.f32.mrf.mxu0
        %v1700 = vadd.f32 %v1331, %v1699
        %1701 = vmatprep.mubr.bf16.mxu0 %v1507
        %1702 = vmatmul.mubr.bf16.gmra.mxu0 %v1254
        %v1703 = vpop.f32.mrf.mxu0
        %v1704 = vadd.f32 %v1327, %v1703
        %v1705 = vpop.f32.mrf.mxu0
        %v1706 = vadd.f32 %v1331, %v1705
        %v1707 = vpop.f32.mrf.mxu0
        %v1708 = vadd.f32 %v1327, %v1707
        %v1709 = vpop.f32.mrf.mxu0
        %v1710 = vadd.f32 %v1331, %v1709
        %1711 = vmatprep.mubr.bf16.mxu0 %v1509
        %1712 = vmatmul.mubr.bf16.gmra.mxu0 %v1257
        %v1713 = vpop.f32.mrf.mxu0
        %v1714 = vadd.f32 %v1327, %v1713
        %v1715 = vpop.f32.mrf.mxu0
        %v1716 = vadd.f32 %v1331, %v1715
        %v1717 = vpop.f32.mrf.mxu0
        %v1718 = vadd.f32 %v1327, %v1717
        %v1719 = vpop.f32.mrf.mxu0
        %v1720 = vadd.f32 %v1331, %v1719
        %1721 = vmatprep.mubr.bf16.mxu0 %v1511
        %1722 = vmatmul.mubr.bf16.gmra.mxu0 %v1260
        %v1723 = vpop.f32.mrf.mxu0
        %v1724 = vadd.f32 %v1327, %v1723
        %v1725 = vpop.f32.mrf.mxu0
        %v1726 = vadd.f32 %v1331, %v1725
        %v1727 = vpop.f32.mrf.mxu0
        %v1728 = vadd.f32 %v1327, %v1727
        %v1729 = vpop.f32.mrf.mxu0
        %v1730 = vadd.f32 %v1331, %v1729
        %1731 = vmatprep.mubr.bf16.mxu0 %v1513
        %1732 = vmatmul.mubr.bf16.gmra.mxu0 %v1263
        %v1733 = vpop.f32.mrf.mxu0
        %v1734 = vadd.f32 %v1327, %v1733
        %v1735 = vpop.f32.mrf.mxu0
        %v1736 = vadd.f32 %v1331, %v1735
        %v1737 = vpop.f32.mrf.mxu0
        %v1738 = vadd.f32 %v1327, %v1737
        %v1739 = vpop.f32.mrf.mxu0
        %v1740 = vadd.f32 %v1331, %v1739
        %1741 = vmatprep.mubr.bf16.mxu0 %v1515
        %1742 = vmatmul.mubr.bf16.gmra.mxu0 %v1266
        %v1743 = vpop.f32.mrf.mxu0
        %v1744 = vadd.f32 %v1327, %v1743
        %v1745 = vpop.f32.mrf.mxu0
        %v1746 = vadd.f32 %v1331, %v1745
        %v1747 = vpop.f32.mrf.mxu0
        %v1748 = vadd.f32 %v1327, %v1747
        %v1749 = vpop.f32.mrf.mxu0
        %v1750 = vadd.f32 %v1331, %v1749
        %1751 = vmatprep.mubr.bf16.mxu0 %v1517
        %1752 = vmatmul.mubr.bf16.gmra.mxu0 %v1269
        %v1753 = vpop.f32.mrf.mxu0
        %v1754 = vadd.f32 %v1327, %v1753
        %v1755 = vpop.f32.mrf.mxu0
        %v1756 = vadd.f32 %v1331, %v1755
        %v1757 = vpop.f32.mrf.mxu0
        %v1758 = vadd.f32 %v1327, %v1757
        %v1759 = vpop.f32.mrf.mxu0
        %v1760 = vadd.f32 %v1331, %v1759
        %1761 = vmatprep.mubr.bf16.mxu0 %v1519
        %1762 = vmatmul.mubr.bf16.gmra.mxu0 %v1272
        %v1763 = vpop.f32.mrf.mxu0
        %v1764 = vadd.f32 %v1327, %v1763
        %v1765 = vpop.f32.mrf.mxu0
        %v1766 = vadd.f32 %v1331, %v1765
        %v1767 = vpop.f32.mrf.mxu0
        %v1768 = vadd.f32 %v1327, %v1767
        %v1769 = vpop.f32.mrf.mxu0
        %v1770 = vadd.f32 %v1331, %v1769
        %1771 = vmatprep.mubr.bf16.mxu0 %v1521
        %1772 = vmatmul.mubr.bf16.gmra.mxu0 %v1275
        %v1773 = vpop.f32.mrf.mxu0
        %v1774 = vadd.f32 %v1327, %v1773
        %v1775 = vpop.f32.mrf.mxu0
        %v1776 = vadd.f32 %v1331, %v1775
        %v1777 = vpop.f32.mrf.mxu0
        %v1778 = vadd.f32 %v1327, %v1777
        %v1779 = vpop.f32.mrf.mxu0
        %v1780 = vadd.f32 %v1331, %v1779
        %1781 = vmatprep.mubr.bf16.mxu0 %v1523
        %1782 = vmatmul.mubr.bf16.gmra.mxu0 %v1278
        %v1783 = vpop.f32.mrf.mxu0
        %v1784 = vadd.f32 %v1327, %v1783
        %v1785 = vpop.f32.mrf.mxu0
        %v1786 = vadd.f32 %v1331, %v1785
        %v1787 = vpop.f32.mrf.mxu0
        %v1788 = vadd.f32 %v1327, %v1787
        %v1789 = vpop.f32.mrf.mxu0
        %v1790 = vadd.f32 %v1331, %v1789
        %1791 = vmatprep.mubr.bf16.mxu0 %v1525
        %1792 = vmatmul.mubr.bf16.gmra.mxu0 %v1281
        %v1793 = vpop.f32.mrf.mxu0
        %v1794 = vadd.f32 %v1327, %v1793
        %v1795 = vpop.f32.mrf.mxu0
        %v1796 = vadd.f32 %v1331, %v1795
        %v1797 = vpop.f32.mrf.mxu0
        %v1798 = vadd.f32 %v1327, %v1797
        %v1799 = vpop.f32.mrf.mxu0
        %v1800 = vadd.f32 %v1331, %v1799
        %1801 = vmatprep.mubr.bf16.mxu0 %v1527
        %1802 = vmatmul.mubr.bf16.gmra.mxu0 %v1284
        %v1803 = vpop.f32.mrf.mxu0
        %v1804 = vadd.f32 %v1327, %v1803
        %v1805 = vpop.f32.mrf.mxu0
        %v1806 = vadd.f32 %v1331, %v1805
        %v1807 = vpop.f32.mrf.mxu0
        %v1808 = vadd.f32 %v1327, %v1807
        %v1809 = vpop.f32.mrf.mxu0
        %v1810 = vadd.f32 %v1331, %v1809
        %1811 = vdwg.mxu0
        %1812 = vmatprep.subr.bf16.mxu0 0
        %1813 = vmatpush1.bf16.msra.mxu0 %v1452
        %1814 = vmatprep.subr.bf16.mxu0 0
        %1815 = vmatpush1.bf16.msra.mxu0 %v1449
        %1816 = vmatprep.subr.bf16.mxu0 0
        %1817 = vmatpush1.bf16.msra.mxu0 %v1446
        %1818 = vmatprep.subr.bf16.mxu0 0
        %1819 = vmatpush1.bf16.msra.mxu0 %v1443
        %1820 = vmatprep.subr.bf16.mxu0 0
        %1821 = vmatpush1.bf16.msra.mxu0 %v1440
        %1822 = vmatprep.subr.bf16.mxu0 0
        %1823 = vmatpush1.bf16.msra.mxu0 %v1437
        %1824 = vmatprep.subr.bf16.mxu0 0
        %1825 = vmatpush1.bf16.msra.mxu0 %v1434
        %1826 = vmatprep.subr.bf16.mxu0 0
        %1827 = vmatpush1.bf16.msra.mxu0 %v1431
        %1828 = vmatprep.subr.bf16.mxu0 0
        %1829 = vmatpush2.bf16.msra.mxu0 0
        %1830 = vmatprep.subr.bf16.mxu0 0
        %1831 = vmatpush2.bf16.msra.mxu0 0
        %1832 = vmatprep.subr.bf16.mxu0 0
        %1833 = vmatpush2.bf16.msra.mxu0 0
        %1834 = vmatprep.subr.bf16.mxu0 0
        %1835 = vmatpush2.bf16.msra.mxu0 0
        %1836 = vmatprep.subr.bf16.mxu0 0
        %1837 = vmatpush2.bf16.msra.mxu0 0
        %1838 = vmatprep.subr.bf16.mxu0 0
        %1839 = vmatpush2.bf16.msra.mxu0 0
        %1840 = vmatprep.subr.bf16.mxu0 0
        %1841 = vmatpush2.bf16.msra.mxu0 0
        %1842 = vmatprep.subr.bf16.mxu0 0
        %1843 = vmatpush2.bf16.msra.mxu0 %v1537
        %1844 = vmatprep.mubr.bf16.mxu0 %v1481
        %1845 = vmatmul.mubr.bf16.gmra.mxu0 %v1215
        %v1846 = vpop.f32.mrf.mxu0
        %v1847 = vadd.f32 %v1335, %v1846
        %v1848 = vpop.f32.mrf.mxu0
        %v1849 = vpop.f32.mrf.mxu0
        %v1850 = vadd.f32 %v1335, %v1849
        %v1851 = vpop.f32.mrf.mxu0
        %1852 = vmatprep.mubr.bf16.mxu0 %v1483
        %1853 = vmatmul.mubr.bf16.gmra.mxu0 %v1218
        %v1854 = vpop.f32.mrf.mxu0
        %v1855 = vadd.f32 %v1335, %v1854
        %v1856 = vpop.f32.mrf.mxu0
        %v1857 = vpop.f32.mrf.mxu0
        %v1858 = vadd.f32 %v1335, %v1857
        %v1859 = vpop.f32.mrf.mxu0
        %1860 = vmatprep.mubr.bf16.mxu0 %v1485
        %1861 = vmatmul.mubr.bf16.gmra.mxu0 %v1221
        %v1862 = vpop.f32.mrf.mxu0
        %v1863 = vadd.f32 %v1335, %v1862
        %v1864 = vpop.f32.mrf.mxu0
        %v1865 = vpop.f32.mrf.mxu0
        %v1866 = vadd.f32 %v1335, %v1865
        %v1867 = vpop.f32.mrf.mxu0
        %1868 = vmatprep.mubr.bf16.mxu0 %v1487
        %1869 = vmatmul.mubr.bf16.gmra.mxu0 %v1224
        %v1870 = vpop.f32.mrf.mxu0
        %v1871 = vadd.f32 %v1335, %v1870
        %v1872 = vpop.f32.mrf.mxu0
        %v1873 = vpop.f32.mrf.mxu0
        %v1874 = vadd.f32 %v1335, %v1873
        %v1875 = vpop.f32.mrf.mxu0
        %1876 = vmatprep.mubr.bf16.mxu0 %v1489
        %1877 = vmatmul.mubr.bf16.gmra.mxu0 %v1227
        %v1878 = vpop.f32.mrf.mxu0
        %v1879 = vadd.f32 %v1335, %v1878
        %v1880 = vpop.f32.mrf.mxu0
        %v1881 = vpop.f32.mrf.mxu0
        %v1882 = vadd.f32 %v1335, %v1881
        %v1883 = vpop.f32.mrf.mxu0
        %1884 = vmatprep.mubr.bf16.mxu0 %v1491
        %1885 = vmatmul.mubr.bf16.gmra.mxu0 %v1230
        %v1886 = vpop.f32.mrf.mxu0
        %v1887 = vadd.f32 %v1335, %v1886
        %v1888 = vpop.f32.mrf.mxu0
        %v1889 = vpop.f32.mrf.mxu0
        %v1890 = vadd.f32 %v1335, %v1889
        %v1891 = vpop.f32.mrf.mxu0
        %1892 = vmatprep.mubr.bf16.mxu0 %v1493
        %1893 = vmatmul.mubr.bf16.gmra.mxu0 %v1233
        %v1894 = vpop.f32.mrf.mxu0
        %v1895 = vadd.f32 %v1335, %v1894
        %v1896 = vpop.f32.mrf.mxu0
        %v1897 = vpop.f32.mrf.mxu0
        %v1898 = vadd.f32 %v1335, %v1897
        %v1899 = vpop.f32.mrf.mxu0
        %1900 = vmatprep.mubr.bf16.mxu0 %v1495
        %1901 = vmatmul.mubr.bf16.gmra.mxu0 %v1236
        %v1902 = vpop.f32.mrf.mxu0
        %v1903 = vadd.f32 %v1335, %v1902
        %v1904 = vpop.f32.mrf.mxu0
        %v1905 = vpop.f32.mrf.mxu0
        %v1906 = vadd.f32 %v1335, %v1905
        %v1907 = vpop.f32.mrf.mxu0
        %1908 = vmatprep.mubr.bf16.mxu0 %v1497
        %1909 = vmatmul.mubr.bf16.gmra.mxu0 %v1239
        %v1910 = vpop.f32.mrf.mxu0
        %v1911 = vadd.f32 %v1335, %v1910
        %v1912 = vpop.f32.mrf.mxu0
        %v1913 = vpop.f32.mrf.mxu0
        %v1914 = vadd.f32 %v1335, %v1913
        %v1915 = vpop.f32.mrf.mxu0
        %1916 = vmatprep.mubr.bf16.mxu0 %v1499
        %1917 = vmatmul.mubr.bf16.gmra.mxu0 %v1242
        %v1918 = vpop.f32.mrf.mxu0
        %v1919 = vadd.f32 %v1335, %v1918
        %v1920 = vpop.f32.mrf.mxu0
        %v1921 = vpop.f32.mrf.mxu0
        %v1922 = vadd.f32 %v1335, %v1921
        %v1923 = vpop.f32.mrf.mxu0
        %1924 = vmatprep.mubr.bf16.mxu0 %v1501
        %1925 = vmatmul.mubr.bf16.gmra.mxu0 %v1245
        %v1926 = vpop.f32.mrf.mxu0
        %v1927 = vadd.f32 %v1335, %v1926
        %v1928 = vpop.f32.mrf.mxu0
        %v1929 = vpop.f32.mrf.mxu0
        %v1930 = vadd.f32 %v1335, %v1929
        %v1931 = vpop.f32.mrf.mxu0
        %1932 = vmatprep.mubr.bf16.mxu0 %v1503
        %1933 = vmatmul.mubr.bf16.gmra.mxu0 %v1248
        %v1934 = vpop.f32.mrf.mxu0
        %v1935 = vadd.f32 %v1335, %v1934
        %v1936 = vpop.f32.mrf.mxu0
        %v1937 = vpop.f32.mrf.mxu0
        %v1938 = vadd.f32 %v1335, %v1937
        %v1939 = vpop.f32.mrf.mxu0
        %1940 = vmatprep.mubr.bf16.mxu0 %v1505
        %1941 = vmatmul.mubr.bf16.gmra.mxu0 %v1251
        %v1942 = vpop.f32.mrf.mxu0
        %v1943 = vadd.f32 %v1335, %v1942
        %v1944 = vpop.f32.mrf.mxu0
        %v1945 = vpop.f32.mrf.mxu0
        %v1946 = vadd.f32 %v1335, %v1945
        %v1947 = vpop.f32.mrf.mxu0
        %1948 = vmatprep.mubr.bf16.mxu0 %v1507
        %1949 = vmatmul.mubr.bf16.gmra.mxu0 %v1254
        %v1950 = vpop.f32.mrf.mxu0
        %v1951 = vadd.f32 %v1335, %v1950
        %v1952 = vpop.f32.mrf.mxu0
        %v1953 = vpop.f32.mrf.mxu0
        %v1954 = vadd.f32 %v1335, %v1953
        %v1955 = vpop.f32.mrf.mxu0
        %1956 = vmatprep.mubr.bf16.mxu0 %v1509
        %1957 = vmatmul.mubr.bf16.gmra.mxu0 %v1257
        %v1958 = vpop.f32.mrf.mxu0
        %v1959 = vadd.f32 %v1335, %v1958
        %v1960 = vpop.f32.mrf.mxu0
        %v1961 = vpop.f32.mrf.mxu0
        %v1962 = vadd.f32 %v1335, %v1961
        %v1963 = vpop.f32.mrf.mxu0
        %1964 = vmatprep.mubr.bf16.mxu0 %v1511
        %1965 = vmatmul.mubr.bf16.gmra.mxu0 %v1260
        %v1966 = vpop.f32.mrf.mxu0
        %v1967 = vadd.f32 %v1335, %v1966
        %v1968 = vpop.f32.mrf.mxu0
        %v1969 = vpop.f32.mrf.mxu0
        %v1970 = vadd.f32 %v1335, %v1969
        %v1971 = vpop.f32.mrf.mxu0
        %1972 = vmatprep.mubr.bf16.mxu0 %v1513
        %1973 = vmatmul.mubr.bf16.gmra.mxu0 %v1263
        %v1974 = vpop.f32.mrf.mxu0
        %v1975 = vadd.f32 %v1335, %v1974
        %v1976 = vpop.f32.mrf.mxu0
        %v1977 = vpop.f32.mrf.mxu0
        %v1978 = vadd.f32 %v1335, %v1977
        %v1979 = vpop.f32.mrf.mxu0
        %1980 = vmatprep.mubr.bf16.mxu0 %v1515
        %1981 = vmatmul.mubr.bf16.gmra.mxu0 %v1266
        %v1982 = vpop.f32.mrf.mxu0
        %v1983 = vadd.f32 %v1335, %v1982
        %v1984 = vpop.f32.mrf.mxu0
        %v1985 = vpop.f32.mrf.mxu0
        %v1986 = vadd.f32 %v1335, %v1985
        %v1987 = vpop.f32.mrf.mxu0
        %1988 = vmatprep.mubr.bf16.mxu0 %v1517
        %1989 = vmatmul.mubr.bf16.gmra.mxu0 %v1269
        %v1990 = vpop.f32.mrf.mxu0
        %v1991 = vadd.f32 %v1335, %v1990
        %v1992 = vpop.f32.mrf.mxu0
        %v1993 = vpop.f32.mrf.mxu0
        %v1994 = vadd.f32 %v1335, %v1993
        %v1995 = vpop.f32.mrf.mxu0
        %1996 = vmatprep.mubr.bf16.mxu0 %v1519
        %1997 = vmatmul.mubr.bf16.gmra.mxu0 %v1272
        %v1998 = vpop.f32.mrf.mxu0
        %v1999 = vadd.f32 %v1335, %v1998
        %v2000 = vpop.f32.mrf.mxu0
        %v2001 = vpop.f32.mrf.mxu0
        %v2002 = vadd.f32 %v1335, %v2001
        %v2003 = vpop.f32.mrf.mxu0
        %2004 = vmatprep.mubr.bf16.mxu0 %v1521
        %2005 = vmatmul.mubr.bf16.gmra.mxu0 %v1275
        %v2006 = vpop.f32.mrf.mxu0
        %v2007 = vadd.f32 %v1335, %v2006
        %v2008 = vpop.f32.mrf.mxu0
        %v2009 = vpop.f32.mrf.mxu0
        %v2010 = vadd.f32 %v1335, %v2009
        %v2011 = vpop.f32.mrf.mxu0
        %2012 = vmatprep.mubr.bf16.mxu0 %v1523
        %2013 = vmatmul.mubr.bf16.gmra.mxu0 %v1278
        %v2014 = vpop.f32.mrf.mxu0
        %v2015 = vadd.f32 %v1335, %v2014
        %v2016 = vpop.f32.mrf.mxu0
        %v2017 = vpop.f32.mrf.mxu0
        %v2018 = vadd.f32 %v1335, %v2017
        %v2019 = vpop.f32.mrf.mxu0
        %2020 = vmatprep.mubr.bf16.mxu0 %v1525
        %2021 = vmatmul.mubr.bf16.gmra.mxu0 %v1281
        %v2022 = vpop.f32.mrf.mxu0
        %v2023 = vadd.f32 %v1335, %v2022
        %v2024 = vpop.f32.mrf.mxu0
        %v2025 = vpop.f32.mrf.mxu0
        %v2026 = vadd.f32 %v1335, %v2025
        %v2027 = vpop.f32.mrf.mxu0
        %2028 = vmatprep.mubr.bf16.mxu0 %v1527
        %2029 = vmatmul.mubr.bf16.gmra.mxu0 %v1284
        %v2030 = vpop.f32.mrf.mxu0
        %v2031 = vadd.f32 %v1335, %v2030
        %v2032 = vpop.f32.mrf.mxu0
        %v2033 = vpop.f32.mrf.mxu0
        %v2034 = vadd.f32 %v1335, %v2033
        %v2035 = vpop.f32.mrf.mxu0
        %2036 = vdwg.mxu0
        %v2037 = vmax.f32 %v1574, %v1584
        %v2038 = vmax.f32 %v1576, %v1586
        %v2039 = vmax.f32 %v1847, %v1855
        %v2040 = vmax.f32 %v1578, %v1588
        %v2041 = vmax.f32 %v1580, %v1590
        %v2042 = vmax.f32 %v1850, %v1858
        %v2043 = vmax.f32 %v1594, %v1604
        %v2044 = vmax.f32 %v1596, %v1606
        %v2045 = vmax.f32 %v1863, %v1871
        %v2046 = vmax.f32 %v1598, %v1608
        %v2047 = vmax.f32 %v1600, %v1610
        %v2048 = vmax.f32 %v1866, %v1874
        %v2049 = vmax.f32 %v1614, %v1624
        %v2050 = vmax.f32 %v1616, %v1626
        %v2051 = vmax.f32 %v1879, %v1887
        %v2052 = vmax.f32 %v1618, %v1628
        %v2053 = vmax.f32 %v1620, %v1630
        %v2054 = vmax.f32 %v1882, %v1890
        %v2055 = vmax.f32 %v1634, %v1644
        %v2056 = vmax.f32 %v1636, %v1646
        %v2057 = vmax.f32 %v1895, %v1903
        %v2058 = vmax.f32 %v1638, %v1648
        %v2059 = vmax.f32 %v1640, %v1650
        %v2060 = vmax.f32 %v1898, %v1906
        %v2061 = vmax.f32 %v1654, %v1664
        %v2062 = vmax.f32 %v1656, %v1666
        %v2063 = vmax.f32 %v1911, %v1919
        %v2064 = vmax.f32 %v1658, %v1668
        %v2065 = vmax.f32 %v1660, %v1670
        %v2066 = vmax.f32 %v1914, %v1922
        %v2067 = vmax.f32 %v1674, %v1684
        %v2068 = vmax.f32 %v1676, %v1686
        %v2069 = vmax.f32 %v1927, %v1935
        %v2070 = vmax.f32 %v1678, %v1688
        %v2071 = vmax.f32 %v1680, %v1690
        %v2072 = vmax.f32 %v1930, %v1938
        %v2073 = vmax.f32 %v1694, %v1704
        %v2074 = vmax.f32 %v1696, %v1706
        %v2075 = vmax.f32 %v1943, %v1951
        %v2076 = vmax.f32 %v1698, %v1708
        %v2077 = vmax.f32 %v1700, %v1710
        %v2078 = vmax.f32 %v1946, %v1954
        %v2079 = vmax.f32 %v1714, %v1724
        %v2080 = vmax.f32 %v1716, %v1726
        %v2081 = vmax.f32 %v1959, %v1967
        %v2082 = vmax.f32 %v1718, %v1728
        %v2083 = vmax.f32 %v1720, %v1730
        %v2084 = vmax.f32 %v1962, %v1970
        %v2085 = vmax.f32 %v1734, %v1744
        %v2086 = vmax.f32 %v1736, %v1746
        %v2087 = vmax.f32 %v1975, %v1983
        %v2088 = vmax.f32 %v1738, %v1748
        %v2089 = vmax.f32 %v1740, %v1750
        %v2090 = vmax.f32 %v1978, %v1986
        %v2091 = vmax.f32 %v1754, %v1764
        %v2092 = vmax.f32 %v1756, %v1766
        %v2093 = vmax.f32 %v1991, %v1999
        %v2094 = vmax.f32 %v1758, %v1768
        %v2095 = vmax.f32 %v1760, %v1770
        %v2096 = vmax.f32 %v1994, %v2002
        %v2097 = vmax.f32 %v1774, %v1784
        %v2098 = vmax.f32 %v1776, %v1786
        %v2099 = vmax.f32 %v2007, %v2015
        %v2100 = vmax.f32 %v1778, %v1788
        %v2101 = vmax.f32 %v1780, %v1790
        %v2102 = vmax.f32 %v2010, %v2018
        %v2103 = vmax.f32 %v1794, %v1804
        %v2104 = vmax.f32 %v1796, %v1806
        %v2105 = vmax.f32 %v2023, %v2031
        %v2106 = vmax.f32 %v1798, %v1808
        %v2107 = vmax.f32 %v1800, %v1810
        %v2108 = vmax.f32 %v2026, %v2034
        %v2109 = vpack.c.bf16 %v2040, %v2037
        %v2110 = vpack.c.bf16 %v2041, %v2038
        %v2111 = vpack.c.bf16 %v2042, %v2039
        %v2112 = vpack.c.bf16 %v2046, %v2043
        %v2113 = vpack.c.bf16 %v2047, %v2044
        %v2114 = vpack.c.bf16 %v2048, %v2045
        %v2115 = vpack.c.bf16 %v2052, %v2049
        %v2116 = vpack.c.bf16 %v2053, %v2050
        %v2117 = vpack.c.bf16 %v2054, %v2051
        %v2118 = vpack.c.bf16 %v2058, %v2055
        %v2119 = vpack.c.bf16 %v2059, %v2056
        %v2120 = vpack.c.bf16 %v2060, %v2057
        %v2121 = vpack.c.bf16 %v2064, %v2061
        %v2122 = vpack.c.bf16 %v2065, %v2062
        %v2123 = vpack.c.bf16 %v2066, %v2063
        %v2124 = vpack.c.bf16 %v2070, %v2067
        %v2125 = vpack.c.bf16 %v2071, %v2068
        %v2126 = vpack.c.bf16 %v2072, %v2069
        %v2127 = vpack.c.bf16 %v2076, %v2073
        %v2128 = vpack.c.bf16 %v2077, %v2074
        %v2129 = vpack.c.bf16 %v2078, %v2075
        %v2130 = vpack.c.bf16 %v2082, %v2079
        %v2131 = vpack.c.bf16 %v2083, %v2080
        %v2132 = vpack.c.bf16 %v2084, %v2081
        %v2133 = vpack.c.bf16 %v2088, %v2085
        %v2134 = vpack.c.bf16 %v2089, %v2086
        %v2135 = vpack.c.bf16 %v2090, %v2087
        %v2136 = vpack.c.bf16 %v2094, %v2091
        %v2137 = vpack.c.bf16 %v2095, %v2092
        %v2138 = vpack.c.bf16 %v2096, %v2093
        %v2139 = vpack.c.bf16 %v2100, %v2097
        %v2140 = vpack.c.bf16 %v2101, %v2098
        %v2141 = vpack.c.bf16 %v2102, %v2099
        %v2142 = vpack.c.bf16 %v2106, %v2103
        %v2143 = vpack.c.bf16 %v2107, %v2104
        %v2144 = vpack.c.bf16 %v2108, %v2105
        %v2145 = vld [vmem:[%s3] sm:$0xff]
        %v2146 = vld [vmem:[%s3 + $0x8] sm:$0xff]
        %v2147 = vld [vmem:[%s3 + $0x10] sm:$0xff]
        %v2148 = vld [vmem:[%s3 + $0x18] sm:$0xff]
        %v2149 = vld [vmem:[%s3 + $0x20] sm:$0xff]
        %v2150 = vld [vmem:[%s3 + $0x28] sm:$0xff]
        %v2151 = vld [vmem:[%s3 + $0x30] sm:$0xff]
        %v2152 = vld [vmem:[%s3 + $0x38] sm:$0xff]
        %v2153 = vld [vmem:[%s3 + $0x40] sm:$0xff]
        %v2154 = vld [vmem:[%s3 + $0x48] sm:$0xff]
        %v2155 = vld [vmem:[%s3 + $0x50] sm:$0xff]
        %v2156 = vld [vmem:[%s3 + $0x58] sm:$0xff]
        %v2157 = vld [vmem:[%s3 + $0x60] sm:$0xff]
        %v2158 = vld [vmem:[%s3 + $0x68] sm:$0xff]
        %v2159 = vld [vmem:[%s3 + $0x70] sm:$0xff]
        %v2160 = vld [vmem:[%s3 + $0x78] sm:$0xff]
        %v2161 = vld [vmem:[%s3 + $0x80] sm:$0xff]
        %v2162 = vld [vmem:[%s3 + $0x88] sm:$0xff]
        %v2163 = vld [vmem:[%s3 + $0x90] sm:$0xff]
        %v2164 = vld [vmem:[%s3 + $0x98] sm:$0xff]
        %v2165 = vld [vmem:[%s3 + $0xa0] sm:$0xff]
        %v2166 = vld [vmem:[%s3 + $0xa8] sm:$0xff]
        %v2167 = vld [vmem:[%s3 + $0xb0] sm:$0xff]
        %v2168 = vld [vmem:[%s3 + $0xb8] sm:$0xff]
        %v2169 = vld [vmem:[%s3 + $0xc0] sm:$0xff]
        %v2170 = vld [vmem:[%s3 + $0xc8] sm:$0xff]
        %v2171 = vld [vmem:[%s3 + $0xd0] sm:$0xff]
        %v2172 = vld [vmem:[%s3 + $0xd8] sm:$0xff]
        %v2173 = vld [vmem:[%s3 + $0xe0] sm:$0xff]
        %v2174 = vld [vmem:[%s3 + $0xe8] sm:$0xff]
        %v2175 = vld [vmem:[%s3 + $0xf0] sm:$0xff]
        %v2176 = vld [vmem:[%s3 + $0xf8] sm:$0xff]
        %v2177 = vld [vmem:[%s3 + $0x100] sm:$0xff]
        %v2178 = vld [vmem:[%s3 + $0x108] sm:$0xff]
        %v2179 = vld [vmem:[%s3 + $0x110] sm:$0xff]
        %v2180 = vld [vmem:[%s3 + $0x118] sm:$0xff]
        %v2181 = vld [vmem:[%s3 + $0x120] sm:$0xff]
        %v2182 = vld [vmem:[%s3 + $0x128] sm:$0xff]
        %v2183 = vld [vmem:[%s3 + $0x130] sm:$0xff]
        %v2184 = vld [vmem:[%s3 + $0x138] sm:$0xff]
        %v2185 = vld [vmem:[%s3 + $0x140] sm:$0xff]
        %v2186 = vld [vmem:[%s3 + $0x148] sm:$0xff]
        %v2187 = vld [vmem:[%s3 + $0x150] sm:$0xff]
        %v2188 = vld [vmem:[%s3 + $0x158] sm:$0xff]
        %v2189 = vld [vmem:[%s3 + $0x160] sm:$0xff]
        %v2190 = vld [vmem:[%s3 + $0x168] sm:$0xff]
        %v2191 = vld [vmem:[%s3 + $0x170] sm:$0xff]
        %v2192 = vld [vmem:[%s3 + $0x178] sm:$0xff]
        %v2241 = vunpack.c.l.b16 %v2145
        %v2242 = vunpack.c.h.b16 %v2145
        %v2243 = vunpack.c.l.b16 %v2146
        %v2244 = vunpack.c.h.b16 %v2146
        %v2245 = vunpack.c.l.b16 %v2147
        %v2246 = vunpack.c.h.b16 %v2147
        %v2247 = vunpack.c.l.b16 %v2148
        %v2248 = vunpack.c.h.b16 %v2148
        %v2249 = vunpack.c.l.b16 %v2149
        %v2250 = vunpack.c.h.b16 %v2149
        %v2251 = vunpack.c.l.b16 %v2150
        %v2252 = vunpack.c.h.b16 %v2150
        %v2253 = vunpack.c.l.b16 %v2151
        %v2254 = vunpack.c.h.b16 %v2151
        %v2255 = vunpack.c.l.b16 %v2152
        %v2256 = vunpack.c.h.b16 %v2152
        %v2257 = vunpack.c.l.b16 %v2153
        %v2258 = vunpack.c.h.b16 %v2153
        %v2259 = vunpack.c.l.b16 %v2154
        %v2260 = vunpack.c.h.b16 %v2154
        %v2261 = vunpack.c.l.b16 %v2155
        %v2262 = vunpack.c.h.b16 %v2155
        %v2263 = vunpack.c.l.b16 %v2156
        %v2264 = vunpack.c.h.b16 %v2156
        %v2265 = vunpack.c.l.b16 %v2157
        %v2266 = vunpack.c.h.b16 %v2157
        %v2267 = vunpack.c.l.b16 %v2158
        %v2268 = vunpack.c.h.b16 %v2158
        %v2269 = vunpack.c.l.b16 %v2159
        %v2270 = vunpack.c.h.b16 %v2159
        %v2271 = vunpack.c.l.b16 %v2160
        %v2272 = vunpack.c.h.b16 %v2160
        %v2273 = vunpack.c.l.b16 %v2161
        %v2274 = vunpack.c.h.b16 %v2161
        %v2275 = vunpack.c.l.b16 %v2162
        %v2276 = vunpack.c.h.b16 %v2162
        %v2277 = vunpack.c.l.b16 %v2163
        %v2278 = vunpack.c.h.b16 %v2163
        %v2279 = vunpack.c.l.b16 %v2164
        %v2280 = vunpack.c.h.b16 %v2164
        %v2281 = vunpack.c.l.b16 %v2165
        %v2282 = vunpack.c.h.b16 %v2165
        %v2283 = vunpack.c.l.b16 %v2166
        %v2284 = vunpack.c.h.b16 %v2166
        %v2285 = vunpack.c.l.b16 %v2167
        %v2286 = vunpack.c.h.b16 %v2167
        %v2287 = vunpack.c.l.b16 %v2168
        %v2288 = vunpack.c.h.b16 %v2168
        %v2289 = vunpack.c.l.b16 %v2169
        %v2290 = vunpack.c.h.b16 %v2169
        %v2291 = vunpack.c.l.b16 %v2170
        %v2292 = vunpack.c.h.b16 %v2170
        %v2293 = vunpack.c.l.b16 %v2171
        %v2294 = vunpack.c.h.b16 %v2171
        %v2295 = vunpack.c.l.b16 %v2172
        %v2296 = vunpack.c.h.b16 %v2172
        %v2297 = vunpack.c.l.b16 %v2173
        %v2298 = vunpack.c.h.b16 %v2173
        %v2299 = vunpack.c.l.b16 %v2174
        %v2300 = vunpack.c.h.b16 %v2174
        %v2301 = vunpack.c.l.b16 %v2175
        %v2302 = vunpack.c.h.b16 %v2175
        %v2303 = vunpack.c.l.b16 %v2176
        %v2304 = vunpack.c.h.b16 %v2176
        %v2305 = vunpack.c.l.b16 %v2177
        %v2306 = vunpack.c.h.b16 %v2177
        %v2307 = vunpack.c.l.b16 %v2178
        %v2308 = vunpack.c.h.b16 %v2178
        %v2309 = vunpack.c.l.b16 %v2179
        %v2310 = vunpack.c.h.b16 %v2179
        %v2311 = vunpack.c.l.b16 %v2180
        %v2312 = vunpack.c.h.b16 %v2180
        %v2313 = vunpack.c.l.b16 %v2181
        %v2314 = vunpack.c.h.b16 %v2181
        %v2315 = vunpack.c.l.b16 %v2182
        %v2316 = vunpack.c.h.b16 %v2182
        %v2317 = vunpack.c.l.b16 %v2183
        %v2318 = vunpack.c.h.b16 %v2183
        %v2319 = vunpack.c.l.b16 %v2184
        %v2320 = vunpack.c.h.b16 %v2184
        %v2321 = vunpack.c.l.b16 %v2185
        %v2322 = vunpack.c.h.b16 %v2185
        %v2323 = vunpack.c.l.b16 %v2186
        %v2324 = vunpack.c.h.b16 %v2186
        %v2325 = vunpack.c.l.b16 %v2187
        %v2326 = vunpack.c.h.b16 %v2187
        %v2327 = vunpack.c.l.b16 %v2188
        %v2328 = vunpack.c.h.b16 %v2188
        %v2329 = vunpack.c.l.b16 %v2189
        %v2330 = vunpack.c.h.b16 %v2189
        %v2331 = vunpack.c.l.b16 %v2190
        %v2332 = vunpack.c.h.b16 %v2190
        %v2333 = vunpack.c.l.b16 %v2191
        %v2334 = vunpack.c.h.b16 %v2191
        %v2335 = vunpack.c.l.b16 %v2192
        %v2336 = vunpack.c.h.b16 %v2192
        %v2337 = vpack.c.b16 %v2243, %v2241
        %v2338 = vpack.c.b16 %v2244, %v2242
        %v2339 = vpack.c.b16 %v2247, %v2245
        %v2340 = vpack.c.b16 %v2248, %v2246
        %v2341 = vpack.c.b16 %v2251, %v2249
        %v2342 = vpack.c.b16 %v2252, %v2250
        %v2343 = vpack.c.b16 %v2255, %v2253
        %v2344 = vpack.c.b16 %v2256, %v2254
        %v2345 = vpack.c.b16 %v2259, %v2257
        %v2346 = vpack.c.b16 %v2260, %v2258
        %v2347 = vpack.c.b16 %v2263, %v2261
        %v2348 = vpack.c.b16 %v2264, %v2262
        %v2349 = vpack.c.b16 %v2267, %v2265
        %v2350 = vpack.c.b16 %v2268, %v2266
        %v2351 = vpack.c.b16 %v2271, %v2269
        %v2352 = vpack.c.b16 %v2272, %v2270
        %v2353 = vpack.c.b16 %v2275, %v2273
        %v2354 = vpack.c.b16 %v2276, %v2274
        %v2355 = vpack.c.b16 %v2279, %v2277
        %v2356 = vpack.c.b16 %v2280, %v2278
        %v2357 = vpack.c.b16 %v2283, %v2281
        %v2358 = vpack.c.b16 %v2284, %v2282
        %v2359 = vpack.c.b16 %v2287, %v2285
        %v2360 = vpack.c.b16 %v2288, %v2286
        %v2361 = vpack.c.b16 %v2291, %v2289
        %v2362 = vpack.c.b16 %v2292, %v2290
        %v2363 = vpack.c.b16 %v2295, %v2293
        %v2364 = vpack.c.b16 %v2296, %v2294
        %v2365 = vpack.c.b16 %v2299, %v2297
        %v2366 = vpack.c.b16 %v2300, %v2298
        %v2367 = vpack.c.b16 %v2303, %v2301
        %v2368 = vpack.c.b16 %v2304, %v2302
        %v2369 = vpack.c.b16 %v2307, %v2305
        %v2370 = vpack.c.b16 %v2308, %v2306
        %v2371 = vpack.c.b16 %v2311, %v2309
        %v2372 = vpack.c.b16 %v2312, %v2310
        %v2373 = vpack.c.b16 %v2315, %v2313
        %v2374 = vpack.c.b16 %v2316, %v2314
        %v2375 = vpack.c.b16 %v2319, %v2317
        %v2376 = vpack.c.b16 %v2320, %v2318
        %v2377 = vpack.c.b16 %v2323, %v2321
        %v2378 = vpack.c.b16 %v2324, %v2322
        %v2379 = vpack.c.b16 %v2327, %v2325
        %v2380 = vpack.c.b16 %v2328, %v2326
        %v2381 = vpack.c.b16 %v2331, %v2329
        %v2382 = vpack.c.b16 %v2332, %v2330
        %v2383 = vpack.c.b16 %v2335, %v2333
        %v2384 = vpack.c.b16 %v2336, %v2334
        %2433 = vmatprep.subr.bf16.mxu0 %v2352
        %2434 = vmatpush1.bf16.msra.mxu0 %v2351
        %2435 = vmatprep.subr.bf16.mxu0 %v2350
        %2436 = vmatpush1.bf16.msra.mxu0 %v2349
        %2437 = vmatprep.subr.bf16.mxu0 %v2348
        %2438 = vmatpush1.bf16.msra.mxu0 %v2347
        %2439 = vmatprep.subr.bf16.mxu0 %v2346
        %2440 = vmatpush1.bf16.msra.mxu0 %v2345
        %2441 = vmatprep.subr.bf16.mxu0 %v2344
        %2442 = vmatpush1.bf16.msra.mxu0 %v2343
        %2443 = vmatprep.subr.bf16.mxu0 %v2342
        %2444 = vmatpush1.bf16.msra.mxu0 %v2341
        %2445 = vmatprep.subr.bf16.mxu0 %v2340
        %2446 = vmatpush1.bf16.msra.mxu0 %v2339
        %2447 = vmatprep.subr.bf16.mxu0 %v2338
        %2448 = vmatpush1.bf16.msra.mxu0 %v2337
        %2449 = vmatprep.subr.bf16.mxu0 %v2368
        %2450 = vmatpush2.bf16.msra.mxu0 %v2367
        %2451 = vmatprep.subr.bf16.mxu0 %v2366
        %2452 = vmatpush2.bf16.msra.mxu0 %v2365
        %2453 = vmatprep.subr.bf16.mxu0 %v2364
        %2454 = vmatpush2.bf16.msra.mxu0 %v2363
        %2455 = vmatprep.subr.bf16.mxu0 %v2362
        %2456 = vmatpush2.bf16.msra.mxu0 %v2361
        %2457 = vmatprep.subr.bf16.mxu0 %v2360
        %2458 = vmatpush2.bf16.msra.mxu0 %v2359
        %2459 = vmatprep.subr.bf16.mxu0 %v2358
        %2460 = vmatpush2.bf16.msra.mxu0 %v2357
        %2461 = vmatprep.subr.bf16.mxu0 %v2356
        %2462 = vmatpush2.bf16.msra.mxu0 %v2355
        %2463 = vmatprep.subr.bf16.mxu0 %v2354
        %2464 = vmatpush2.bf16.msra.mxu0 %v2353
        %2465 = vmatprep.mubr.bf16.mxu0 %v2110
        %2466 = vmatmul.mubr.bf16.gmra.mxu0 %v2109
        %v2467 = vpop.f32.mrf.mxu0
        %v2468 = vadd.f32 0.0, %v2467
        %v2469 = vpop.f32.mrf.mxu0
        %v2470 = vadd.f32 0.0, %v2469
        %v2471 = vpop.f32.mrf.mxu0
        %v2472 = vadd.f32 0.0, %v2471
        %v2473 = vpop.f32.mrf.mxu0
        %v2474 = vadd.f32 0.0, %v2473
        %2475 = vmatprep.mubr.bf16.mxu0 %v2113
        %2476 = vmatmul.mubr.bf16.gmra.mxu0 %v2112
        %v2477 = vpop.f32.mrf.mxu0
        %v2478 = vadd.f32 0.0, %v2477
        %v2479 = vpop.f32.mrf.mxu0
        %v2480 = vadd.f32 0.0, %v2479
        %v2481 = vpop.f32.mrf.mxu0
        %v2482 = vadd.f32 0.0, %v2481
        %v2483 = vpop.f32.mrf.mxu0
        %v2484 = vadd.f32 0.0, %v2483
        %2485 = vmatprep.mubr.bf16.mxu0 %v2116
        %2486 = vmatmul.mubr.bf16.gmra.mxu0 %v2115
        %v2487 = vpop.f32.mrf.mxu0
        %v2488 = vadd.f32 0.0, %v2487
        %v2489 = vpop.f32.mrf.mxu0
        %v2490 = vadd.f32 0.0, %v2489
        %v2491 = vpop.f32.mrf.mxu0
        %v2492 = vadd.f32 0.0, %v2491
        %v2493 = vpop.f32.mrf.mxu0
        %v2494 = vadd.f32 0.0, %v2493
        %2495 = vmatprep.mubr.bf16.mxu0 %v2119
        %2496 = vmatmul.mubr.bf16.gmra.mxu0 %v2118
        %v2497 = vpop.f32.mrf.mxu0
        %v2498 = vadd.f32 0.0, %v2497
        %v2499 = vpop.f32.mrf.mxu0
        %v2500 = vadd.f32 0.0, %v2499
        %v2501 = vpop.f32.mrf.mxu0
        %v2502 = vadd.f32 0.0, %v2501
        %v2503 = vpop.f32.mrf.mxu0
        %v2504 = vadd.f32 0.0, %v2503
        %2505 = vmatprep.mubr.bf16.mxu0 %v2122
        %2506 = vmatmul.mubr.bf16.gmra.mxu0 %v2121
        %v2507 = vpop.f32.mrf.mxu0
        %v2508 = vadd.f32 0.0, %v2507
        %v2509 = vpop.f32.mrf.mxu0
        %v2510 = vadd.f32 0.0, %v2509
        %v2511 = vpop.f32.mrf.mxu0
        %v2512 = vadd.f32 0.0, %v2511
        %v2513 = vpop.f32.mrf.mxu0
        %v2514 = vadd.f32 0.0, %v2513
        %2515 = vmatprep.mubr.bf16.mxu0 %v2125
        %2516 = vmatmul.mubr.bf16.gmra.mxu0 %v2124
        %v2517 = vpop.f32.mrf.mxu0
        %v2518 = vadd.f32 0.0, %v2517
        %v2519 = vpop.f32.mrf.mxu0
        %v2520 = vadd.f32 0.0, %v2519
        %v2521 = vpop.f32.mrf.mxu0
        %v2522 = vadd.f32 0.0, %v2521
        %v2523 = vpop.f32.mrf.mxu0
        %v2524 = vadd.f32 0.0, %v2523
        %2525 = vmatprep.mubr.bf16.mxu0 %v2128
        %2526 = vmatmul.mubr.bf16.gmra.mxu0 %v2127
        %v2527 = vpop.f32.mrf.mxu0
        %v2528 = vadd.f32 0.0, %v2527
        %v2529 = vpop.f32.mrf.mxu0
        %v2530 = vadd.f32 0.0, %v2529
        %v2531 = vpop.f32.mrf.mxu0
        %v2532 = vadd.f32 0.0, %v2531
        %v2533 = vpop.f32.mrf.mxu0
        %v2534 = vadd.f32 0.0, %v2533
        %2535 = vmatprep.mubr.bf16.mxu0 %v2131
        %2536 = vmatmul.mubr.bf16.gmra.mxu0 %v2130
        %v2537 = vpop.f32.mrf.mxu0
        %v2538 = vadd.f32 0.0, %v2537
        %v2539 = vpop.f32.mrf.mxu0
        %v2540 = vadd.f32 0.0, %v2539
        %v2541 = vpop.f32.mrf.mxu0
        %v2542 = vadd.f32 0.0, %v2541
        %v2543 = vpop.f32.mrf.mxu0
        %v2544 = vadd.f32 0.0, %v2543
        %2545 = vmatprep.mubr.bf16.mxu0 %v2134
        %2546 = vmatmul.mubr.bf16.gmra.mxu0 %v2133
        %v2547 = vpop.f32.mrf.mxu0
        %v2548 = vadd.f32 0.0, %v2547
        %v2549 = vpop.f32.mrf.mxu0
        %v2550 = vadd.f32 0.0, %v2549
        %v2551 = vpop.f32.mrf.mxu0
        %v2552 = vadd.f32 0.0, %v2551
        %v2553 = vpop.f32.mrf.mxu0
        %v2554 = vadd.f32 0.0, %v2553
        %2555 = vmatprep.mubr.bf16.mxu0 %v2137
        %2556 = vmatmul.mubr.bf16.gmra.mxu0 %v2136
        %v2557 = vpop.f32.mrf.mxu0
        %v2558 = vadd.f32 0.0, %v2557
        %v2559 = vpop.f32.mrf.mxu0
        %v2560 = vadd.f32 0.0, %v2559
        %v2561 = vpop.f32.mrf.mxu0
        %v2562 = vadd.f32 0.0, %v2561
        %v2563 = vpop.f32.mrf.mxu0
        %v2564 = vadd.f32 0.0, %v2563
        %2565 = vmatprep.mubr.bf16.mxu0 %v2140
        %2566 = vmatmul.mubr.bf16.gmra.mxu0 %v2139
        %v2567 = vpop.f32.mrf.mxu0
        %v2568 = vadd.f32 0.0, %v2567
        %v2569 = vpop.f32.mrf.mxu0
        %v2570 = vadd.f32 0.0, %v2569
        %v2571 = vpop.f32.mrf.mxu0
        %v2572 = vadd.f32 0.0, %v2571
        %v2573 = vpop.f32.mrf.mxu0
        %v2574 = vadd.f32 0.0, %v2573
        %2575 = vmatprep.mubr.bf16.mxu0 %v2143
        %2576 = vmatmul.mubr.bf16.gmra.mxu0 %v2142
        %v2577 = vpop.f32.mrf.mxu0
        %v2578 = vadd.f32 0.0, %v2577
        %v2579 = vpop.f32.mrf.mxu0
        %v2580 = vadd.f32 0.0, %v2579
        %v2581 = vpop.f32.mrf.mxu0
        %v2582 = vadd.f32 0.0, %v2581
        %v2583 = vpop.f32.mrf.mxu0
        %v2584 = vadd.f32 0.0, %v2583
        %2585 = vdwg.mxu0
        %2586 = vmatprep.subr.bf16.mxu0 %v2384
        %2587 = vmatpush1.bf16.msra.mxu0 %v2383
        %2588 = vmatprep.subr.bf16.mxu0 %v2382
        %2589 = vmatpush1.bf16.msra.mxu0 %v2381
        %2590 = vmatprep.subr.bf16.mxu0 %v2380
        %2591 = vmatpush1.bf16.msra.mxu0 %v2379
        %2592 = vmatprep.subr.bf16.mxu0 %v2378
        %2593 = vmatpush1.bf16.msra.mxu0 %v2377
        %2594 = vmatprep.subr.bf16.mxu0 %v2376
        %2595 = vmatpush1.bf16.msra.mxu0 %v2375
        %2596 = vmatprep.subr.bf16.mxu0 %v2374
        %2597 = vmatpush1.bf16.msra.mxu0 %v2373
        %2598 = vmatprep.subr.bf16.mxu0 %v2372
        %2599 = vmatpush1.bf16.msra.mxu0 %v2371
        %2600 = vmatprep.subr.bf16.mxu0 %v2370
        %2601 = vmatpush1.bf16.msra.mxu0 %v2369
        %2602 = vmatprep.subr.bf16.mxu0 0
        %2603 = vmatpush2.bf16.msra.mxu0 0
        %2604 = vmatprep.subr.bf16.mxu0 0
        %2605 = vmatpush2.bf16.msra.mxu0 0
        %2606 = vmatprep.subr.bf16.mxu0 0
        %2607 = vmatpush2.bf16.msra.mxu0 0
        %2608 = vmatprep.subr.bf16.mxu0 0
        %2609 = vmatpush2.bf16.msra.mxu0 0
        %2610 = vmatprep.subr.bf16.mxu0 0
        %2611 = vmatpush2.bf16.msra.mxu0 0
        %2612 = vmatprep.subr.bf16.mxu0 0
        %2613 = vmatpush2.bf16.msra.mxu0 0
        %2614 = vmatprep.subr.bf16.mxu0 0
        %2615 = vmatpush2.bf16.msra.mxu0 0
        %2616 = vmatprep.subr.bf16.mxu0 0
        %2617 = vmatpush2.bf16.msra.mxu0 0
        %2618 = vmatprep.mubr.bf16.mxu0 0
        %2619 = vmatmul.mubr.bf16.gmra.mxu0 %v2111
        %v2620 = vpop.f32.mrf.mxu0
        %v2621 = vadd.f32 %v2468, %v2620
        %v2622 = vpop.f32.mrf.mxu0
        %v2623 = vadd.f32 %v2470, %v2622
        %v2624 = vpop.f32.mrf.mxu0
        %v2625 = vadd.f32 %v2472, %v2624
        %v2626 = vpop.f32.mrf.mxu0
        %v2627 = vadd.f32 %v2474, %v2626
        %2628 = vmatprep.mubr.bf16.mxu0 0
        %2629 = vmatmul.mubr.bf16.gmra.mxu0 %v2114
        %v2630 = vpop.f32.mrf.mxu0
        %v2631 = vadd.f32 %v2478, %v2630
        %v2632 = vpop.f32.mrf.mxu0
        %v2633 = vadd.f32 %v2480, %v2632
        %v2634 = vpop.f32.mrf.mxu0
        %v2635 = vadd.f32 %v2482, %v2634
        %v2636 = vpop.f32.mrf.mxu0
        %v2637 = vadd.f32 %v2484, %v2636
        %2638 = vmatprep.mubr.bf16.mxu0 0
        %2639 = vmatmul.mubr.bf16.gmra.mxu0 %v2117
        %v2640 = vpop.f32.mrf.mxu0
        %v2641 = vadd.f32 %v2488, %v2640
        %v2642 = vpop.f32.mrf.mxu0
        %v2643 = vadd.f32 %v2490, %v2642
        %v2644 = vpop.f32.mrf.mxu0
        %v2645 = vadd.f32 %v2492, %v2644
        %v2646 = vpop.f32.mrf.mxu0
        %v2647 = vadd.f32 %v2494, %v2646
        %2648 = vmatprep.mubr.bf16.mxu0 0
        %2649 = vmatmul.mubr.bf16.gmra.mxu0 %v2120
        %v2650 = vpop.f32.mrf.mxu0
        %v2651 = vadd.f32 %v2498, %v2650
        %v2652 = vpop.f32.mrf.mxu0
        %v2653 = vadd.f32 %v2500, %v2652
        %v2654 = vpop.f32.mrf.mxu0
        %v2655 = vadd.f32 %v2502, %v2654
        %v2656 = vpop.f32.mrf.mxu0
        %v2657 = vadd.f32 %v2504, %v2656
        %2658 = vmatprep.mubr.bf16.mxu0 0
        %2659 = vmatmul.mubr.bf16.gmra.mxu0 %v2123
        %v2660 = vpop.f32.mrf.mxu0
        %v2661 = vadd.f32 %v2508, %v2660
        %v2662 = vpop.f32.mrf.mxu0
        %v2663 = vadd.f32 %v2510, %v2662
        %v2664 = vpop.f32.mrf.mxu0
        %v2665 = vadd.f32 %v2512, %v2664
        %v2666 = vpop.f32.mrf.mxu0
        %v2667 = vadd.f32 %v2514, %v2666
        %2668 = vmatprep.mubr.bf16.mxu0 0
        %2669 = vmatmul.mubr.bf16.gmra.mxu0 %v2126
        %v2670 = vpop.f32.mrf.mxu0
        %v2671 = vadd.f32 %v2518, %v2670
        %v2672 = vpop.f32.mrf.mxu0
        %v2673 = vadd.f32 %v2520, %v2672
        %v2674 = vpop.f32.mrf.mxu0
        %v2675 = vadd.f32 %v2522, %v2674
        %v2676 = vpop.f32.mrf.mxu0
        %v2677 = vadd.f32 %v2524, %v2676
        %2678 = vmatprep.mubr.bf16.mxu0 0
        %2679 = vmatmul.mubr.bf16.gmra.mxu0 %v2129
        %v2680 = vpop.f32.mrf.mxu0
        %v2681 = vadd.f32 %v2528, %v2680
        %v2682 = vpop.f32.mrf.mxu0
        %v2683 = vadd.f32 %v2530, %v2682
        %v2684 = vpop.f32.mrf.mxu0
        %v2685 = vadd.f32 %v2532, %v2684
        %v2686 = vpop.f32.mrf.mxu0
        %v2687 = vadd.f32 %v2534, %v2686
        %2688 = vmatprep.mubr.bf16.mxu0 0
        %2689 = vmatmul.mubr.bf16.gmra.mxu0 %v2132
        %v2690 = vpop.f32.mrf.mxu0
        %v2691 = vadd.f32 %v2538, %v2690
        %v2692 = vpop.f32.mrf.mxu0
        %v2693 = vadd.f32 %v2540, %v2692
        %v2694 = vpop.f32.mrf.mxu0
        %v2695 = vadd.f32 %v2542, %v2694
        %v2696 = vpop.f32.mrf.mxu0
        %v2697 = vadd.f32 %v2544, %v2696
        %2698 = vmatprep.mubr.bf16.mxu0 0
        %2699 = vmatmul.mubr.bf16.gmra.mxu0 %v2135
        %v2700 = vpop.f32.mrf.mxu0
        %v2701 = vadd.f32 %v2548, %v2700
        %v2702 = vpop.f32.mrf.mxu0
        %v2703 = vadd.f32 %v2550, %v2702
        %v2704 = vpop.f32.mrf.mxu0
        %v2705 = vadd.f32 %v2552, %v2704
        %v2706 = vpop.f32.mrf.mxu0
        %v2707 = vadd.f32 %v2554, %v2706
        %2708 = vmatprep.mubr.bf16.mxu0 0
        %2709 = vmatmul.mubr.bf16.gmra.mxu0 %v2138
        %v2710 = vpop.f32.mrf.mxu0
        %v2711 = vadd.f32 %v2558, %v2710
        %v2712 = vpop.f32.mrf.mxu0
        %v2713 = vadd.f32 %v2560, %v2712
        %v2714 = vpop.f32.mrf.mxu0
        %v2715 = vadd.f32 %v2562, %v2714
        %v2716 = vpop.f32.mrf.mxu0
        %v2717 = vadd.f32 %v2564, %v2716
        %2718 = vmatprep.mubr.bf16.mxu0 0
        %2719 = vmatmul.mubr.bf16.gmra.mxu0 %v2141
        %v2720 = vpop.f32.mrf.mxu0
        %v2721 = vadd.f32 %v2568, %v2720
        %v2722 = vpop.f32.mrf.mxu0
        %v2723 = vadd.f32 %v2570, %v2722
        %v2724 = vpop.f32.mrf.mxu0
        %v2725 = vadd.f32 %v2572, %v2724
        %v2726 = vpop.f32.mrf.mxu0
        %v2727 = vadd.f32 %v2574, %v2726
        %2728 = vmatprep.mubr.bf16.mxu0 0
        %2729 = vmatmul.mubr.bf16.gmra.mxu0 %v2144
        %v2730 = vpop.f32.mrf.mxu0
        %v2731 = vadd.f32 %v2578, %v2730
        %v2732 = vpop.f32.mrf.mxu0
        %v2733 = vadd.f32 %v2580, %v2732
        %v2734 = vpop.f32.mrf.mxu0
        %v2735 = vadd.f32 %v2582, %v2734
        %v2736 = vpop.f32.mrf.mxu0
        %v2737 = vadd.f32 %v2584, %v2736
        %2738 = vdwg.mxu0
        %s2739 = scalar_lea.vmem %s3, 384
        %v2740 = vld [vmem:[%s2739] sm:$0xff]
        %v2741 = vld [vmem:[%s2739 + $0x8] sm:$0xff]
        %v2742 = vld [vmem:[%s2739 + $0x10] sm:$0xff]
        %v2743 = vld [vmem:[%s2739 + $0x18] sm:$0xff]
        %v2744 = vld [vmem:[%s2739 + $0x20] sm:$0xff]
        %v2745 = vld [vmem:[%s2739 + $0x28] sm:$0xff]
        %v2746 = vld [vmem:[%s2739 + $0x30] sm:$0xff]
        %v2747 = vld [vmem:[%s2739 + $0x38] sm:$0xff]
        %v2748 = vld [vmem:[%s2739 + $0x40] sm:$0xff]
        %v2749 = vld [vmem:[%s2739 + $0x48] sm:$0xff]
        %v2750 = vld [vmem:[%s2739 + $0x50] sm:$0xff]
        %v2751 = vld [vmem:[%s2739 + $0x58] sm:$0xff]
        %v2752 = vld [vmem:[%s2739 + $0x60] sm:$0xff]
        %v2753 = vld [vmem:[%s2739 + $0x68] sm:$0xff]
        %v2754 = vld [vmem:[%s2739 + $0x70] sm:$0xff]
        %v2755 = vld [vmem:[%s2739 + $0x78] sm:$0xff]
        %v2756 = vld [vmem:[%s2739 + $0x80] sm:$0xff]
        %v2757 = vld [vmem:[%s2739 + $0x88] sm:$0xff]
        %v2758 = vld [vmem:[%s2739 + $0x90] sm:$0xff]
        %v2759 = vld [vmem:[%s2739 + $0x98] sm:$0xff]
        %v2760 = vld [vmem:[%s2739 + $0xa0] sm:$0xff]
        %v2761 = vld [vmem:[%s2739 + $0xa8] sm:$0xff]
        %v2762 = vld [vmem:[%s2739 + $0xb0] sm:$0xff]
        %v2763 = vld [vmem:[%s2739 + $0xb8] sm:$0xff]
        %v2764 = vld [vmem:[%s2739 + $0xc0] sm:$0xff]
        %v2765 = vld [vmem:[%s2739 + $0xc8] sm:$0xff]
        %v2766 = vld [vmem:[%s2739 + $0xd0] sm:$0xff]
        %v2767 = vld [vmem:[%s2739 + $0xd8] sm:$0xff]
        %v2768 = vld [vmem:[%s2739 + $0xe0] sm:$0xff]
        %v2769 = vld [vmem:[%s2739 + $0xe8] sm:$0xff]
        %v2770 = vld [vmem:[%s2739 + $0xf0] sm:$0xff]
        %v2771 = vld [vmem:[%s2739 + $0xf8] sm:$0xff]
        %v2772 = vld [vmem:[%s2739 + $0x100] sm:$0xff]
        %v2773 = vld [vmem:[%s2739 + $0x108] sm:$0xff]
        %v2774 = vld [vmem:[%s2739 + $0x110] sm:$0xff]
        %v2775 = vld [vmem:[%s2739 + $0x118] sm:$0xff]
        %v2776 = vld [vmem:[%s2739 + $0x120] sm:$0xff]
        %v2777 = vld [vmem:[%s2739 + $0x128] sm:$0xff]
        %v2778 = vld [vmem:[%s2739 + $0x130] sm:$0xff]
        %v2779 = vld [vmem:[%s2739 + $0x138] sm:$0xff]
        %v2780 = vld [vmem:[%s2739 + $0x140] sm:$0xff]
        %v2781 = vld [vmem:[%s2739 + $0x148] sm:$0xff]
        %v2782 = vld [vmem:[%s2739 + $0x150] sm:$0xff]
        %v2783 = vld [vmem:[%s2739 + $0x158] sm:$0xff]
        %v2784 = vld [vmem:[%s2739 + $0x160] sm:$0xff]
        %v2785 = vld [vmem:[%s2739 + $0x168] sm:$0xff]
        %v2786 = vld [vmem:[%s2739 + $0x170] sm:$0xff]
        %v2787 = vld [vmem:[%s2739 + $0x178] sm:$0xff]
        %v2836 = vunpack.c.l.b16 %v2740
        %v2837 = vunpack.c.h.b16 %v2740
        %v2838 = vunpack.c.l.b16 %v2741
        %v2839 = vunpack.c.h.b16 %v2741
        %v2840 = vunpack.c.l.b16 %v2742
        %v2841 = vunpack.c.h.b16 %v2742
        %v2842 = vunpack.c.l.b16 %v2743
        %v2843 = vunpack.c.h.b16 %v2743
        %v2844 = vunpack.c.l.b16 %v2744
        %v2845 = vunpack.c.h.b16 %v2744
        %v2846 = vunpack.c.l.b16 %v2745
        %v2847 = vunpack.c.h.b16 %v2745
        %v2848 = vunpack.c.l.b16 %v2746
        %v2849 = vunpack.c.h.b16 %v2746
        %v2850 = vunpack.c.l.b16 %v2747
        %v2851 = vunpack.c.h.b16 %v2747
        %v2852 = vunpack.c.l.b16 %v2748
        %v2853 = vunpack.c.h.b16 %v2748
        %v2854 = vunpack.c.l.b16 %v2749
        %v2855 = vunpack.c.h.b16 %v2749
        %v2856 = vunpack.c.l.b16 %v2750
        %v2857 = vunpack.c.h.b16 %v2750
        %v2858 = vunpack.c.l.b16 %v2751
        %v2859 = vunpack.c.h.b16 %v2751
        %v2860 = vunpack.c.l.b16 %v2752
        %v2861 = vunpack.c.h.b16 %v2752
        %v2862 = vunpack.c.l.b16 %v2753
        %v2863 = vunpack.c.h.b16 %v2753
        %v2864 = vunpack.c.l.b16 %v2754
        %v2865 = vunpack.c.h.b16 %v2754
        %v2866 = vunpack.c.l.b16 %v2755
        %v2867 = vunpack.c.h.b16 %v2755
        %v2868 = vunpack.c.l.b16 %v2756
        %v2869 = vunpack.c.h.b16 %v2756
        %v2870 = vunpack.c.l.b16 %v2757
        %v2871 = vunpack.c.h.b16 %v2757
        %v2872 = vunpack.c.l.b16 %v2758
        %v2873 = vunpack.c.h.b16 %v2758
        %v2874 = vunpack.c.l.b16 %v2759
        %v2875 = vunpack.c.h.b16 %v2759
        %v2876 = vunpack.c.l.b16 %v2760
        %v2877 = vunpack.c.h.b16 %v2760
        %v2878 = vunpack.c.l.b16 %v2761
        %v2879 = vunpack.c.h.b16 %v2761
        %v2880 = vunpack.c.l.b16 %v2762
        %v2881 = vunpack.c.h.b16 %v2762
        %v2882 = vunpack.c.l.b16 %v2763
        %v2883 = vunpack.c.h.b16 %v2763
        %v2884 = vunpack.c.l.b16 %v2764
        %v2885 = vunpack.c.h.b16 %v2764
        %v2886 = vunpack.c.l.b16 %v2765
        %v2887 = vunpack.c.h.b16 %v2765
        %v2888 = vunpack.c.l.b16 %v2766
        %v2889 = vunpack.c.h.b16 %v2766
        %v2890 = vunpack.c.l.b16 %v2767
        %v2891 = vunpack.c.h.b16 %v2767
        %v2892 = vunpack.c.l.b16 %v2768
        %v2893 = vunpack.c.h.b16 %v2768
        %v2894 = vunpack.c.l.b16 %v2769
        %v2895 = vunpack.c.h.b16 %v2769
        %v2896 = vunpack.c.l.b16 %v2770
        %v2897 = vunpack.c.h.b16 %v2770
        %v2898 = vunpack.c.l.b16 %v2771
        %v2899 = vunpack.c.h.b16 %v2771
        %v2900 = vunpack.c.l.b16 %v2772
        %v2901 = vunpack.c.h.b16 %v2772
        %v2902 = vunpack.c.l.b16 %v2773
        %v2903 = vunpack.c.h.b16 %v2773
        %v2904 = vunpack.c.l.b16 %v2774
        %v2905 = vunpack.c.h.b16 %v2774
        %v2906 = vunpack.c.l.b16 %v2775
        %v2907 = vunpack.c.h.b16 %v2775
        %v2908 = vunpack.c.l.b16 %v2776
        %v2909 = vunpack.c.h.b16 %v2776
        %v2910 = vunpack.c.l.b16 %v2777
        %v2911 = vunpack.c.h.b16 %v2777
        %v2912 = vunpack.c.l.b16 %v2778
        %v2913 = vunpack.c.h.b16 %v2778
        %v2914 = vunpack.c.l.b16 %v2779
        %v2915 = vunpack.c.h.b16 %v2779
        %v2916 = vunpack.c.l.b16 %v2780
        %v2917 = vunpack.c.h.b16 %v2780
        %v2918 = vunpack.c.l.b16 %v2781
        %v2919 = vunpack.c.h.b16 %v2781
        %v2920 = vunpack.c.l.b16 %v2782
        %v2921 = vunpack.c.h.b16 %v2782
        %v2922 = vunpack.c.l.b16 %v2783
        %v2923 = vunpack.c.h.b16 %v2783
        %v2924 = vunpack.c.l.b16 %v2784
        %v2925 = vunpack.c.h.b16 %v2784
        %v2926 = vunpack.c.l.b16 %v2785
        %v2927 = vunpack.c.h.b16 %v2785
        %v2928 = vunpack.c.l.b16 %v2786
        %v2929 = vunpack.c.h.b16 %v2786
        %v2930 = vunpack.c.l.b16 %v2787
        %v2931 = vunpack.c.h.b16 %v2787
        %v2932 = vpack.c.b16 %v2838, %v2836
        %v2933 = vpack.c.b16 %v2839, %v2837
        %v2934 = vpack.c.b16 %v2842, %v2840
        %v2935 = vpack.c.b16 %v2843, %v2841
        %v2936 = vpack.c.b16 %v2846, %v2844
        %v2937 = vpack.c.b16 %v2847, %v2845
        %v2938 = vpack.c.b16 %v2850, %v2848
        %v2939 = vpack.c.b16 %v2851, %v2849
        %v2940 = vpack.c.b16 %v2854, %v2852
        %v2941 = vpack.c.b16 %v2855, %v2853
        %v2942 = vpack.c.b16 %v2858, %v2856
        %v2943 = vpack.c.b16 %v2859, %v2857
        %v2944 = vpack.c.b16 %v2862, %v2860
        %v2945 = vpack.c.b16 %v2863, %v2861
        %v2946 = vpack.c.b16 %v2866, %v2864
        %v2947 = vpack.c.b16 %v2867, %v2865
        %v2948 = vpack.c.b16 %v2870, %v2868
        %v2949 = vpack.c.b16 %v2871, %v2869
        %v2950 = vpack.c.b16 %v2874, %v2872
        %v2951 = vpack.c.b16 %v2875, %v2873
        %v2952 = vpack.c.b16 %v2878, %v2876
        %v2953 = vpack.c.b16 %v2879, %v2877
        %v2954 = vpack.c.b16 %v2882, %v2880
        %v2955 = vpack.c.b16 %v2883, %v2881
        %v2956 = vpack.c.b16 %v2886, %v2884
        %v2957 = vpack.c.b16 %v2887, %v2885
        %v2958 = vpack.c.b16 %v2890, %v2888
        %v2959 = vpack.c.b16 %v2891, %v2889
        %v2960 = vpack.c.b16 %v2894, %v2892
        %v2961 = vpack.c.b16 %v2895, %v2893
        %v2962 = vpack.c.b16 %v2898, %v2896
        %v2963 = vpack.c.b16 %v2899, %v2897
        %v2964 = vpack.c.b16 %v2902, %v2900
        %v2965 = vpack.c.b16 %v2903, %v2901
        %v2966 = vpack.c.b16 %v2906, %v2904
        %v2967 = vpack.c.b16 %v2907, %v2905
        %v2968 = vpack.c.b16 %v2910, %v2908
        %v2969 = vpack.c.b16 %v2911, %v2909
        %v2970 = vpack.c.b16 %v2914, %v2912
        %v2971 = vpack.c.b16 %v2915, %v2913
        %v2972 = vpack.c.b16 %v2918, %v2916
        %v2973 = vpack.c.b16 %v2919, %v2917
        %v2974 = vpack.c.b16 %v2922, %v2920
        %v2975 = vpack.c.b16 %v2923, %v2921
        %v2976 = vpack.c.b16 %v2926, %v2924
        %v2977 = vpack.c.b16 %v2927, %v2925
        %v2978 = vpack.c.b16 %v2930, %v2928
        %v2979 = vpack.c.b16 %v2931, %v2929
        %3028 = vmatprep.subr.bf16.mxu0 %v2947
        %3029 = vmatpush1.bf16.msra.mxu0 %v2946
        %3030 = vmatprep.subr.bf16.mxu0 %v2945
        %3031 = vmatpush1.bf16.msra.mxu0 %v2944
        %3032 = vmatprep.subr.bf16.mxu0 %v2943
        %3033 = vmatpush1.bf16.msra.mxu0 %v2942
        %3034 = vmatprep.subr.bf16.mxu0 %v2941
        %3035 = vmatpush1.bf16.msra.mxu0 %v2940
        %3036 = vmatprep.subr.bf16.mxu0 %v2939
        %3037 = vmatpush1.bf16.msra.mxu0 %v2938
        %3038 = vmatprep.subr.bf16.mxu0 %v2937
        %3039 = vmatpush1.bf16.msra.mxu0 %v2936
        %3040 = vmatprep.subr.bf16.mxu0 %v2935
        %3041 = vmatpush1.bf16.msra.mxu0 %v2934
        %3042 = vmatprep.subr.bf16.mxu0 %v2933
        %3043 = vmatpush1.bf16.msra.mxu0 %v2932
        %3044 = vmatprep.subr.bf16.mxu0 %v2963
        %3045 = vmatpush2.bf16.msra.mxu0 %v2962
        %3046 = vmatprep.subr.bf16.mxu0 %v2961
        %3047 = vmatpush2.bf16.msra.mxu0 %v2960
        %3048 = vmatprep.subr.bf16.mxu0 %v2959
        %3049 = vmatpush2.bf16.msra.mxu0 %v2958
        %3050 = vmatprep.subr.bf16.mxu0 %v2957
        %3051 = vmatpush2.bf16.msra.mxu0 %v2956
        %3052 = vmatprep.subr.bf16.mxu0 %v2955
        %3053 = vmatpush2.bf16.msra.mxu0 %v2954
        %3054 = vmatprep.subr.bf16.mxu0 %v2953
        %3055 = vmatpush2.bf16.msra.mxu0 %v2952
        %3056 = vmatprep.subr.bf16.mxu0 %v2951
        %3057 = vmatpush2.bf16.msra.mxu0 %v2950
        %3058 = vmatprep.subr.bf16.mxu0 %v2949
        %3059 = vmatpush2.bf16.msra.mxu0 %v2948
        %3060 = vmatprep.mubr.bf16.mxu0 %v2110
        %3061 = vmatmul.mubr.bf16.gmra.mxu0 %v2109
        %v3062 = vpop.f32.mrf.mxu0
        %v3063 = vadd.f32 0.0, %v3062
        %v3064 = vpop.f32.mrf.mxu0
        %v3065 = vadd.f32 0.0, %v3064
        %v3066 = vpop.f32.mrf.mxu0
        %v3067 = vadd.f32 0.0, %v3066
        %v3068 = vpop.f32.mrf.mxu0
        %v3069 = vadd.f32 0.0, %v3068
        %3070 = vmatprep.mubr.bf16.mxu0 %v2113
        %3071 = vmatmul.mubr.bf16.gmra.mxu0 %v2112
        %v3072 = vpop.f32.mrf.mxu0
        %v3073 = vadd.f32 0.0, %v3072
        %v3074 = vpop.f32.mrf.mxu0
        %v3075 = vadd.f32 0.0, %v3074
        %v3076 = vpop.f32.mrf.mxu0
        %v3077 = vadd.f32 0.0, %v3076
        %v3078 = vpop.f32.mrf.mxu0
        %v3079 = vadd.f32 0.0, %v3078
        %3080 = vmatprep.mubr.bf16.mxu0 %v2116
        %3081 = vmatmul.mubr.bf16.gmra.mxu0 %v2115
        %v3082 = vpop.f32.mrf.mxu0
        %v3083 = vadd.f32 0.0, %v3082
        %v3084 = vpop.f32.mrf.mxu0
        %v3085 = vadd.f32 0.0, %v3084
        %v3086 = vpop.f32.mrf.mxu0
        %v3087 = vadd.f32 0.0, %v3086
        %v3088 = vpop.f32.mrf.mxu0
        %v3089 = vadd.f32 0.0, %v3088
        %3090 = vmatprep.mubr.bf16.mxu0 %v2119
        %3091 = vmatmul.mubr.bf16.gmra.mxu0 %v2118
        %v3092 = vpop.f32.mrf.mxu0
        %v3093 = vadd.f32 0.0, %v3092
        %v3094 = vpop.f32.mrf.mxu0
        %v3095 = vadd.f32 0.0, %v3094
        %v3096 = vpop.f32.mrf.mxu0
        %v3097 = vadd.f32 0.0, %v3096
        %v3098 = vpop.f32.mrf.mxu0
        %v3099 = vadd.f32 0.0, %v3098
        %3100 = vmatprep.mubr.bf16.mxu0 %v2122
        %3101 = vmatmul.mubr.bf16.gmra.mxu0 %v2121
        %v3102 = vpop.f32.mrf.mxu0
        %v3103 = vadd.f32 0.0, %v3102
        %v3104 = vpop.f32.mrf.mxu0
        %v3105 = vadd.f32 0.0, %v3104
        %v3106 = vpop.f32.mrf.mxu0
        %v3107 = vadd.f32 0.0, %v3106
        %v3108 = vpop.f32.mrf.mxu0
        %v3109 = vadd.f32 0.0, %v3108
        %3110 = vmatprep.mubr.bf16.mxu0 %v2125
        %3111 = vmatmul.mubr.bf16.gmra.mxu0 %v2124
        %v3112 = vpop.f32.mrf.mxu0
        %v3113 = vadd.f32 0.0, %v3112
        %v3114 = vpop.f32.mrf.mxu0
        %v3115 = vadd.f32 0.0, %v3114
        %v3116 = vpop.f32.mrf.mxu0
        %v3117 = vadd.f32 0.0, %v3116
        %v3118 = vpop.f32.mrf.mxu0
        %v3119 = vadd.f32 0.0, %v3118
        %3120 = vmatprep.mubr.bf16.mxu0 %v2128
        %3121 = vmatmul.mubr.bf16.gmra.mxu0 %v2127
        %v3122 = vpop.f32.mrf.mxu0
        %v3123 = vadd.f32 0.0, %v3122
        %v3124 = vpop.f32.mrf.mxu0
        %v3125 = vadd.f32 0.0, %v3124
        %v3126 = vpop.f32.mrf.mxu0
        %v3127 = vadd.f32 0.0, %v3126
        %v3128 = vpop.f32.mrf.mxu0
        %v3129 = vadd.f32 0.0, %v3128
        %3130 = vmatprep.mubr.bf16.mxu0 %v2131
        %3131 = vmatmul.mubr.bf16.gmra.mxu0 %v2130
        %v3132 = vpop.f32.mrf.mxu0
        %v3133 = vadd.f32 0.0, %v3132
        %v3134 = vpop.f32.mrf.mxu0
        %v3135 = vadd.f32 0.0, %v3134
        %v3136 = vpop.f32.mrf.mxu0
        %v3137 = vadd.f32 0.0, %v3136
        %v3138 = vpop.f32.mrf.mxu0
        %v3139 = vadd.f32 0.0, %v3138
        %3140 = vmatprep.mubr.bf16.mxu0 %v2134
        %3141 = vmatmul.mubr.bf16.gmra.mxu0 %v2133
        %v3142 = vpop.f32.mrf.mxu0
        %v3143 = vadd.f32 0.0, %v3142
        %v3144 = vpop.f32.mrf.mxu0
        %v3145 = vadd.f32 0.0, %v3144
        %v3146 = vpop.f32.mrf.mxu0
        %v3147 = vadd.f32 0.0, %v3146
        %v3148 = vpop.f32.mrf.mxu0
        %v3149 = vadd.f32 0.0, %v3148
        %3150 = vmatprep.mubr.bf16.mxu0 %v2137
        %3151 = vmatmul.mubr.bf16.gmra.mxu0 %v2136
        %v3152 = vpop.f32.mrf.mxu0
        %v3153 = vadd.f32 0.0, %v3152
        %v3154 = vpop.f32.mrf.mxu0
        %v3155 = vadd.f32 0.0, %v3154
        %v3156 = vpop.f32.mrf.mxu0
        %v3157 = vadd.f32 0.0, %v3156
        %v3158 = vpop.f32.mrf.mxu0
        %v3159 = vadd.f32 0.0, %v3158
        %3160 = vmatprep.mubr.bf16.mxu0 %v2140
        %3161 = vmatmul.mubr.bf16.gmra.mxu0 %v2139
        %v3162 = vpop.f32.mrf.mxu0
        %v3163 = vadd.f32 0.0, %v3162
        %v3164 = vpop.f32.mrf.mxu0
        %v3165 = vadd.f32 0.0, %v3164
        %v3166 = vpop.f32.mrf.mxu0
        %v3167 = vadd.f32 0.0, %v3166
        %v3168 = vpop.f32.mrf.mxu0
        %v3169 = vadd.f32 0.0, %v3168
        %3170 = vmatprep.mubr.bf16.mxu0 %v2143
        %3171 = vmatmul.mubr.bf16.gmra.mxu0 %v2142
        %v3172 = vpop.f32.mrf.mxu0
        %v3173 = vadd.f32 0.0, %v3172
        %v3174 = vpop.f32.mrf.mxu0
        %v3175 = vadd.f32 0.0, %v3174
        %v3176 = vpop.f32.mrf.mxu0
        %v3177 = vadd.f32 0.0, %v3176
        %v3178 = vpop.f32.mrf.mxu0
        %v3179 = vadd.f32 0.0, %v3178
        %3180 = vdwg.mxu0
        %3181 = vmatprep.subr.bf16.mxu0 %v2979
        %3182 = vmatpush1.bf16.msra.mxu0 %v2978
        %3183 = vmatprep.subr.bf16.mxu0 %v2977
        %3184 = vmatpush1.bf16.msra.mxu0 %v2976
        %3185 = vmatprep.subr.bf16.mxu0 %v2975
        %3186 = vmatpush1.bf16.msra.mxu0 %v2974
        %3187 = vmatprep.subr.bf16.mxu0 %v2973
        %3188 = vmatpush1.bf16.msra.mxu0 %v2972
        %3189 = vmatprep.subr.bf16.mxu0 %v2971
        %3190 = vmatpush1.bf16.msra.mxu0 %v2970
        %3191 = vmatprep.subr.bf16.mxu0 %v2969
        %3192 = vmatpush1.bf16.msra.mxu0 %v2968
        %3193 = vmatprep.subr.bf16.mxu0 %v2967
        %3194 = vmatpush1.bf16.msra.mxu0 %v2966
        %3195 = vmatprep.subr.bf16.mxu0 %v2965
        %3196 = vmatpush1.bf16.msra.mxu0 %v2964
        %3197 = vmatprep.subr.bf16.mxu0 0
        %3198 = vmatpush2.bf16.msra.mxu0 0
        %3199 = vmatprep.subr.bf16.mxu0 0
        %3200 = vmatpush2.bf16.msra.mxu0 0
        %3201 = vmatprep.subr.bf16.mxu0 0
        %3202 = vmatpush2.bf16.msra.mxu0 0
        %3203 = vmatprep.subr.bf16.mxu0 0
        %3204 = vmatpush2.bf16.msra.mxu0 0
        %3205 = vmatprep.subr.bf16.mxu0 0
        %3206 = vmatpush2.bf16.msra.mxu0 0
        %3207 = vmatprep.subr.bf16.mxu0 0
        %3208 = vmatpush2.bf16.msra.mxu0 0
        %3209 = vmatprep.subr.bf16.mxu0 0
        %3210 = vmatpush2.bf16.msra.mxu0 0
        %3211 = vmatprep.subr.bf16.mxu0 0
        %3212 = vmatpush2.bf16.msra.mxu0 0
        %3213 = vmatprep.mubr.bf16.mxu0 0
        %3214 = vmatmul.mubr.bf16.gmra.mxu0 %v2111
        %v3215 = vpop.f32.mrf.mxu0
        %v3216 = vadd.f32 %v3063, %v3215
        %v3217 = vpop.f32.mrf.mxu0
        %v3218 = vadd.f32 %v3065, %v3217
        %v3219 = vpop.f32.mrf.mxu0
        %v3220 = vadd.f32 %v3067, %v3219
        %v3221 = vpop.f32.mrf.mxu0
        %v3222 = vadd.f32 %v3069, %v3221
        %3223 = vmatprep.mubr.bf16.mxu0 0
        %3224 = vmatmul.mubr.bf16.gmra.mxu0 %v2114
        %v3225 = vpop.f32.mrf.mxu0
        %v3226 = vadd.f32 %v3073, %v3225
        %v3227 = vpop.f32.mrf.mxu0
        %v3228 = vadd.f32 %v3075, %v3227
        %v3229 = vpop.f32.mrf.mxu0
        %v3230 = vadd.f32 %v3077, %v3229
        %v3231 = vpop.f32.mrf.mxu0
        %v3232 = vadd.f32 %v3079, %v3231
        %3233 = vmatprep.mubr.bf16.mxu0 0
        %3234 = vmatmul.mubr.bf16.gmra.mxu0 %v2117
        %v3235 = vpop.f32.mrf.mxu0
        %v3236 = vadd.f32 %v3083, %v3235
        %v3237 = vpop.f32.mrf.mxu0
        %v3238 = vadd.f32 %v3085, %v3237
        %v3239 = vpop.f32.mrf.mxu0
        %v3240 = vadd.f32 %v3087, %v3239
        %v3241 = vpop.f32.mrf.mxu0
        %v3242 = vadd.f32 %v3089, %v3241
        %3243 = vmatprep.mubr.bf16.mxu0 0
        %3244 = vmatmul.mubr.bf16.gmra.mxu0 %v2120
        %v3245 = vpop.f32.mrf.mxu0
        %v3246 = vadd.f32 %v3093, %v3245
        %v3247 = vpop.f32.mrf.mxu0
        %v3248 = vadd.f32 %v3095, %v3247
        %v3249 = vpop.f32.mrf.mxu0
        %v3250 = vadd.f32 %v3097, %v3249
        %v3251 = vpop.f32.mrf.mxu0
        %v3252 = vadd.f32 %v3099, %v3251
        %3253 = vmatprep.mubr.bf16.mxu0 0
        %3254 = vmatmul.mubr.bf16.gmra.mxu0 %v2123
        %v3255 = vpop.f32.mrf.mxu0
        %v3256 = vadd.f32 %v3103, %v3255
        %v3257 = vpop.f32.mrf.mxu0
        %v3258 = vadd.f32 %v3105, %v3257
        %v3259 = vpop.f32.mrf.mxu0
        %v3260 = vadd.f32 %v3107, %v3259
        %v3261 = vpop.f32.mrf.mxu0
        %v3262 = vadd.f32 %v3109, %v3261
        %3263 = vmatprep.mubr.bf16.mxu0 0
        %3264 = vmatmul.mubr.bf16.gmra.mxu0 %v2126
        %v3265 = vpop.f32.mrf.mxu0
        %v3266 = vadd.f32 %v3113, %v3265
        %v3267 = vpop.f32.mrf.mxu0
        %v3268 = vadd.f32 %v3115, %v3267
        %v3269 = vpop.f32.mrf.mxu0
        %v3270 = vadd.f32 %v3117, %v3269
        %v3271 = vpop.f32.mrf.mxu0
        %v3272 = vadd.f32 %v3119, %v3271
        %3273 = vmatprep.mubr.bf16.mxu0 0
        %3274 = vmatmul.mubr.bf16.gmra.mxu0 %v2129
        %v3275 = vpop.f32.mrf.mxu0
        %v3276 = vadd.f32 %v3123, %v3275
        %v3277 = vpop.f32.mrf.mxu0
        %v3278 = vadd.f32 %v3125, %v3277
        %v3279 = vpop.f32.mrf.mxu0
        %v3280 = vadd.f32 %v3127, %v3279
        %v3281 = vpop.f32.mrf.mxu0
        %v3282 = vadd.f32 %v3129, %v3281
        %3283 = vmatprep.mubr.bf16.mxu0 0
        %3284 = vmatmul.mubr.bf16.gmra.mxu0 %v2132
        %v3285 = vpop.f32.mrf.mxu0
        %v3286 = vadd.f32 %v3133, %v3285
        %v3287 = vpop.f32.mrf.mxu0
        %v3288 = vadd.f32 %v3135, %v3287
        %v3289 = vpop.f32.mrf.mxu0
        %v3290 = vadd.f32 %v3137, %v3289
        %v3291 = vpop.f32.mrf.mxu0
        %v3292 = vadd.f32 %v3139, %v3291
        %3293 = vmatprep.mubr.bf16.mxu0 0
        %3294 = vmatmul.mubr.bf16.gmra.mxu0 %v2135
        %v3295 = vpop.f32.mrf.mxu0
        %v3296 = vadd.f32 %v3143, %v3295
        %v3297 = vpop.f32.mrf.mxu0
        %v3298 = vadd.f32 %v3145, %v3297
        %v3299 = vpop.f32.mrf.mxu0
        %v3300 = vadd.f32 %v3147, %v3299
        %v3301 = vpop.f32.mrf.mxu0
        %v3302 = vadd.f32 %v3149, %v3301
        %3303 = vmatprep.mubr.bf16.mxu0 0
        %3304 = vmatmul.mubr.bf16.gmra.mxu0 %v2138
        %v3305 = vpop.f32.mrf.mxu0
        %v3306 = vadd.f32 %v3153, %v3305
        %v3307 = vpop.f32.mrf.mxu0
        %v3308 = vadd.f32 %v3155, %v3307
        %v3309 = vpop.f32.mrf.mxu0
        %v3310 = vadd.f32 %v3157, %v3309
        %v3311 = vpop.f32.mrf.mxu0
        %v3312 = vadd.f32 %v3159, %v3311
        %3313 = vmatprep.mubr.bf16.mxu0 0
        %3314 = vmatmul.mubr.bf16.gmra.mxu0 %v2141
        %v3315 = vpop.f32.mrf.mxu0
        %v3316 = vadd.f32 %v3163, %v3315
        %v3317 = vpop.f32.mrf.mxu0
        %v3318 = vadd.f32 %v3165, %v3317
        %v3319 = vpop.f32.mrf.mxu0
        %v3320 = vadd.f32 %v3167, %v3319
        %v3321 = vpop.f32.mrf.mxu0
        %v3322 = vadd.f32 %v3169, %v3321
        %3323 = vmatprep.mubr.bf16.mxu0 0
        %3324 = vmatmul.mubr.bf16.gmra.mxu0 %v2144
        %v3325 = vpop.f32.mrf.mxu0
        %v3326 = vadd.f32 %v3173, %v3325
        %v3327 = vpop.f32.mrf.mxu0
        %v3328 = vadd.f32 %v3175, %v3327
        %v3329 = vpop.f32.mrf.mxu0
        %v3330 = vadd.f32 %v3177, %v3329
        %v3331 = vpop.f32.mrf.mxu0
        %v3332 = vadd.f32 %v3179, %v3331
        %3333 = vdwg.mxu0
        %v3334 = vmax.f32 %v2621, %v3216
        %v3335 = vmax.f32 %v2623, %v3218
        %v3336 = vmax.f32 %v2625, %v3220
        %v3337 = vmax.f32 %v2627, %v3222
        %v3338 = vmax.f32 %v2631, %v3226
        %v3339 = vmax.f32 %v2633, %v3228
        %v3340 = vmax.f32 %v2635, %v3230
        %v3341 = vmax.f32 %v2637, %v3232
        %v3342 = vmax.f32 %v2641, %v3236
        %v3343 = vmax.f32 %v2643, %v3238
        %v3344 = vmax.f32 %v2645, %v3240
        %v3345 = vmax.f32 %v2647, %v3242
        %v3346 = vmax.f32 %v2651, %v3246
        %v3347 = vmax.f32 %v2653, %v3248
        %v3348 = vmax.f32 %v2655, %v3250
        %v3349 = vmax.f32 %v2657, %v3252
        %v3350 = vmax.f32 %v2661, %v3256
        %v3351 = vmax.f32 %v2663, %v3258
        %v3352 = vmax.f32 %v2665, %v3260
        %v3353 = vmax.f32 %v2667, %v3262
        %v3354 = vmax.f32 %v2671, %v3266
        %v3355 = vmax.f32 %v2673, %v3268
        %v3356 = vmax.f32 %v2675, %v3270
        %v3357 = vmax.f32 %v2677, %v3272
        %v3358 = vmax.f32 %v2681, %v3276
        %v3359 = vmax.f32 %v2683, %v3278
        %v3360 = vmax.f32 %v2685, %v3280
        %v3361 = vmax.f32 %v2687, %v3282
        %v3362 = vmax.f32 %v2691, %v3286
        %v3363 = vmax.f32 %v2693, %v3288
        %v3364 = vmax.f32 %v2695, %v3290
        %v3365 = vmax.f32 %v2697, %v3292
        %v3366 = vmax.f32 %v2701, %v3296
        %v3367 = vmax.f32 %v2703, %v3298
        %v3368 = vmax.f32 %v2705, %v3300
        %v3369 = vmax.f32 %v2707, %v3302
        %v3370 = vmax.f32 %v2711, %v3306
        %v3371 = vmax.f32 %v2713, %v3308
        %v3372 = vmax.f32 %v2715, %v3310
        %v3373 = vmax.f32 %v2717, %v3312
        %v3374 = vmax.f32 %v2721, %v3316
        %v3375 = vmax.f32 %v2723, %v3318
        %v3376 = vmax.f32 %v2725, %v3320
        %v3377 = vmax.f32 %v2727, %v3322
        %v3378 = vmax.f32 %v2731, %v3326
        %v3379 = vmax.f32 %v2733, %v3328
        %v3380 = vmax.f32 %v2735, %v3330
        %v3381 = vmax.f32 %v2737, %v3332
        %v3382 = vmax.f32 %v3334, 0.0
        %v3383 = vmax.f32 %v3335, 0.0
        %v3384 = vmax.f32 %v3336, 0.0
        %v3385 = vmax.f32 %v3337, 0.0
        %v3386 = vmax.f32 %v3338, 0.0
        %v3387 = vmax.f32 %v3339, 0.0
        %v3388 = vmax.f32 %v3340, 0.0
        %v3389 = vmax.f32 %v3341, 0.0
        %v3390 = vmax.f32 %v3342, 0.0
        %v3391 = vmax.f32 %v3343, 0.0
        %v3392 = vmax.f32 %v3344, 0.0
        %v3393 = vmax.f32 %v3345, 0.0
        %v3394 = vmax.f32 %v3346, 0.0
        %v3395 = vmax.f32 %v3347, 0.0
        %v3396 = vmax.f32 %v3348, 0.0
        %v3397 = vmax.f32 %v3349, 0.0
        %v3398 = vmax.f32 %v3350, 0.0
        %v3399 = vmax.f32 %v3351, 0.0
        %v3400 = vmax.f32 %v3352, 0.0
        %v3401 = vmax.f32 %v3353, 0.0
        %v3402 = vmax.f32 %v3354, 0.0
        %v3403 = vmax.f32 %v3355, 0.0
        %v3404 = vmax.f32 %v3356, 0.0
        %v3405 = vmax.f32 %v3357, 0.0
        %v3406 = vmax.f32 %v3358, 0.0
        %v3407 = vmax.f32 %v3359, 0.0
        %v3408 = vmax.f32 %v3360, 0.0
        %v3409 = vmax.f32 %v3361, 0.0
        %v3410 = vmax.f32 %v3362, 0.0
        %v3411 = vmax.f32 %v3363, 0.0
        %v3412 = vmax.f32 %v3364, 0.0
        %v3413 = vmax.f32 %v3365, 0.0
        %v3414 = vmax.f32 %v3366, 0.0
        %v3415 = vmax.f32 %v3367, 0.0
        %v3416 = vmax.f32 %v3368, 0.0
        %v3417 = vmax.f32 %v3369, 0.0
        %v3418 = vmax.f32 %v3370, 0.0
        %v3419 = vmax.f32 %v3371, 0.0
        %v3420 = vmax.f32 %v3372, 0.0
        %v3421 = vmax.f32 %v3373, 0.0
        %v3422 = vmax.f32 %v3374, 0.0
        %v3423 = vmax.f32 %v3375, 0.0
        %v3424 = vmax.f32 %v3376, 0.0
        %v3425 = vmax.f32 %v3377, 0.0
        %v3426 = vmax.f32 %v3378, 0.0
        %v3427 = vmax.f32 %v3379, 0.0
        %v3428 = vmax.f32 %v3380, 0.0
        %v3429 = vmax.f32 %v3381, 0.0
        %v3430 = vpack.c.bf16 %v3384, %v3382
        %v3431 = vpack.c.bf16 %v3385, %v3383
        %v3432 = vpack.c.bf16 %v3388, %v3386
        %v3433 = vpack.c.bf16 %v3389, %v3387
        %v3434 = vpack.c.bf16 %v3392, %v3390
        %v3435 = vpack.c.bf16 %v3393, %v3391
        %v3436 = vpack.c.bf16 %v3396, %v3394
        %v3437 = vpack.c.bf16 %v3397, %v3395
        %v3438 = vpack.c.bf16 %v3400, %v3398
        %v3439 = vpack.c.bf16 %v3401, %v3399
        %v3440 = vpack.c.bf16 %v3404, %v3402
        %v3441 = vpack.c.bf16 %v3405, %v3403
        %v3442 = vpack.c.bf16 %v3408, %v3406
        %v3443 = vpack.c.bf16 %v3409, %v3407
        %v3444 = vpack.c.bf16 %v3412, %v3410
        %v3445 = vpack.c.bf16 %v3413, %v3411
        %v3446 = vpack.c.bf16 %v3416, %v3414
        %v3447 = vpack.c.bf16 %v3417, %v3415
        %v3448 = vpack.c.bf16 %v3420, %v3418
        %v3449 = vpack.c.bf16 %v3421, %v3419
        %v3450 = vpack.c.bf16 %v3424, %v3422
        %v3451 = vpack.c.bf16 %v3425, %v3423
        %v3452 = vpack.c.bf16 %v3428, %v3426
        %v3453 = vpack.c.bf16 %v3429, %v3427
        %3470 = vrot.lane.b32.xlu0 %v3432, 64
        %v3471 = vpop.permute.xlu0 %3470
        %3472 = vrot.lane.b32.xlu0 %v3433, 64
        %v3473 = vpop.permute.xlu0 %3472
        %3474 = vrot.lane.b32.xlu0 %v3434, 64
        %v3475 = vpop.permute.xlu0 %3474
        %3476 = vrot.lane.b32.xlu0 %v3435, 64
        %v3477 = vpop.permute.xlu0 %3476
        %3478 = vrot.lane.b32.xlu0 %v3436, 64
        %v3479 = vpop.permute.xlu0 %3478
        %3480 = vrot.lane.b32.xlu0 %v3437, 64
        %v3481 = vpop.permute.xlu0 %3480
        %3482 = vrot.lane.b32.xlu0 %v3438, 64
        %v3483 = vpop.permute.xlu0 %3482
        %3484 = vrot.lane.b32.xlu0 %v3439, 64
        %v3485 = vpop.permute.xlu0 %3484
        %3486 = vrot.lane.b32.xlu0 %v3440, 64
        %v3487 = vpop.permute.xlu0 %3486
        %3488 = vrot.lane.b32.xlu0 %v3441, 64
        %v3489 = vpop.permute.xlu0 %3488
        %3490 = vrot.lane.b32.xlu0 %v3442, 64
        %v3491 = vpop.permute.xlu0 %3490
        %3492 = vrot.lane.b32.xlu0 %v3443, 64
        %v3493 = vpop.permute.xlu0 %3492
        %3494 = vrot.lane.b32.xlu0 %v3444, 64
        %v3495 = vpop.permute.xlu0 %3494
        %3496 = vrot.lane.b32.xlu0 %v3445, 64
        %v3497 = vpop.permute.xlu0 %3496
        %3498 = vrot.lane.b32.xlu0 %v3446, 64
        %v3499 = vpop.permute.xlu0 %3498
        %3500 = vrot.lane.b32.xlu0 %v3447, 64
        %v3501 = vpop.permute.xlu0 %3500
        %vm3502 = vcmask 523264
        %v3503 = vsel %vm3502, %v3471, %v3473
        %v3504 = vsel %vm3502, %v3475, %v3477
        %v3505 = vsel %vm3502, %v3479, %v3481
        %v3506 = vsel %vm3502, %v3483, %v3485
        %v3507 = vsel %vm3502, %v3487, %v3489
        %v3508 = vsel %vm3502, %v3491, %v3493
        %v3509 = vsel %vm3502, %v3495, %v3497
        %v3510 = vsel %vm3502, %v3499, %v3501
        %3523 = vrot.lane.b32.xlu0 %v3448, 64
        %v3524 = vpop.permute.xlu0 %3523
        %3525 = vrot.lane.b32.xlu0 %v3449, 64
        %v3526 = vpop.permute.xlu0 %3525
        %3527 = vrot.lane.b32.xlu0 %v3450, 64
        %v3528 = vpop.permute.xlu0 %3527
        %3529 = vrot.lane.b32.xlu0 %v3451, 64
        %v3530 = vpop.permute.xlu0 %3529
        %v3531 = vsel %vm3502, %v3524, %v3526
        %v3532 = vsel %vm3502, %v3528, %v3530
        %vm3535 = vcmask 523264
        %v3538 = vsel %vm3535, %v3431, %v3471
        %v3542 = vsel %vm3535, %v3433, %v3475
        %v3546 = vsel %vm3535, %v3435, %v3479
        %v3550 = vsel %vm3535, %v3437, %v3483
        %v3554 = vsel %vm3535, %v3439, %v3487
        %v3558 = vsel %vm3535, %v3441, %v3491
        %v3562 = vsel %vm3535, %v3443, %v3495
        %v3566 = vsel %vm3535, %v3445, %v3499
        %v3570 = vsel %vm3535, %v3447, %v3524
        %v3574 = vsel %vm3535, %v3449, %v3528
        %v3576 = vld [vmem:[%s4] sm:$0xff]
        %v3577 = vld [vmem:[%s4 + $0x8] sm:$0xff]
        %v3578 = vld [vmem:[%s4 + $0x10] sm:$0xff]
        %v3579 = vld [vmem:[%s4 + $0x18] sm:$0xff]
        %v3580 = vld [vmem:[%s4 + $0x20] sm:$0xff]
        %v3581 = vld [vmem:[%s4 + $0x28] sm:$0xff]
        %v3582 = vld [vmem:[%s4 + $0x30] sm:$0xff]
        %v3583 = vld [vmem:[%s4 + $0x38] sm:$0xff]
        %v3584 = vld [vmem:[%s4 + $0x40] sm:$0xff]
        %v3585 = vld [vmem:[%s4 + $0x48] sm:$0xff]
        %v3586 = vld [vmem:[%s4 + $0x50] sm:$0xff]
        %v3587 = vld [vmem:[%s4 + $0x58] sm:$0xff]
        %v3588 = vld [vmem:[%s4 + $0x60] sm:$0xff]
        %v3589 = vld [vmem:[%s4 + $0x68] sm:$0xff]
        %v3590 = vld [vmem:[%s4 + $0x70] sm:$0xff]
        %v3591 = vld [vmem:[%s4 + $0x78] sm:$0xff]
        %v3592 = vld [vmem:[%s4 + $0x80] sm:$0xff]
        %v3593 = vld [vmem:[%s4 + $0x88] sm:$0xff]
        %v3594 = vld [vmem:[%s4 + $0x90] sm:$0xff]
        %v3595 = vld [vmem:[%s4 + $0x98] sm:$0xff]
        %v3596 = vld [vmem:[%s4 + $0xa0] sm:$0xff]
        %v3597 = vld [vmem:[%s4 + $0xa8] sm:$0xff]
        %v3598 = vld [vmem:[%s4 + $0xb0] sm:$0xff]
        %v3599 = vld [vmem:[%s4 + $0xb8] sm:$0xff]
        %v3600 = vld [vmem:[%s4 + $0xc0] sm:$0xff]
        %v3601 = vld [vmem:[%s4 + $0xc8] sm:$0xff]
        %v3602 = vld [vmem:[%s4 + $0xd0] sm:$0xff]
        %v3603 = vld [vmem:[%s4 + $0xd8] sm:$0xff]
        %v3604 = vld [vmem:[%s4 + $0xe0] sm:$0xff]
        %v3605 = vld [vmem:[%s4 + $0xe8] sm:$0xff]
        %v3606 = vld [vmem:[%s4 + $0xf0] sm:$0xff]
        %v3607 = vld [vmem:[%s4 + $0xf8] sm:$0xff]
        %v3608 = vld [vmem:[%s4 + $0x100] sm:$0xff]
        %v3609 = vld [vmem:[%s4 + $0x108] sm:$0xff]
        %v3610 = vld [vmem:[%s4 + $0x110] sm:$0xff]
        %v3611 = vld [vmem:[%s4 + $0x118] sm:$0xff]
        %v3612 = vld [vmem:[%s4 + $0x120] sm:$0xff]
        %v3613 = vld [vmem:[%s4 + $0x128] sm:$0xff]
        %v3614 = vld [vmem:[%s4 + $0x130] sm:$0xff]
        %v3615 = vld [vmem:[%s4 + $0x138] sm:$0xff]
        %v3616 = vld [vmem:[%s4 + $0x140] sm:$0xff]
        %v3617 = vld [vmem:[%s4 + $0x148] sm:$0xff]
        %v3618 = vld [vmem:[%s4 + $0x150] sm:$0xff]
        %v3619 = vld [vmem:[%s4 + $0x158] sm:$0xff]
        %v3620 = vld [vmem:[%s4 + $0x160] sm:$0xff]
        %v3621 = vld [vmem:[%s4 + $0x168] sm:$0xff]
        %v3622 = vld [vmem:[%s4 + $0x170] sm:$0xff]
        %v3623 = vld [vmem:[%s4 + $0x178] sm:$0xff]
        %v3624 = vld [vmem:[%s4 + $0x180] sm:$0xff]
        %v3625 = vld [vmem:[%s4 + $0x188] sm:$0xff]
        %v3626 = vld [vmem:[%s4 + $0x190] sm:$0xff]
        %v3627 = vld [vmem:[%s4 + $0x198] sm:$0xff]
        %v3628 = vld [vmem:[%s4 + $0x1a0] sm:$0xff]
        %v3629 = vld [vmem:[%s4 + $0x1a8] sm:$0xff]
        %v3630 = vld [vmem:[%s4 + $0x1b0] sm:$0xff]
        %v3631 = vld [vmem:[%s4 + $0x1b8] sm:$0xff]
        %v3632 = vld [vmem:[%s4 + $0x1c0] sm:$0xff]
        %v3633 = vld [vmem:[%s4 + $0x1c8] sm:$0xff]
        %v3634 = vld [vmem:[%s4 + $0x1d0] sm:$0xff]
        %v3635 = vld [vmem:[%s4 + $0x1d8] sm:$0xff]
        %v3636 = vld [vmem:[%s4 + $0x1e0] sm:$0xff]
        %v3637 = vld [vmem:[%s4 + $0x1e8] sm:$0xff]
        %v3638 = vld [vmem:[%s4 + $0x1f0] sm:$0xff]
        %v3639 = vld [vmem:[%s4 + $0x1f8] sm:$0xff]
        %v3640 = vld [vmem:[%s4 + $0x200] sm:$0xff]
        %v3641 = vld [vmem:[%s4 + $0x208] sm:$0xff]
        %v3642 = vld [vmem:[%s4 + $0x210] sm:$0xff]
        %v3643 = vld [vmem:[%s4 + $0x218] sm:$0xff]
        %v3644 = vld [vmem:[%s4 + $0x220] sm:$0xff]
        %v3645 = vld [vmem:[%s4 + $0x228] sm:$0xff]
        %v3646 = vld [vmem:[%s4 + $0x230] sm:$0xff]
        %v3647 = vld [vmem:[%s4 + $0x238] sm:$0xff]
        %v3648 = vld [vmem:[%s4 + $0x240] sm:$0xff]
        %v3649 = vld [vmem:[%s4 + $0x248] sm:$0xff]
        %v3650 = vld [vmem:[%s4 + $0x250] sm:$0xff]
        %v3651 = vld [vmem:[%s4 + $0x258] sm:$0xff]
        %v3652 = vld [vmem:[%s4 + $0x260] sm:$0xff]
        %v3653 = vld [vmem:[%s4 + $0x268] sm:$0xff]
        %v3654 = vld [vmem:[%s4 + $0x270] sm:$0xff]
        %v3655 = vld [vmem:[%s4 + $0x278] sm:$0xff]
        %v3656 = vld [vmem:[%s4 + $0x280] sm:$0xff]
        %v3657 = vld [vmem:[%s4 + $0x288] sm:$0xff]
        %v3658 = vld [vmem:[%s4 + $0x290] sm:$0xff]
        %v3659 = vld [vmem:[%s4 + $0x298] sm:$0xff]
        %v3660 = vld [vmem:[%s4 + $0x2a0] sm:$0xff]
        %v3661 = vld [vmem:[%s4 + $0x2a8] sm:$0xff]
        %v3662 = vld [vmem:[%s4 + $0x2b0] sm:$0xff]
        %v3663 = vld [vmem:[%s4 + $0x2b8] sm:$0xff]
        %v3664 = vld [vmem:[%s4 + $0x2c0] sm:$0xff]
        %v3665 = vld [vmem:[%s4 + $0x2c8] sm:$0xff]
        %v3666 = vld [vmem:[%s4 + $0x2d0] sm:$0xff]
        %v3667 = vld [vmem:[%s4 + $0x2d8] sm:$0xff]
        %v3668 = vld [vmem:[%s4 + $0x2e0] sm:$0xff]
        %v3669 = vld [vmem:[%s4 + $0x2e8] sm:$0xff]
        %v3670 = vld [vmem:[%s4 + $0x2f0] sm:$0xff]
        %v3671 = vld [vmem:[%s4 + $0x2f8] sm:$0xff]
        %v3672 = vld [vmem:[%s4 + $0x300] sm:$0xff]
        %v3673 = vld [vmem:[%s4 + $0x308] sm:$0xff]
        %v3674 = vld [vmem:[%s4 + $0x310] sm:$0xff]
        %v3675 = vld [vmem:[%s4 + $0x318] sm:$0xff]
        %v3676 = vld [vmem:[%s4 + $0x320] sm:$0xff]
        %v3677 = vld [vmem:[%s4 + $0x328] sm:$0xff]
        %v3678 = vld [vmem:[%s4 + $0x330] sm:$0xff]
        %v3679 = vld [vmem:[%s4 + $0x338] sm:$0xff]
        %v3680 = vld [vmem:[%s4 + $0x340] sm:$0xff]
        %v3681 = vld [vmem:[%s4 + $0x348] sm:$0xff]
        %v3682 = vld [vmem:[%s4 + $0x350] sm:$0xff]
        %v3683 = vld [vmem:[%s4 + $0x358] sm:$0xff]
        %v3684 = vld [vmem:[%s4 + $0x360] sm:$0xff]
        %v3685 = vld [vmem:[%s4 + $0x368] sm:$0xff]
        %v3686 = vld [vmem:[%s4 + $0x370] sm:$0xff]
        %v3687 = vld [vmem:[%s4 + $0x378] sm:$0xff]
        %v3688 = vld [vmem:[%s4 + $0x380] sm:$0xff]
        %v3689 = vld [vmem:[%s4 + $0x388] sm:$0xff]
        %v3690 = vld [vmem:[%s4 + $0x390] sm:$0xff]
        %v3691 = vld [vmem:[%s4 + $0x398] sm:$0xff]
        %v3692 = vld [vmem:[%s4 + $0x3a0] sm:$0xff]
        %v3693 = vld [vmem:[%s4 + $0x3a8] sm:$0xff]
        %v3694 = vld [vmem:[%s4 + $0x3b0] sm:$0xff]
        %v3695 = vld [vmem:[%s4 + $0x3b8] sm:$0xff]
        %v3696 = vld [vmem:[%s5] sm:$0x3]
        %v3698 = vlaneseq
        %v3699 = vshrl.u32 %v3698, 7
        %v3700 = vsub.s32 0, %v3699
        %v3701 = vrot.slane %v3696, %v3700
        %v3702 = vlaneseq
        %v3703 = vshrl.u32 %v3702, 7
        %v3704 = vsub.s32 1, %v3703
        %v3705 = vrot.slane %v3696, %v3704
        %v3828 = vunpack.c.l.b16 %v3576
        %v3829 = vunpack.c.h.b16 %v3576
        %v3830 = vunpack.c.l.b16 %v3577
        %v3831 = vunpack.c.h.b16 %v3577
        %v3832 = vunpack.c.l.b16 %v3578
        %v3833 = vunpack.c.h.b16 %v3578
        %v3834 = vunpack.c.l.b16 %v3579
        %v3835 = vunpack.c.h.b16 %v3579
        %v3836 = vunpack.c.l.b16 %v3580
        %v3837 = vunpack.c.h.b16 %v3580
        %v3838 = vunpack.c.l.b16 %v3581
        %v3839 = vunpack.c.h.b16 %v3581
        %v3840 = vunpack.c.l.b16 %v3582
        %v3841 = vunpack.c.h.b16 %v3582
        %v3842 = vunpack.c.l.b16 %v3583
        %v3843 = vunpack.c.h.b16 %v3583
        %v3844 = vunpack.c.l.b16 %v3584
        %v3845 = vunpack.c.h.b16 %v3584
        %v3846 = vunpack.c.l.b16 %v3585
        %v3847 = vunpack.c.h.b16 %v3585
        %v3848 = vunpack.c.l.b16 %v3586
        %v3849 = vunpack.c.h.b16 %v3586
        %v3850 = vunpack.c.l.b16 %v3587
        %v3851 = vunpack.c.h.b16 %v3587
        %v3852 = vunpack.c.l.b16 %v3588
        %v3853 = vunpack.c.h.b16 %v3588
        %v3854 = vunpack.c.l.b16 %v3589
        %v3855 = vunpack.c.h.b16 %v3589
        %v3856 = vunpack.c.l.b16 %v3590
        %v3857 = vunpack.c.h.b16 %v3590
        %v3858 = vunpack.c.l.b16 %v3591
        %v3859 = vunpack.c.h.b16 %v3591
        %v3860 = vunpack.c.l.b16 %v3592
        %v3861 = vunpack.c.h.b16 %v3592
        %v3862 = vunpack.c.l.b16 %v3593
        %v3863 = vunpack.c.h.b16 %v3593
        %v3864 = vunpack.c.l.b16 %v3594
        %v3865 = vunpack.c.h.b16 %v3594
        %v3866 = vunpack.c.l.b16 %v3595
        %v3867 = vunpack.c.h.b16 %v3595
        %v3868 = vunpack.c.l.b16 %v3596
        %v3869 = vunpack.c.h.b16 %v3596
        %v3870 = vunpack.c.l.b16 %v3597
        %v3871 = vunpack.c.h.b16 %v3597
        %v3872 = vunpack.c.l.b16 %v3598
        %v3873 = vunpack.c.h.b16 %v3598
        %v3874 = vunpack.c.l.b16 %v3599
        %v3875 = vunpack.c.h.b16 %v3599
        %v3876 = vunpack.c.l.b16 %v3600
        %v3877 = vunpack.c.h.b16 %v3600
        %v3878 = vunpack.c.l.b16 %v3601
        %v3879 = vunpack.c.h.b16 %v3601
        %v3880 = vunpack.c.l.b16 %v3602
        %v3881 = vunpack.c.h.b16 %v3602
        %v3882 = vunpack.c.l.b16 %v3603
        %v3883 = vunpack.c.h.b16 %v3603
        %v3884 = vunpack.c.l.b16 %v3604
        %v3885 = vunpack.c.h.b16 %v3604
        %v3886 = vunpack.c.l.b16 %v3605
        %v3887 = vunpack.c.h.b16 %v3605
        %v3888 = vunpack.c.l.b16 %v3606
        %v3889 = vunpack.c.h.b16 %v3606
        %v3890 = vunpack.c.l.b16 %v3607
        %v3891 = vunpack.c.h.b16 %v3607
        %v3892 = vunpack.c.l.b16 %v3608
        %v3893 = vunpack.c.h.b16 %v3608
        %v3894 = vunpack.c.l.b16 %v3609
        %v3895 = vunpack.c.h.b16 %v3609
        %v3896 = vunpack.c.l.b16 %v3610
        %v3897 = vunpack.c.h.b16 %v3610
        %v3898 = vunpack.c.l.b16 %v3611
        %v3899 = vunpack.c.h.b16 %v3611
        %v3900 = vunpack.c.l.b16 %v3612
        %v3901 = vunpack.c.h.b16 %v3612
        %v3902 = vunpack.c.l.b16 %v3613
        %v3903 = vunpack.c.h.b16 %v3613
        %v3904 = vunpack.c.l.b16 %v3614
        %v3905 = vunpack.c.h.b16 %v3614
        %v3906 = vunpack.c.l.b16 %v3615
        %v3907 = vunpack.c.h.b16 %v3615
        %v3908 = vunpack.c.l.b16 %v3616
        %v3909 = vunpack.c.h.b16 %v3616
        %v3910 = vunpack.c.l.b16 %v3617
        %v3911 = vunpack.c.h.b16 %v3617
        %v3912 = vunpack.c.l.b16 %v3618
        %v3913 = vunpack.c.h.b16 %v3618
        %v3914 = vunpack.c.l.b16 %v3619
        %v3915 = vunpack.c.h.b16 %v3619
        %v3916 = vunpack.c.l.b16 %v3620
        %v3917 = vunpack.c.h.b16 %v3620
        %v3918 = vunpack.c.l.b16 %v3621
        %v3919 = vunpack.c.h.b16 %v3621
        %v3920 = vunpack.c.l.b16 %v3622
        %v3921 = vunpack.c.h.b16 %v3622
        %v3922 = vunpack.c.l.b16 %v3623
        %v3923 = vunpack.c.h.b16 %v3623
        %v3924 = vunpack.c.l.b16 %v3624
        %v3925 = vunpack.c.h.b16 %v3624
        %v3926 = vunpack.c.l.b16 %v3625
        %v3927 = vunpack.c.h.b16 %v3625
        %v3928 = vunpack.c.l.b16 %v3626
        %v3929 = vunpack.c.h.b16 %v3626
        %v3930 = vunpack.c.l.b16 %v3627
        %v3931 = vunpack.c.h.b16 %v3627
        %v3932 = vunpack.c.l.b16 %v3628
        %v3933 = vunpack.c.h.b16 %v3628
        %v3934 = vunpack.c.l.b16 %v3629
        %v3935 = vunpack.c.h.b16 %v3629
        %v3936 = vunpack.c.l.b16 %v3630
        %v3937 = vunpack.c.h.b16 %v3630
        %v3938 = vunpack.c.l.b16 %v3631
        %v3939 = vunpack.c.h.b16 %v3631
        %v3940 = vunpack.c.l.b16 %v3632
        %v3941 = vunpack.c.h.b16 %v3632
        %v3942 = vunpack.c.l.b16 %v3633
        %v3943 = vunpack.c.h.b16 %v3633
        %v3944 = vunpack.c.l.b16 %v3634
        %v3945 = vunpack.c.h.b16 %v3634
        %v3946 = vunpack.c.l.b16 %v3635
        %v3947 = vunpack.c.h.b16 %v3635
        %v3948 = vunpack.c.l.b16 %v3636
        %v3949 = vunpack.c.h.b16 %v3636
        %v3950 = vunpack.c.l.b16 %v3637
        %v3951 = vunpack.c.h.b16 %v3637
        %v3952 = vunpack.c.l.b16 %v3638
        %v3953 = vunpack.c.h.b16 %v3638
        %v3954 = vunpack.c.l.b16 %v3639
        %v3955 = vunpack.c.h.b16 %v3639
        %v3956 = vunpack.c.l.b16 %v3640
        %v3957 = vunpack.c.h.b16 %v3640
        %v3958 = vunpack.c.l.b16 %v3641
        %v3959 = vunpack.c.h.b16 %v3641
        %v3960 = vunpack.c.l.b16 %v3642
        %v3961 = vunpack.c.h.b16 %v3642
        %v3962 = vunpack.c.l.b16 %v3643
        %v3963 = vunpack.c.h.b16 %v3643
        %v3964 = vunpack.c.l.b16 %v3644
        %v3965 = vunpack.c.h.b16 %v3644
        %v3966 = vunpack.c.l.b16 %v3645
        %v3967 = vunpack.c.h.b16 %v3645
        %v3968 = vunpack.c.l.b16 %v3646
        %v3969 = vunpack.c.h.b16 %v3646
        %v3970 = vunpack.c.l.b16 %v3647
        %v3971 = vunpack.c.h.b16 %v3647
        %v3972 = vunpack.c.l.b16 %v3648
        %v3973 = vunpack.c.h.b16 %v3648
        %v3974 = vunpack.c.l.b16 %v3649
        %v3975 = vunpack.c.h.b16 %v3649
        %v3976 = vunpack.c.l.b16 %v3650
        %v3977 = vunpack.c.h.b16 %v3650
        %v3978 = vunpack.c.l.b16 %v3651
        %v3979 = vunpack.c.h.b16 %v3651
        %v3980 = vunpack.c.l.b16 %v3652
        %v3981 = vunpack.c.h.b16 %v3652
        %v3982 = vunpack.c.l.b16 %v3653
        %v3983 = vunpack.c.h.b16 %v3653
        %v3984 = vunpack.c.l.b16 %v3654
        %v3985 = vunpack.c.h.b16 %v3654
        %v3986 = vunpack.c.l.b16 %v3655
        %v3987 = vunpack.c.h.b16 %v3655
        %v3988 = vunpack.c.l.b16 %v3656
        %v3989 = vunpack.c.h.b16 %v3656
        %v3990 = vunpack.c.l.b16 %v3657
        %v3991 = vunpack.c.h.b16 %v3657
        %v3992 = vunpack.c.l.b16 %v3658
        %v3993 = vunpack.c.h.b16 %v3658
        %v3994 = vunpack.c.l.b16 %v3659
        %v3995 = vunpack.c.h.b16 %v3659
        %v3996 = vunpack.c.l.b16 %v3660
        %v3997 = vunpack.c.h.b16 %v3660
        %v3998 = vunpack.c.l.b16 %v3661
        %v3999 = vunpack.c.h.b16 %v3661
        %v4000 = vunpack.c.l.b16 %v3662
        %v4001 = vunpack.c.h.b16 %v3662
        %v4002 = vunpack.c.l.b16 %v3663
        %v4003 = vunpack.c.h.b16 %v3663
        %v4004 = vunpack.c.l.b16 %v3664
        %v4005 = vunpack.c.h.b16 %v3664
        %v4006 = vunpack.c.l.b16 %v3665
        %v4007 = vunpack.c.h.b16 %v3665
        %v4008 = vunpack.c.l.b16 %v3666
        %v4009 = vunpack.c.h.b16 %v3666
        %v4010 = vunpack.c.l.b16 %v3667
        %v4011 = vunpack.c.h.b16 %v3667
        %v4012 = vunpack.c.l.b16 %v3668
        %v4013 = vunpack.c.h.b16 %v3668
        %v4014 = vunpack.c.l.b16 %v3669
        %v4015 = vunpack.c.h.b16 %v3669
        %v4016 = vunpack.c.l.b16 %v3670
        %v4017 = vunpack.c.h.b16 %v3670
        %v4018 = vunpack.c.l.b16 %v3671
        %v4019 = vunpack.c.h.b16 %v3671
        %v4020 = vunpack.c.l.b16 %v3672
        %v4021 = vunpack.c.h.b16 %v3672
        %v4022 = vunpack.c.l.b16 %v3673
        %v4023 = vunpack.c.h.b16 %v3673
        %v4024 = vunpack.c.l.b16 %v3674
        %v4025 = vunpack.c.h.b16 %v3674
        %v4026 = vunpack.c.l.b16 %v3675
        %v4027 = vunpack.c.h.b16 %v3675
        %v4028 = vunpack.c.l.b16 %v3676
        %v4029 = vunpack.c.h.b16 %v3676
        %v4030 = vunpack.c.l.b16 %v3677
        %v4031 = vunpack.c.h.b16 %v3677
        %v4032 = vunpack.c.l.b16 %v3678
        %v4033 = vunpack.c.h.b16 %v3678
        %v4034 = vunpack.c.l.b16 %v3679
        %v4035 = vunpack.c.h.b16 %v3679
        %v4036 = vunpack.c.l.b16 %v3680
        %v4037 = vunpack.c.h.b16 %v3680
        %v4038 = vunpack.c.l.b16 %v3681
        %v4039 = vunpack.c.h.b16 %v3681
        %v4040 = vunpack.c.l.b16 %v3682
        %v4041 = vunpack.c.h.b16 %v3682
        %v4042 = vunpack.c.l.b16 %v3683
        %v4043 = vunpack.c.h.b16 %v3683
        %v4044 = vunpack.c.l.b16 %v3684
        %v4045 = vunpack.c.h.b16 %v3684
        %v4046 = vunpack.c.l.b16 %v3685
        %v4047 = vunpack.c.h.b16 %v3685
        %v4048 = vunpack.c.l.b16 %v3686
        %v4049 = vunpack.c.h.b16 %v3686
        %v4050 = vunpack.c.l.b16 %v3687
        %v4051 = vunpack.c.h.b16 %v3687
        %v4052 = vunpack.c.l.b16 %v3688
        %v4053 = vunpack.c.h.b16 %v3688
        %v4054 = vunpack.c.l.b16 %v3689
        %v4055 = vunpack.c.h.b16 %v3689
        %v4056 = vunpack.c.l.b16 %v3690
        %v4057 = vunpack.c.h.b16 %v3690
        %v4058 = vunpack.c.l.b16 %v3691
        %v4059 = vunpack.c.h.b16 %v3691
        %v4060 = vunpack.c.l.b16 %v3692
        %v4061 = vunpack.c.h.b16 %v3692
        %v4062 = vunpack.c.l.b16 %v3693
        %v4063 = vunpack.c.h.b16 %v3693
        %v4064 = vunpack.c.l.b16 %v3694
        %v4065 = vunpack.c.h.b16 %v3694
        %v4066 = vunpack.c.l.b16 %v3695
        %v4067 = vunpack.c.h.b16 %v3695
        %v4068 = vpack.c.b16 %v3830, %v3828
        %v4069 = vpack.c.b16 %v3831, %v3829
        %v4070 = vpack.c.b16 %v3834, %v3832
        %v4071 = vpack.c.b16 %v3835, %v3833
        %v4072 = vpack.c.b16 %v3838, %v3836
        %v4073 = vpack.c.b16 %v3839, %v3837
        %v4074 = vpack.c.b16 %v3842, %v3840
        %v4075 = vpack.c.b16 %v3843, %v3841
        %v4076 = vpack.c.b16 %v3846, %v3844
        %v4077 = vpack.c.b16 %v3847, %v3845
        %v4078 = vpack.c.b16 %v3850, %v3848
        %v4079 = vpack.c.b16 %v3851, %v3849
        %v4080 = vpack.c.b16 %v3854, %v3852
        %v4081 = vpack.c.b16 %v3855, %v3853
        %v4082 = vpack.c.b16 %v3858, %v3856
        %v4083 = vpack.c.b16 %v3859, %v3857
        %v4084 = vpack.c.b16 %v3862, %v3860
        %v4085 = vpack.c.b16 %v3863, %v3861
        %v4086 = vpack.c.b16 %v3866, %v3864
        %v4087 = vpack.c.b16 %v3867, %v3865
        %v4088 = vpack.c.b16 %v3870, %v3868
        %v4089 = vpack.c.b16 %v3871, %v3869
        %v4090 = vpack.c.b16 %v3874, %v3872
        %v4091 = vpack.c.b16 %v3875, %v3873
        %v4092 = vpack.c.b16 %v3878, %v3876
        %v4093 = vpack.c.b16 %v3879, %v3877
        %v4094 = vpack.c.b16 %v3882, %v3880
        %v4095 = vpack.c.b16 %v3883, %v3881
        %v4096 = vpack.c.b16 %v3886, %v3884
        %v4097 = vpack.c.b16 %v3887, %v3885
        %v4098 = vpack.c.b16 %v3890, %v3888
        %v4099 = vpack.c.b16 %v3891, %v3889
        %v4100 = vpack.c.b16 %v3894, %v3892
        %v4101 = vpack.c.b16 %v3895, %v3893
        %v4102 = vpack.c.b16 %v3898, %v3896
        %v4103 = vpack.c.b16 %v3899, %v3897
        %v4104 = vpack.c.b16 %v3902, %v3900
        %v4105 = vpack.c.b16 %v3903, %v3901
        %v4106 = vpack.c.b16 %v3906, %v3904
        %v4107 = vpack.c.b16 %v3907, %v3905
        %v4108 = vpack.c.b16 %v3910, %v3908
        %v4109 = vpack.c.b16 %v3911, %v3909
        %v4110 = vpack.c.b16 %v3914, %v3912
        %v4111 = vpack.c.b16 %v3915, %v3913
        %v4112 = vpack.c.b16 %v3918, %v3916
        %v4113 = vpack.c.b16 %v3919, %v3917
        %v4114 = vpack.c.b16 %v3922, %v3920
        %v4115 = vpack.c.b16 %v3923, %v3921
        %v4116 = vpack.c.b16 %v3926, %v3924
        %v4117 = vpack.c.b16 %v3927, %v3925
        %v4118 = vpack.c.b16 %v3930, %v3928
        %v4119 = vpack.c.b16 %v3931, %v3929
        %v4120 = vpack.c.b16 %v3934, %v3932
        %v4121 = vpack.c.b16 %v3935, %v3933
        %v4122 = vpack.c.b16 %v3938, %v3936
        %v4123 = vpack.c.b16 %v3939, %v3937
        %v4124 = vpack.c.b16 %v3942, %v3940
        %v4125 = vpack.c.b16 %v3943, %v3941
        %v4126 = vpack.c.b16 %v3946, %v3944
        %v4127 = vpack.c.b16 %v3947, %v3945
        %v4128 = vpack.c.b16 %v3950, %v3948
        %v4129 = vpack.c.b16 %v3951, %v3949
        %v4130 = vpack.c.b16 %v3954, %v3952
        %v4131 = vpack.c.b16 %v3955, %v3953
        %v4132 = vpack.c.b16 %v3958, %v3956
        %v4133 = vpack.c.b16 %v3959, %v3957
        %v4134 = vpack.c.b16 %v3962, %v3960
        %v4135 = vpack.c.b16 %v3963, %v3961
        %v4136 = vpack.c.b16 %v3966, %v3964
        %v4137 = vpack.c.b16 %v3967, %v3965
        %v4138 = vpack.c.b16 %v3970, %v3968
        %v4139 = vpack.c.b16 %v3971, %v3969
        %v4140 = vpack.c.b16 %v3974, %v3972
        %v4141 = vpack.c.b16 %v3975, %v3973
        %v4142 = vpack.c.b16 %v3978, %v3976
        %v4143 = vpack.c.b16 %v3979, %v3977
        %v4144 = vpack.c.b16 %v3982, %v3980
        %v4145 = vpack.c.b16 %v3983, %v3981
        %v4146 = vpack.c.b16 %v3986, %v3984
        %v4147 = vpack.c.b16 %v3987, %v3985
        %v4148 = vpack.c.b16 %v3990, %v3988
        %v4149 = vpack.c.b16 %v3991, %v3989
        %v4150 = vpack.c.b16 %v3994, %v3992
        %v4151 = vpack.c.b16 %v3995, %v3993
        %v4152 = vpack.c.b16 %v3998, %v3996
        %v4153 = vpack.c.b16 %v3999, %v3997
        %v4154 = vpack.c.b16 %v4002, %v4000
        %v4155 = vpack.c.b16 %v4003, %v4001
        %v4156 = vpack.c.b16 %v4006, %v4004
        %v4157 = vpack.c.b16 %v4007, %v4005
        %v4158 = vpack.c.b16 %v4010, %v4008
        %v4159 = vpack.c.b16 %v4011, %v4009
        %v4160 = vpack.c.b16 %v4014, %v4012
        %v4161 = vpack.c.b16 %v4015, %v4013
        %v4162 = vpack.c.b16 %v4018, %v4016
        %v4163 = vpack.c.b16 %v4019, %v4017
        %v4164 = vpack.c.b16 %v4022, %v4020
        %v4165 = vpack.c.b16 %v4023, %v4021
        %v4166 = vpack.c.b16 %v4026, %v4024
        %v4167 = vpack.c.b16 %v4027, %v4025
        %v4168 = vpack.c.b16 %v4030, %v4028
        %v4169 = vpack.c.b16 %v4031, %v4029
        %v4170 = vpack.c.b16 %v4034, %v4032
        %v4171 = vpack.c.b16 %v4035, %v4033
        %v4172 = vpack.c.b16 %v4038, %v4036
        %v4173 = vpack.c.b16 %v4039, %v4037
        %v4174 = vpack.c.b16 %v4042, %v4040
        %v4175 = vpack.c.b16 %v4043, %v4041
        %v4176 = vpack.c.b16 %v4046, %v4044
        %v4177 = vpack.c.b16 %v4047, %v4045
        %v4178 = vpack.c.b16 %v4050, %v4048
        %v4179 = vpack.c.b16 %v4051, %v4049
        %v4180 = vpack.c.b16 %v4054, %v4052
        %v4181 = vpack.c.b16 %v4055, %v4053
        %v4182 = vpack.c.b16 %v4058, %v4056
        %v4183 = vpack.c.b16 %v4059, %v4057
        %v4184 = vpack.c.b16 %v4062, %v4060
        %v4185 = vpack.c.b16 %v4063, %v4061
        %v4186 = vpack.c.b16 %v4066, %v4064
        %v4187 = vpack.c.b16 %v4067, %v4065
        %v4308 = vsel %vm3535, %v3439, 0
        %v4310 = vsel %vm3535, %v3441, 0
        %v4312 = vsel %vm3535, %v3443, 0
        %v4314 = vsel %vm3535, %v3445, 0
        %v4316 = vsel %vm3535, %v3447, 0
        %v4318 = vsel %vm3535, %v3449, 0
        %v4321 = vsel %vm3535, %v3451, 0
        %v4324 = vsel %vm3535, %v3453, 0
        %4326 = vmatprep.subr.bf16.mxu0 %v4083
        %4327 = vmatpush1.bf16.msra.mxu0 %v4082
        %4328 = vmatprep.subr.bf16.mxu0 %v4081
        %4329 = vmatpush1.bf16.msra.mxu0 %v4080
        %4330 = vmatprep.subr.bf16.mxu0 %v4079
        %4331 = vmatpush1.bf16.msra.mxu0 %v4078
        %4332 = vmatprep.subr.bf16.mxu0 %v4077
        %4333 = vmatpush1.bf16.msra.mxu0 %v4076
        %4334 = vmatprep.subr.bf16.mxu0 %v4075
        %4335 = vmatpush1.bf16.msra.mxu0 %v4074
        %4336 = vmatprep.subr.bf16.mxu0 %v4073
        %4337 = vmatpush1.bf16.msra.mxu0 %v4072
        %4338 = vmatprep.subr.bf16.mxu0 %v4071
        %4339 = vmatpush1.bf16.msra.mxu0 %v4070
        %4340 = vmatprep.subr.bf16.mxu0 %v4069
        %4341 = vmatpush1.bf16.msra.mxu0 %v4068
        %4342 = vmatprep.subr.bf16.mxu0 %v4099
        %4343 = vmatpush2.bf16.msra.mxu0 %v4098
        %4344 = vmatprep.subr.bf16.mxu0 %v4097
        %4345 = vmatpush2.bf16.msra.mxu0 %v4096
        %4346 = vmatprep.subr.bf16.mxu0 %v4095
        %4347 = vmatpush2.bf16.msra.mxu0 %v4094
        %4348 = vmatprep.subr.bf16.mxu0 %v4093
        %4349 = vmatpush2.bf16.msra.mxu0 %v4092
        %4350 = vmatprep.subr.bf16.mxu0 %v4091
        %4351 = vmatpush2.bf16.msra.mxu0 %v4090
        %4352 = vmatprep.subr.bf16.mxu0 %v4089
        %4353 = vmatpush2.bf16.msra.mxu0 %v4088
        %4354 = vmatprep.subr.bf16.mxu0 %v4087
        %4355 = vmatpush2.bf16.msra.mxu0 %v4086
        %4356 = vmatprep.subr.bf16.mxu0 %v4085
        %4357 = vmatpush2.bf16.msra.mxu0 %v4084
        %4358 = vmatprep.mubr.bf16.mxu0 %v3538
        %4359 = vmatmul.mubr.bf16.gmra.mxu0 %v3430
        %v4360 = vpop.f32.mrf.mxu0
        %v4361 = vadd.f32 %v3701, %v4360
        %v4362 = vpop.f32.mrf.mxu0
        %v4363 = vadd.f32 %v3705, %v4362
        %v4364 = vpop.f32.mrf.mxu0
        %v4365 = vadd.f32 %v3701, %v4364
        %v4366 = vpop.f32.mrf.mxu0
        %v4367 = vadd.f32 %v3705, %v4366
        %4368 = vmatprep.mubr.bf16.mxu0 %v3542
        %4369 = vmatmul.mubr.bf16.gmra.mxu0 %v3432
        %v4370 = vpop.f32.mrf.mxu0
        %v4371 = vadd.f32 %v3701, %v4370
        %v4372 = vpop.f32.mrf.mxu0
        %v4373 = vadd.f32 %v3705, %v4372
        %v4374 = vpop.f32.mrf.mxu0
        %v4375 = vadd.f32 %v3701, %v4374
        %v4376 = vpop.f32.mrf.mxu0
        %v4377 = vadd.f32 %v3705, %v4376
        %4378 = vmatprep.mubr.bf16.mxu0 %v3546
        %4379 = vmatmul.mubr.bf16.gmra.mxu0 %v3434
        %v4380 = vpop.f32.mrf.mxu0
        %v4381 = vadd.f32 %v3701, %v4380
        %v4382 = vpop.f32.mrf.mxu0
        %v4383 = vadd.f32 %v3705, %v4382
        %v4384 = vpop.f32.mrf.mxu0
        %v4385 = vadd.f32 %v3701, %v4384
        %v4386 = vpop.f32.mrf.mxu0
        %v4387 = vadd.f32 %v3705, %v4386
        %4388 = vmatprep.mubr.bf16.mxu0 %v3550
        %4389 = vmatmul.mubr.bf16.gmra.mxu0 %v3436
        %v4390 = vpop.f32.mrf.mxu0
        %v4391 = vadd.f32 %v3701, %v4390
        %v4392 = vpop.f32.mrf.mxu0
        %v4393 = vadd.f32 %v3705, %v4392
        %v4394 = vpop.f32.mrf.mxu0
        %v4395 = vadd.f32 %v3701, %v4394
        %v4396 = vpop.f32.mrf.mxu0
        %v4397 = vadd.f32 %v3705, %v4396
        %4398 = vmatprep.mubr.bf16.mxu0 %v3554
        %4399 = vmatmul.mubr.bf16.gmra.mxu0 %v3438
        %v4400 = vpop.f32.mrf.mxu0
        %v4401 = vadd.f32 %v3701, %v4400
        %v4402 = vpop.f32.mrf.mxu0
        %v4403 = vadd.f32 %v3705, %v4402
        %v4404 = vpop.f32.mrf.mxu0
        %v4405 = vadd.f32 %v3701, %v4404
        %v4406 = vpop.f32.mrf.mxu0
        %v4407 = vadd.f32 %v3705, %v4406
        %4408 = vmatprep.mubr.bf16.mxu0 %v3558
        %4409 = vmatmul.mubr.bf16.gmra.mxu0 %v3440
        %v4410 = vpop.f32.mrf.mxu0
        %v4411 = vadd.f32 %v3701, %v4410
        %v4412 = vpop.f32.mrf.mxu0
        %v4413 = vadd.f32 %v3705, %v4412
        %v4414 = vpop.f32.mrf.mxu0
        %v4415 = vadd.f32 %v3701, %v4414
        %v4416 = vpop.f32.mrf.mxu0
        %v4417 = vadd.f32 %v3705, %v4416
        %4418 = vmatprep.mubr.bf16.mxu0 %v3562
        %4419 = vmatmul.mubr.bf16.gmra.mxu0 %v3442
        %v4420 = vpop.f32.mrf.mxu0
        %v4421 = vadd.f32 %v3701, %v4420
        %v4422 = vpop.f32.mrf.mxu0
        %v4423 = vadd.f32 %v3705, %v4422
        %v4424 = vpop.f32.mrf.mxu0
        %v4425 = vadd.f32 %v3701, %v4424
        %v4426 = vpop.f32.mrf.mxu0
        %v4427 = vadd.f32 %v3705, %v4426
        %4428 = vmatprep.mubr.bf16.mxu0 %v3566
        %4429 = vmatmul.mubr.bf16.gmra.mxu0 %v3444
        %v4430 = vpop.f32.mrf.mxu0
        %v4431 = vadd.f32 %v3701, %v4430
        %v4432 = vpop.f32.mrf.mxu0
        %v4433 = vadd.f32 %v3705, %v4432
        %v4434 = vpop.f32.mrf.mxu0
        %v4435 = vadd.f32 %v3701, %v4434
        %v4436 = vpop.f32.mrf.mxu0
        %v4437 = vadd.f32 %v3705, %v4436
        %4438 = vdwg.mxu0
        %4439 = vmatprep.subr.bf16.mxu0 %v4115
        %4440 = vmatpush1.bf16.msra.mxu0 %v4114
        %4441 = vmatprep.subr.bf16.mxu0 %v4113
        %4442 = vmatpush1.bf16.msra.mxu0 %v4112
        %4443 = vmatprep.subr.bf16.mxu0 %v4111
        %4444 = vmatpush1.bf16.msra.mxu0 %v4110
        %4445 = vmatprep.subr.bf16.mxu0 %v4109
        %4446 = vmatpush1.bf16.msra.mxu0 %v4108
        %4447 = vmatprep.subr.bf16.mxu0 %v4107
        %4448 = vmatpush1.bf16.msra.mxu0 %v4106
        %4449 = vmatprep.subr.bf16.mxu0 %v4105
        %4450 = vmatpush1.bf16.msra.mxu0 %v4104
        %4451 = vmatprep.subr.bf16.mxu0 %v4103
        %4452 = vmatpush1.bf16.msra.mxu0 %v4102
        %4453 = vmatprep.subr.bf16.mxu0 %v4101
        %4454 = vmatpush1.bf16.msra.mxu0 %v4100
        %4455 = vmatprep.subr.bf16.mxu0 %v4131
        %4456 = vmatpush2.bf16.msra.mxu0 %v4130
        %4457 = vmatprep.subr.bf16.mxu0 %v4129
        %4458 = vmatpush2.bf16.msra.mxu0 %v4128
        %4459 = vmatprep.subr.bf16.mxu0 %v4127
        %4460 = vmatpush2.bf16.msra.mxu0 %v4126
        %4461 = vmatprep.subr.bf16.mxu0 %v4125
        %4462 = vmatpush2.bf16.msra.mxu0 %v4124
        %4463 = vmatprep.subr.bf16.mxu0 %v4123
        %4464 = vmatpush2.bf16.msra.mxu0 %v4122
        %4465 = vmatprep.subr.bf16.mxu0 %v4121
        %4466 = vmatpush2.bf16.msra.mxu0 %v4120
        %4467 = vmatprep.subr.bf16.mxu0 %v4119
        %4468 = vmatpush2.bf16.msra.mxu0 %v4118
        %4469 = vmatprep.subr.bf16.mxu0 %v4117
        %4470 = vmatpush2.bf16.msra.mxu0 %v4116
        %4471 = vmatprep.mubr.bf16.mxu0 %v3434
        %4472 = vmatmul.mubr.bf16.gmra.mxu0 %v3503
        %v4473 = vpop.f32.mrf.mxu0
        %v4474 = vadd.f32 %v4361, %v4473
        %v4475 = vpop.f32.mrf.mxu0
        %v4476 = vadd.f32 %v4363, %v4475
        %v4477 = vpop.f32.mrf.mxu0
        %v4478 = vadd.f32 %v4365, %v4477
        %v4479 = vpop.f32.mrf.mxu0
        %v4480 = vadd.f32 %v4367, %v4479
        %4481 = vmatprep.mubr.bf16.mxu0 %v3436
        %4482 = vmatmul.mubr.bf16.gmra.mxu0 %v3504
        %v4483 = vpop.f32.mrf.mxu0
        %v4484 = vadd.f32 %v4371, %v4483
        %v4485 = vpop.f32.mrf.mxu0
        %v4486 = vadd.f32 %v4373, %v4485
        %v4487 = vpop.f32.mrf.mxu0
        %v4488 = vadd.f32 %v4375, %v4487
        %v4489 = vpop.f32.mrf.mxu0
        %v4490 = vadd.f32 %v4377, %v4489
        %4491 = vmatprep.mubr.bf16.mxu0 %v3438
        %4492 = vmatmul.mubr.bf16.gmra.mxu0 %v3505
        %v4493 = vpop.f32.mrf.mxu0
        %v4494 = vadd.f32 %v4381, %v4493
        %v4495 = vpop.f32.mrf.mxu0
        %v4496 = vadd.f32 %v4383, %v4495
        %v4497 = vpop.f32.mrf.mxu0
        %v4498 = vadd.f32 %v4385, %v4497
        %v4499 = vpop.f32.mrf.mxu0
        %v4500 = vadd.f32 %v4387, %v4499
        %4501 = vmatprep.mubr.bf16.mxu0 %v3440
        %4502 = vmatmul.mubr.bf16.gmra.mxu0 %v3506
        %v4503 = vpop.f32.mrf.mxu0
        %v4504 = vadd.f32 %v4391, %v4503
        %v4505 = vpop.f32.mrf.mxu0
        %v4506 = vadd.f32 %v4393, %v4505
        %v4507 = vpop.f32.mrf.mxu0
        %v4508 = vadd.f32 %v4395, %v4507
        %v4509 = vpop.f32.mrf.mxu0
        %v4510 = vadd.f32 %v4397, %v4509
        %4511 = vmatprep.mubr.bf16.mxu0 %v3442
        %4512 = vmatmul.mubr.bf16.gmra.mxu0 %v3507
        %v4513 = vpop.f32.mrf.mxu0
        %v4514 = vadd.f32 %v4401, %v4513
        %v4515 = vpop.f32.mrf.mxu0
        %v4516 = vadd.f32 %v4403, %v4515
        %v4517 = vpop.f32.mrf.mxu0
        %v4518 = vadd.f32 %v4405, %v4517
        %v4519 = vpop.f32.mrf.mxu0
        %v4520 = vadd.f32 %v4407, %v4519
        %4521 = vmatprep.mubr.bf16.mxu0 %v3444
        %4522 = vmatmul.mubr.bf16.gmra.mxu0 %v3508
        %v4523 = vpop.f32.mrf.mxu0
        %v4524 = vadd.f32 %v4411, %v4523
        %v4525 = vpop.f32.mrf.mxu0
        %v4526 = vadd.f32 %v4413, %v4525
        %v4527 = vpop.f32.mrf.mxu0
        %v4528 = vadd.f32 %v4415, %v4527
        %v4529 = vpop.f32.mrf.mxu0
        %v4530 = vadd.f32 %v4417, %v4529
        %4531 = vmatprep.mubr.bf16.mxu0 %v3446
        %4532 = vmatmul.mubr.bf16.gmra.mxu0 %v3509
        %v4533 = vpop.f32.mrf.mxu0
        %v4534 = vadd.f32 %v4421, %v4533
        %v4535 = vpop.f32.mrf.mxu0
        %v4536 = vadd.f32 %v4423, %v4535
        %v4537 = vpop.f32.mrf.mxu0
        %v4538 = vadd.f32 %v4425, %v4537
        %v4539 = vpop.f32.mrf.mxu0
        %v4540 = vadd.f32 %v4427, %v4539
        %4541 = vmatprep.mubr.bf16.mxu0 %v3448
        %4542 = vmatmul.mubr.bf16.gmra.mxu0 %v3510
        %v4543 = vpop.f32.mrf.mxu0
        %v4544 = vadd.f32 %v4431, %v4543
        %v4545 = vpop.f32.mrf.mxu0
        %v4546 = vadd.f32 %v4433, %v4545
        %v4547 = vpop.f32.mrf.mxu0
        %v4548 = vadd.f32 %v4435, %v4547
        %v4549 = vpop.f32.mrf.mxu0
        %v4550 = vadd.f32 %v4437, %v4549
        %4551 = vdwg.mxu0
        %4552 = vmatprep.subr.bf16.mxu0 %v4147
        %4553 = vmatpush1.bf16.msra.mxu0 %v4146
        %4554 = vmatprep.subr.bf16.mxu0 %v4145
        %4555 = vmatpush1.bf16.msra.mxu0 %v4144
        %4556 = vmatprep.subr.bf16.mxu0 %v4143
        %4557 = vmatpush1.bf16.msra.mxu0 %v4142
        %4558 = vmatprep.subr.bf16.mxu0 %v4141
        %4559 = vmatpush1.bf16.msra.mxu0 %v4140
        %4560 = vmatprep.subr.bf16.mxu0 %v4139
        %4561 = vmatpush1.bf16.msra.mxu0 %v4138
        %4562 = vmatprep.subr.bf16.mxu0 %v4137
        %4563 = vmatpush1.bf16.msra.mxu0 %v4136
        %4564 = vmatprep.subr.bf16.mxu0 %v4135
        %4565 = vmatpush1.bf16.msra.mxu0 %v4134
        %4566 = vmatprep.subr.bf16.mxu0 %v4133
        %4567 = vmatpush1.bf16.msra.mxu0 %v4132
        %4568 = vmatprep.subr.bf16.mxu0 %v4163
        %4569 = vmatpush2.bf16.msra.mxu0 %v4162
        %4570 = vmatprep.subr.bf16.mxu0 %v4161
        %4571 = vmatpush2.bf16.msra.mxu0 %v4160
        %4572 = vmatprep.subr.bf16.mxu0 %v4159
        %4573 = vmatpush2.bf16.msra.mxu0 %v4158
        %4574 = vmatprep.subr.bf16.mxu0 %v4157
        %4575 = vmatpush2.bf16.msra.mxu0 %v4156
        %4576 = vmatprep.subr.bf16.mxu0 %v4155
        %4577 = vmatpush2.bf16.msra.mxu0 %v4154
        %4578 = vmatprep.subr.bf16.mxu0 %v4153
        %4579 = vmatpush2.bf16.msra.mxu0 %v4152
        %4580 = vmatprep.subr.bf16.mxu0 %v4151
        %4581 = vmatpush2.bf16.msra.mxu0 %v4150
        %4582 = vmatprep.subr.bf16.mxu0 %v4149
        %4583 = vmatpush2.bf16.msra.mxu0 %v4148
        %4584 = vmatprep.mubr.bf16.mxu0 %v3505
        %4585 = vmatmul.mubr.bf16.gmra.mxu0 %v3546
        %v4586 = vpop.f32.mrf.mxu0
        %v4587 = vadd.f32 %v4474, %v4586
        %v4588 = vpop.f32.mrf.mxu0
        %v4589 = vadd.f32 %v4476, %v4588
        %v4590 = vpop.f32.mrf.mxu0
        %v4591 = vadd.f32 %v4478, %v4590
        %v4592 = vpop.f32.mrf.mxu0
        %v4593 = vadd.f32 %v4480, %v4592
        %4594 = vmatprep.mubr.bf16.mxu0 %v3506
        %4595 = vmatmul.mubr.bf16.gmra.mxu0 %v3550
        %v4596 = vpop.f32.mrf.mxu0
        %v4597 = vadd.f32 %v4484, %v4596
        %v4598 = vpop.f32.mrf.mxu0
        %v4599 = vadd.f32 %v4486, %v4598
        %v4600 = vpop.f32.mrf.mxu0
        %v4601 = vadd.f32 %v4488, %v4600
        %v4602 = vpop.f32.mrf.mxu0
        %v4603 = vadd.f32 %v4490, %v4602
        %4604 = vmatprep.mubr.bf16.mxu0 %v3507
        %4605 = vmatmul.mubr.bf16.gmra.mxu0 %v3554
        %v4606 = vpop.f32.mrf.mxu0
        %v4607 = vadd.f32 %v4494, %v4606
        %v4608 = vpop.f32.mrf.mxu0
        %v4609 = vadd.f32 %v4496, %v4608
        %v4610 = vpop.f32.mrf.mxu0
        %v4611 = vadd.f32 %v4498, %v4610
        %v4612 = vpop.f32.mrf.mxu0
        %v4613 = vadd.f32 %v4500, %v4612
        %4614 = vmatprep.mubr.bf16.mxu0 %v3508
        %4615 = vmatmul.mubr.bf16.gmra.mxu0 %v3558
        %v4616 = vpop.f32.mrf.mxu0
        %v4617 = vadd.f32 %v4504, %v4616
        %v4618 = vpop.f32.mrf.mxu0
        %v4619 = vadd.f32 %v4506, %v4618
        %v4620 = vpop.f32.mrf.mxu0
        %v4621 = vadd.f32 %v4508, %v4620
        %v4622 = vpop.f32.mrf.mxu0
        %v4623 = vadd.f32 %v4510, %v4622
        %4624 = vmatprep.mubr.bf16.mxu0 %v3509
        %4625 = vmatmul.mubr.bf16.gmra.mxu0 %v3562
        %v4626 = vpop.f32.mrf.mxu0
        %v4627 = vadd.f32 %v4514, %v4626
        %v4628 = vpop.f32.mrf.mxu0
        %v4629 = vadd.f32 %v4516, %v4628
        %v4630 = vpop.f32.mrf.mxu0
        %v4631 = vadd.f32 %v4518, %v4630
        %v4632 = vpop.f32.mrf.mxu0
        %v4633 = vadd.f32 %v4520, %v4632
        %4634 = vmatprep.mubr.bf16.mxu0 %v3510
        %4635 = vmatmul.mubr.bf16.gmra.mxu0 %v3566
        %v4636 = vpop.f32.mrf.mxu0
        %v4637 = vadd.f32 %v4524, %v4636
        %v4638 = vpop.f32.mrf.mxu0
        %v4639 = vadd.f32 %v4526, %v4638
        %v4640 = vpop.f32.mrf.mxu0
        %v4641 = vadd.f32 %v4528, %v4640
        %v4642 = vpop.f32.mrf.mxu0
        %v4643 = vadd.f32 %v4530, %v4642
        %4644 = vmatprep.mubr.bf16.mxu0 %v3531
        %4645 = vmatmul.mubr.bf16.gmra.mxu0 %v3570
        %v4646 = vpop.f32.mrf.mxu0
        %v4647 = vadd.f32 %v4534, %v4646
        %v4648 = vpop.f32.mrf.mxu0
        %v4649 = vadd.f32 %v4536, %v4648
        %v4650 = vpop.f32.mrf.mxu0
        %v4651 = vadd.f32 %v4538, %v4650
        %v4652 = vpop.f32.mrf.mxu0
        %v4653 = vadd.f32 %v4540, %v4652
        %4654 = vmatprep.mubr.bf16.mxu0 %v3532
        %4655 = vmatmul.mubr.bf16.gmra.mxu0 %v3574
        %v4656 = vpop.f32.mrf.mxu0
        %v4657 = vadd.f32 %v4544, %v4656
        %v4658 = vpop.f32.mrf.mxu0
        %v4659 = vadd.f32 %v4546, %v4658
        %v4660 = vpop.f32.mrf.mxu0
        %v4661 = vadd.f32 %v4548, %v4660
        %v4662 = vpop.f32.mrf.mxu0
        %v4663 = vadd.f32 %v4550, %v4662
        %4664 = vdwg.mxu0
        %4665 = vmatprep.subr.bf16.mxu0 %v4179
        %4666 = vmatpush1.bf16.msra.mxu0 %v4178
        %4667 = vmatprep.subr.bf16.mxu0 %v4177
        %4668 = vmatpush1.bf16.msra.mxu0 %v4176
        %4669 = vmatprep.subr.bf16.mxu0 %v4175
        %4670 = vmatpush1.bf16.msra.mxu0 %v4174
        %4671 = vmatprep.subr.bf16.mxu0 %v4173
        %4672 = vmatpush1.bf16.msra.mxu0 %v4172
        %4673 = vmatprep.subr.bf16.mxu0 %v4171
        %4674 = vmatpush1.bf16.msra.mxu0 %v4170
        %4675 = vmatprep.subr.bf16.mxu0 %v4169
        %4676 = vmatpush1.bf16.msra.mxu0 %v4168
        %4677 = vmatprep.subr.bf16.mxu0 %v4167
        %4678 = vmatpush1.bf16.msra.mxu0 %v4166
        %4679 = vmatprep.subr.bf16.mxu0 %v4165
        %4680 = vmatpush1.bf16.msra.mxu0 %v4164
        %4681 = vmatprep.subr.bf16.mxu0 0
        %4682 = vmatpush2.bf16.msra.mxu0 0
        %4683 = vmatprep.subr.bf16.mxu0 0
        %4684 = vmatpush2.bf16.msra.mxu0 0
        %4685 = vmatprep.subr.bf16.mxu0 0
        %4686 = vmatpush2.bf16.msra.mxu0 0
        %4687 = vmatprep.subr.bf16.mxu0 0
        %4688 = vmatpush2.bf16.msra.mxu0 0
        %4689 = vmatprep.subr.bf16.mxu0 %v4187
        %4690 = vmatpush2.bf16.msra.mxu0 %v4186
        %4691 = vmatprep.subr.bf16.mxu0 %v4185
        %4692 = vmatpush2.bf16.msra.mxu0 %v4184
        %4693 = vmatprep.subr.bf16.mxu0 %v4183
        %4694 = vmatpush2.bf16.msra.mxu0 %v4182
        %4695 = vmatprep.subr.bf16.mxu0 %v4181
        %4696 = vmatpush2.bf16.msra.mxu0 %v4180
        %4697 = vmatprep.mubr.bf16.mxu0 %v4308
        %4698 = vmatmul.mubr.bf16.gmra.mxu0 %v3438
        %v4699 = vpop.f32.mrf.mxu0
        %v4700 = vadd.f32 %v4587, %v4699
        %v4701 = vpop.f32.mrf.mxu0
        %v4702 = vadd.f32 %v4589, %v4701
        %v4703 = vpop.f32.mrf.mxu0
        %v4704 = vadd.f32 %v4591, %v4703
        %v4705 = vpop.f32.mrf.mxu0
        %v4706 = vadd.f32 %v4593, %v4705
        %4707 = vmatprep.mubr.bf16.mxu0 %v4310
        %4708 = vmatmul.mubr.bf16.gmra.mxu0 %v3440
        %v4709 = vpop.f32.mrf.mxu0
        %v4710 = vadd.f32 %v4597, %v4709
        %v4711 = vpop.f32.mrf.mxu0
        %v4712 = vadd.f32 %v4599, %v4711
        %v4713 = vpop.f32.mrf.mxu0
        %v4714 = vadd.f32 %v4601, %v4713
        %v4715 = vpop.f32.mrf.mxu0
        %v4716 = vadd.f32 %v4603, %v4715
        %4717 = vmatprep.mubr.bf16.mxu0 %v4312
        %4718 = vmatmul.mubr.bf16.gmra.mxu0 %v3442
        %v4719 = vpop.f32.mrf.mxu0
        %v4720 = vadd.f32 %v4607, %v4719
        %v4721 = vpop.f32.mrf.mxu0
        %v4722 = vadd.f32 %v4609, %v4721
        %v4723 = vpop.f32.mrf.mxu0
        %v4724 = vadd.f32 %v4611, %v4723
        %v4725 = vpop.f32.mrf.mxu0
        %v4726 = vadd.f32 %v4613, %v4725
        %4727 = vmatprep.mubr.bf16.mxu0 %v4314
        %4728 = vmatmul.mubr.bf16.gmra.mxu0 %v3444
        %v4729 = vpop.f32.mrf.mxu0
        %v4730 = vadd.f32 %v4617, %v4729
        %v4731 = vpop.f32.mrf.mxu0
        %v4732 = vadd.f32 %v4619, %v4731
        %v4733 = vpop.f32.mrf.mxu0
        %v4734 = vadd.f32 %v4621, %v4733
        %v4735 = vpop.f32.mrf.mxu0
        %v4736 = vadd.f32 %v4623, %v4735
        %4737 = vmatprep.mubr.bf16.mxu0 %v4316
        %4738 = vmatmul.mubr.bf16.gmra.mxu0 %v3446
        %v4739 = vpop.f32.mrf.mxu0
        %v4740 = vadd.f32 %v4627, %v4739
        %v4741 = vpop.f32.mrf.mxu0
        %v4742 = vadd.f32 %v4629, %v4741
        %v4743 = vpop.f32.mrf.mxu0
        %v4744 = vadd.f32 %v4631, %v4743
        %v4745 = vpop.f32.mrf.mxu0
        %v4746 = vadd.f32 %v4633, %v4745
        %4747 = vmatprep.mubr.bf16.mxu0 %v4318
        %4748 = vmatmul.mubr.bf16.gmra.mxu0 %v3448
        %v4749 = vpop.f32.mrf.mxu0
        %v4750 = vadd.f32 %v4637, %v4749
        %v4751 = vpop.f32.mrf.mxu0
        %v4752 = vadd.f32 %v4639, %v4751
        %v4753 = vpop.f32.mrf.mxu0
        %v4754 = vadd.f32 %v4641, %v4753
        %v4755 = vpop.f32.mrf.mxu0
        %v4756 = vadd.f32 %v4643, %v4755
        %4757 = vmatprep.mubr.bf16.mxu0 %v4321
        %4758 = vmatmul.mubr.bf16.gmra.mxu0 %v3450
        %v4759 = vpop.f32.mrf.mxu0
        %v4760 = vadd.f32 %v4647, %v4759
        %v4761 = vpop.f32.mrf.mxu0
        %v4762 = vadd.f32 %v4649, %v4761
        %v4763 = vpop.f32.mrf.mxu0
        %v4764 = vadd.f32 %v4651, %v4763
        %v4765 = vpop.f32.mrf.mxu0
        %v4766 = vadd.f32 %v4653, %v4765
        %4767 = vmatprep.mubr.bf16.mxu0 %v4324
        %4768 = vmatmul.mubr.bf16.gmra.mxu0 %v3452
        %v4769 = vpop.f32.mrf.mxu0
        %v4770 = vadd.f32 %v4657, %v4769
        %v4771 = vpop.f32.mrf.mxu0
        %v4772 = vadd.f32 %v4659, %v4771
        %v4773 = vpop.f32.mrf.mxu0
        %v4774 = vadd.f32 %v4661, %v4773
        %v4775 = vpop.f32.mrf.mxu0
        %v4776 = vadd.f32 %v4663, %v4775
        %4777 = vdwg.mxu0
        %v4778 = vmax.f32 %v4700, %v4710
        %v4779 = vmax.f32 %v4702, %v4712
        %v4780 = vmax.f32 %v4704, %v4714
        %v4781 = vmax.f32 %v4706, %v4716
        %v4782 = vmax.f32 %v4720, %v4730
        %v4783 = vmax.f32 %v4722, %v4732
        %v4784 = vmax.f32 %v4724, %v4734
        %v4785 = vmax.f32 %v4726, %v4736
        %v4786 = vmax.f32 %v4740, %v4750
        %v4787 = vmax.f32 %v4742, %v4752
        %v4788 = vmax.f32 %v4744, %v4754
        %v4789 = vmax.f32 %v4746, %v4756
        %v4790 = vmax.f32 %v4760, %v4770
        %v4791 = vmax.f32 %v4762, %v4772
        %v4792 = vmax.f32 %v4764, %v4774
        %v4793 = vmax.f32 %v4766, %v4776
        %v4794 = vpack.c.bf16 %v4780, %v4778
        %v4795 = vpack.c.bf16 %v4781, %v4779
        %v4796 = vpack.c.bf16 %v4784, %v4782
        %v4797 = vpack.c.bf16 %v4785, %v4783
        %v4798 = vpack.c.bf16 %v4788, %v4786
        %v4799 = vpack.c.bf16 %v4789, %v4787
        %v4800 = vpack.c.bf16 %v4792, %v4790
        %v4801 = vpack.c.bf16 %v4793, %v4791
        %v4802 = vld [vmem:[%s6] sm:$0xf]
        %v4803 = vld [vmem:[%s6 + $0x4] sm:$0xf]
        %v4804 = vld [vmem:[%s6 + $0x8] sm:$0xf]
        %v4805 = vld [vmem:[%s6 + $0xc] sm:$0xf]
        %v4806 = vld [vmem:[%s6 + $0x10] sm:$0xf]
        %v4807 = vld [vmem:[%s6 + $0x14] sm:$0xf]
        %v4808 = vld [vmem:[%s6 + $0x18] sm:$0xf]
        %v4809 = vld [vmem:[%s6 + $0x1c] sm:$0xf]
        %v4810 = vld [vmem:[%s6 + $0x20] sm:$0xf]
        %v4811 = vld [vmem:[%s6 + $0x24] sm:$0xf]
        %v4812 = vld [vmem:[%s6 + $0x28] sm:$0xf]
        %v4813 = vld [vmem:[%s6 + $0x2c] sm:$0xf]
        %v4814 = vld [vmem:[%s6 + $0x30] sm:$0xf]
        %v4815 = vld [vmem:[%s6 + $0x34] sm:$0xf]
        %v4816 = vld [vmem:[%s6 + $0x38] sm:$0xf]
        %v4817 = vld [vmem:[%s6 + $0x3c] sm:$0xf]
        %v4818 = vld [vmem:[%s6 + $0x40] sm:$0xf]
        %v4819 = vld [vmem:[%s6 + $0x44] sm:$0xf]
        %v4820 = vld [vmem:[%s6 + $0x48] sm:$0xf]
        %v4821 = vld [vmem:[%s6 + $0x4c] sm:$0xf]
        %v4822 = vld [vmem:[%s6 + $0x50] sm:$0xf]
        %v4823 = vld [vmem:[%s6 + $0x54] sm:$0xf]
        %v4824 = vld [vmem:[%s6 + $0x58] sm:$0xf]
        %v4825 = vld [vmem:[%s6 + $0x5c] sm:$0xf]
        %v4826 = vld [vmem:[%s6 + $0x60] sm:$0xf]
        %v4827 = vld [vmem:[%s6 + $0x64] sm:$0xf]
        %v4828 = vld [vmem:[%s6 + $0x68] sm:$0xf]
        %v4829 = vld [vmem:[%s6 + $0x6c] sm:$0xf]
        %v4830 = vld [vmem:[%s6 + $0x70] sm:$0xf]
        %v4831 = vld [vmem:[%s6 + $0x74] sm:$0xf]
        %v4832 = vld [vmem:[%s6 + $0x78] sm:$0xf]
        %v4833 = vld [vmem:[%s6 + $0x7c] sm:$0xf]
        %v4866 = vunpack.c.l.b16 %v4802
        %v4867 = vunpack.c.l.b16 %v4803
        %v4868 = vunpack.c.l.b16 %v4804
        %v4869 = vunpack.c.l.b16 %v4805
        %v4870 = vunpack.c.l.b16 %v4806
        %v4871 = vunpack.c.l.b16 %v4807
        %v4872 = vunpack.c.l.b16 %v4808
        %v4873 = vunpack.c.l.b16 %v4809
        %v4874 = vunpack.c.l.b16 %v4810
        %v4875 = vunpack.c.l.b16 %v4811
        %v4876 = vunpack.c.l.b16 %v4812
        %v4877 = vunpack.c.l.b16 %v4813
        %v4878 = vunpack.c.l.b16 %v4814
        %v4879 = vunpack.c.l.b16 %v4815
        %v4880 = vunpack.c.l.b16 %v4816
        %v4881 = vunpack.c.l.b16 %v4817
        %v4882 = vunpack.c.l.b16 %v4818
        %v4883 = vunpack.c.l.b16 %v4819
        %v4884 = vunpack.c.l.b16 %v4820
        %v4885 = vunpack.c.l.b16 %v4821
        %v4886 = vunpack.c.l.b16 %v4822
        %v4887 = vunpack.c.l.b16 %v4823
        %v4888 = vunpack.c.l.b16 %v4824
        %v4889 = vunpack.c.l.b16 %v4825
        %v4890 = vunpack.c.l.b16 %v4826
        %v4891 = vunpack.c.l.b16 %v4827
        %v4892 = vunpack.c.l.b16 %v4828
        %v4893 = vunpack.c.l.b16 %v4829
        %v4894 = vunpack.c.l.b16 %v4830
        %v4895 = vunpack.c.l.b16 %v4831
        %v4896 = vunpack.c.l.b16 %v4832
        %v4897 = vunpack.c.l.b16 %v4833
        %v4898 = vpack.c.b16 %v4867, %v4866
        %v4899 = vpack.c.b16 %v4869, %v4868
        %v4900 = vpack.c.b16 %v4871, %v4870
        %v4901 = vpack.c.b16 %v4873, %v4872
        %v4902 = vpack.c.b16 %v4875, %v4874
        %v4903 = vpack.c.b16 %v4877, %v4876
        %v4904 = vpack.c.b16 %v4879, %v4878
        %v4905 = vpack.c.b16 %v4881, %v4880
        %v4906 = vpack.c.b16 %v4883, %v4882
        %v4907 = vpack.c.b16 %v4885, %v4884
        %v4908 = vpack.c.b16 %v4887, %v4886
        %v4909 = vpack.c.b16 %v4889, %v4888
        %v4910 = vpack.c.b16 %v4891, %v4890
        %v4911 = vpack.c.b16 %v4893, %v4892
        %v4912 = vpack.c.b16 %v4895, %v4894
        %v4913 = vpack.c.b16 %v4897, %v4896
        %4930 = vmatprep.subr.bf16.mxu0 0
        %4931 = vmatpush1.bf16.msra.mxu0 %v4905
        %4932 = vmatprep.subr.bf16.mxu0 0
        %4933 = vmatpush1.bf16.msra.mxu0 %v4904
        %4934 = vmatprep.subr.bf16.mxu0 0
        %4935 = vmatpush1.bf16.msra.mxu0 %v4903
        %4936 = vmatprep.subr.bf16.mxu0 0
        %4937 = vmatpush1.bf16.msra.mxu0 %v4902
        %4938 = vmatprep.subr.bf16.mxu0 0
        %4939 = vmatpush1.bf16.msra.mxu0 %v4901
        %4940 = vmatprep.subr.bf16.mxu0 0
        %4941 = vmatpush1.bf16.msra.mxu0 %v4900
        %4942 = vmatprep.subr.bf16.mxu0 0
        %4943 = vmatpush1.bf16.msra.mxu0 %v4899
        %4944 = vmatprep.subr.bf16.mxu0 0
        %4945 = vmatpush1.bf16.msra.mxu0 %v4898
        %4946 = vmatprep.subr.bf16.mxu0 0
        %4947 = vmatpush2.bf16.msra.mxu0 %v4913
        %4948 = vmatprep.subr.bf16.mxu0 0
        %4949 = vmatpush2.bf16.msra.mxu0 %v4912
        %4950 = vmatprep.subr.bf16.mxu0 0
        %4951 = vmatpush2.bf16.msra.mxu0 %v4911
        %4952 = vmatprep.subr.bf16.mxu0 0
        %4953 = vmatpush2.bf16.msra.mxu0 %v4910
        %4954 = vmatprep.subr.bf16.mxu0 0
        %4955 = vmatpush2.bf16.msra.mxu0 %v4909
        %4956 = vmatprep.subr.bf16.mxu0 0
        %4957 = vmatpush2.bf16.msra.mxu0 %v4908
        %4958 = vmatprep.subr.bf16.mxu0 0
        %4959 = vmatpush2.bf16.msra.mxu0 %v4907
        %4960 = vmatprep.subr.bf16.mxu0 0
        %4961 = vmatpush2.bf16.msra.mxu0 %v4906
        %4962 = vmatprep.mubr.bf16.mxu0 %v4795
        %4963 = vmatmul.mubr.bf16.gmra.mxu0 %v4794
        %v4964 = vpop.f32.mrf.mxu0
        %v4965 = vadd.f32 0.0, %v4964
        %v4966 = vpop.f32.mrf.mxu0
        %v4967 = vpop.f32.mrf.mxu0
        %v4968 = vadd.f32 0.0, %v4967
        %v4969 = vpop.f32.mrf.mxu0
        %4970 = vmatprep.mubr.bf16.mxu0 %v4797
        %4971 = vmatmul.mubr.bf16.gmra.mxu0 %v4796
        %v4972 = vpop.f32.mrf.mxu0
        %v4973 = vadd.f32 0.0, %v4972
        %v4974 = vpop.f32.mrf.mxu0
        %v4975 = vpop.f32.mrf.mxu0
        %v4976 = vadd.f32 0.0, %v4975
        %v4977 = vpop.f32.mrf.mxu0
        %4978 = vmatprep.mubr.bf16.mxu0 %v4799
        %4979 = vmatmul.mubr.bf16.gmra.mxu0 %v4798
        %v4980 = vpop.f32.mrf.mxu0
        %v4981 = vadd.f32 0.0, %v4980
        %v4982 = vpop.f32.mrf.mxu0
        %v4983 = vpop.f32.mrf.mxu0
        %v4984 = vadd.f32 0.0, %v4983
        %v4985 = vpop.f32.mrf.mxu0
        %4986 = vmatprep.mubr.bf16.mxu0 %v4801
        %4987 = vmatmul.mubr.bf16.gmra.mxu0 %v4800
        %v4988 = vpop.f32.mrf.mxu0
        %v4989 = vadd.f32 0.0, %v4988
        %v4990 = vpop.f32.mrf.mxu0
        %v4991 = vpop.f32.mrf.mxu0
        %v4992 = vadd.f32 0.0, %v4991
        %v4993 = vpop.f32.mrf.mxu0
        %4994 = vdwg.mxu0
        %s4995 = scalar_lea.vmem %s6, 128
        %v4996 = vld [vmem:[%s4995] sm:$0xf]
        %v4997 = vld [vmem:[%s4995 + $0x4] sm:$0xf]
        %v4998 = vld [vmem:[%s4995 + $0x8] sm:$0xf]
        %v4999 = vld [vmem:[%s4995 + $0xc] sm:$0xf]
        %v5000 = vld [vmem:[%s4995 + $0x10] sm:$0xf]
        %v5001 = vld [vmem:[%s4995 + $0x14] sm:$0xf]
        %v5002 = vld [vmem:[%s4995 + $0x18] sm:$0xf]
        %v5003 = vld [vmem:[%s4995 + $0x1c] sm:$0xf]
        %v5004 = vld [vmem:[%s4995 + $0x20] sm:$0xf]
        %v5005 = vld [vmem:[%s4995 + $0x24] sm:$0xf]
        %v5006 = vld [vmem:[%s4995 + $0x28] sm:$0xf]
        %v5007 = vld [vmem:[%s4995 + $0x2c] sm:$0xf]
        %v5008 = vld [vmem:[%s4995 + $0x30] sm:$0xf]
        %v5009 = vld [vmem:[%s4995 + $0x34] sm:$0xf]
        %v5010 = vld [vmem:[%s4995 + $0x38] sm:$0xf]
        %v5011 = vld [vmem:[%s4995 + $0x3c] sm:$0xf]
        %v5012 = vld [vmem:[%s4995 + $0x40] sm:$0xf]
        %v5013 = vld [vmem:[%s4995 + $0x44] sm:$0xf]
        %v5014 = vld [vmem:[%s4995 + $0x48] sm:$0xf]
        %v5015 = vld [vmem:[%s4995 + $0x4c] sm:$0xf]
        %v5016 = vld [vmem:[%s4995 + $0x50] sm:$0xf]
        %v5017 = vld [vmem:[%s4995 + $0x54] sm:$0xf]
        %v5018 = vld [vmem:[%s4995 + $0x58] sm:$0xf]
        %v5019 = vld [vmem:[%s4995 + $0x5c] sm:$0xf]
        %v5020 = vld [vmem:[%s4995 + $0x60] sm:$0xf]
        %v5021 = vld [vmem:[%s4995 + $0x64] sm:$0xf]
        %v5022 = vld [vmem:[%s4995 + $0x68] sm:$0xf]
        %v5023 = vld [vmem:[%s4995 + $0x6c] sm:$0xf]
        %v5024 = vld [vmem:[%s4995 + $0x70] sm:$0xf]
        %v5025 = vld [vmem:[%s4995 + $0x74] sm:$0xf]
        %v5026 = vld [vmem:[%s4995 + $0x78] sm:$0xf]
        %v5027 = vld [vmem:[%s4995 + $0x7c] sm:$0xf]
        %v5060 = vunpack.c.l.b16 %v4996
        %v5061 = vunpack.c.l.b16 %v4997
        %v5062 = vunpack.c.l.b16 %v4998
        %v5063 = vunpack.c.l.b16 %v4999
        %v5064 = vunpack.c.l.b16 %v5000
        %v5065 = vunpack.c.l.b16 %v5001
        %v5066 = vunpack.c.l.b16 %v5002
        %v5067 = vunpack.c.l.b16 %v5003
        %v5068 = vunpack.c.l.b16 %v5004
        %v5069 = vunpack.c.l.b16 %v5005
        %v5070 = vunpack.c.l.b16 %v5006
        %v5071 = vunpack.c.l.b16 %v5007
        %v5072 = vunpack.c.l.b16 %v5008
        %v5073 = vunpack.c.l.b16 %v5009
        %v5074 = vunpack.c.l.b16 %v5010
        %v5075 = vunpack.c.l.b16 %v5011
        %v5076 = vunpack.c.l.b16 %v5012
        %v5077 = vunpack.c.l.b16 %v5013
        %v5078 = vunpack.c.l.b16 %v5014
        %v5079 = vunpack.c.l.b16 %v5015
        %v5080 = vunpack.c.l.b16 %v5016
        %v5081 = vunpack.c.l.b16 %v5017
        %v5082 = vunpack.c.l.b16 %v5018
        %v5083 = vunpack.c.l.b16 %v5019
        %v5084 = vunpack.c.l.b16 %v5020
        %v5085 = vunpack.c.l.b16 %v5021
        %v5086 = vunpack.c.l.b16 %v5022
        %v5087 = vunpack.c.l.b16 %v5023
        %v5088 = vunpack.c.l.b16 %v5024
        %v5089 = vunpack.c.l.b16 %v5025
        %v5090 = vunpack.c.l.b16 %v5026
        %v5091 = vunpack.c.l.b16 %v5027
        %v5092 = vpack.c.b16 %v5061, %v5060
        %v5093 = vpack.c.b16 %v5063, %v5062
        %v5094 = vpack.c.b16 %v5065, %v5064
        %v5095 = vpack.c.b16 %v5067, %v5066
        %v5096 = vpack.c.b16 %v5069, %v5068
        %v5097 = vpack.c.b16 %v5071, %v5070
        %v5098 = vpack.c.b16 %v5073, %v5072
        %v5099 = vpack.c.b16 %v5075, %v5074
        %v5100 = vpack.c.b16 %v5077, %v5076
        %v5101 = vpack.c.b16 %v5079, %v5078
        %v5102 = vpack.c.b16 %v5081, %v5080
        %v5103 = vpack.c.b16 %v5083, %v5082
        %v5104 = vpack.c.b16 %v5085, %v5084
        %v5105 = vpack.c.b16 %v5087, %v5086
        %v5106 = vpack.c.b16 %v5089, %v5088
        %v5107 = vpack.c.b16 %v5091, %v5090
        %5124 = vmatprep.subr.bf16.mxu0 0
        %5125 = vmatpush1.bf16.msra.mxu0 %v5099
        %5126 = vmatprep.subr.bf16.mxu0 0
        %5127 = vmatpush1.bf16.msra.mxu0 %v5098
        %5128 = vmatprep.subr.bf16.mxu0 0
        %5129 = vmatpush1.bf16.msra.mxu0 %v5097
        %5130 = vmatprep.subr.bf16.mxu0 0
        %5131 = vmatpush1.bf16.msra.mxu0 %v5096
        %5132 = vmatprep.subr.bf16.mxu0 0
        %5133 = vmatpush1.bf16.msra.mxu0 %v5095
        %5134 = vmatprep.subr.bf16.mxu0 0
        %5135 = vmatpush1.bf16.msra.mxu0 %v5094
        %5136 = vmatprep.subr.bf16.mxu0 0
        %5137 = vmatpush1.bf16.msra.mxu0 %v5093
        %5138 = vmatprep.subr.bf16.mxu0 0
        %5139 = vmatpush1.bf16.msra.mxu0 %v5092
        %5140 = vmatprep.subr.bf16.mxu0 0
        %5141 = vmatpush2.bf16.msra.mxu0 %v5107
        %5142 = vmatprep.subr.bf16.mxu0 0
        %5143 = vmatpush2.bf16.msra.mxu0 %v5106
        %5144 = vmatprep.subr.bf16.mxu0 0
        %5145 = vmatpush2.bf16.msra.mxu0 %v5105
        %5146 = vmatprep.subr.bf16.mxu0 0
        %5147 = vmatpush2.bf16.msra.mxu0 %v5104
        %5148 = vmatprep.subr.bf16.mxu0 0
        %5149 = vmatpush2.bf16.msra.mxu0 %v5103
        %5150 = vmatprep.subr.bf16.mxu0 0
        %5151 = vmatpush2.bf16.msra.mxu0 %v5102
        %5152 = vmatprep.subr.bf16.mxu0 0
        %5153 = vmatpush2.bf16.msra.mxu0 %v5101
        %5154 = vmatprep.subr.bf16.mxu0 0
        %5155 = vmatpush2.bf16.msra.mxu0 %v5100
        %5156 = vmatprep.mubr.bf16.mxu0 %v4795
        %5157 = vmatmul.mubr.bf16.gmra.mxu0 %v4794
        %v5158 = vpop.f32.mrf.mxu0
        %v5159 = vadd.f32 0.0, %v5158
        %v5160 = vpop.f32.mrf.mxu0
        %v5161 = vpop.f32.mrf.mxu0
        %v5162 = vadd.f32 0.0, %v5161
        %v5163 = vpop.f32.mrf.mxu0
        %5164 = vmatprep.mubr.bf16.mxu0 %v4797
        %5165 = vmatmul.mubr.bf16.gmra.mxu0 %v4796
        %v5166 = vpop.f32.mrf.mxu0
        %v5167 = vadd.f32 0.0, %v5166
        %v5168 = vpop.f32.mrf.mxu0
        %v5169 = vpop.f32.mrf.mxu0
        %v5170 = vadd.f32 0.0, %v5169
        %v5171 = vpop.f32.mrf.mxu0
        %5172 = vmatprep.mubr.bf16.mxu0 %v4799
        %5173 = vmatmul.mubr.bf16.gmra.mxu0 %v4798
        %v5174 = vpop.f32.mrf.mxu0
        %v5175 = vadd.f32 0.0, %v5174
        %v5176 = vpop.f32.mrf.mxu0
        %v5177 = vpop.f32.mrf.mxu0
        %v5178 = vadd.f32 0.0, %v5177
        %v5179 = vpop.f32.mrf.mxu0
        %5180 = vmatprep.mubr.bf16.mxu0 %v4801
        %5181 = vmatmul.mubr.bf16.gmra.mxu0 %v4800
        %v5182 = vpop.f32.mrf.mxu0
        %v5183 = vadd.f32 0.0, %v5182
        %v5184 = vpop.f32.mrf.mxu0
        %v5185 = vpop.f32.mrf.mxu0
        %v5186 = vadd.f32 0.0, %v5185
        %v5187 = vpop.f32.mrf.mxu0
        %5188 = vdwg.mxu0
        %v5189 = vmax.f32 %v4965, %v5159
        %v5190 = vmax.f32 %v4968, %v5162
        %v5191 = vmax.f32 %v4973, %v5167
        %v5192 = vmax.f32 %v4976, %v5170
        %v5193 = vmax.f32 %v4981, %v5175
        %v5194 = vmax.f32 %v4984, %v5178
        %v5195 = vmax.f32 %v4989, %v5183
        %v5196 = vmax.f32 %v4992, %v5186
        %v5197 = vmax.f32 %v5189, 0.0
        %v5198 = vmax.f32 %v5190, 0.0
        %v5199 = vmax.f32 %v5191, 0.0
        %v5200 = vmax.f32 %v5192, 0.0
        %v5201 = vmax.f32 %v5193, 0.0
        %v5202 = vmax.f32 %v5194, 0.0
        %v5203 = vmax.f32 %v5195, 0.0
        %v5204 = vmax.f32 %v5196, 0.0
        %v5205 = vpack.c.bf16 %v5198, %v5197
        %v5206 = vpack.c.bf16 %v5200, %v5199
        %v5207 = vpack.c.bf16 %v5202, %v5201
        %v5208 = vpack.c.bf16 %v5204, %v5203
        %v5209 = vld [vmem:[%s7] sm:$0xf]
        %v5210 = vld [vmem:[%s7 + $0x4] sm:$0xf]
        %v5211 = vld [vmem:[%s7 + $0x8] sm:$0xf]
        %v5212 = vld [vmem:[%s7 + $0xc] sm:$0xf]
        %v5213 = vld [vmem:[%s7 + $0x10] sm:$0xf]
        %v5214 = vld [vmem:[%s7 + $0x14] sm:$0xf]
        %v5215 = vld [vmem:[%s7 + $0x18] sm:$0xf]
        %v5216 = vld [vmem:[%s7 + $0x1c] sm:$0xf]
        %v5217 = vld [vmem:[%s7 + $0x20] sm:$0xf]
        %v5218 = vld [vmem:[%s7 + $0x24] sm:$0xf]
        %v5219 = vld [vmem:[%s7 + $0x28] sm:$0xf]
        %v5220 = vld [vmem:[%s7 + $0x2c] sm:$0xf]
        %v5221 = vld [vmem:[%s7 + $0x30] sm:$0xf]
        %v5222 = vld [vmem:[%s7 + $0x34] sm:$0xf]
        %v5223 = vld [vmem:[%s7 + $0x38] sm:$0xf]
        %v5224 = vld [vmem:[%s7 + $0x3c] sm:$0xf]
        %v5225 = vld [vmem:[%s7 + $0x40] sm:$0xf]
        %v5226 = vld [vmem:[%s7 + $0x44] sm:$0xf]
        %v5227 = vld [vmem:[%s7 + $0x48] sm:$0xf]
        %v5228 = vld [vmem:[%s7 + $0x4c] sm:$0xf]
        %v5229 = vld [vmem:[%s7 + $0x50] sm:$0xf]
        %v5230 = vld [vmem:[%s7 + $0x54] sm:$0xf]
        %v5231 = vld [vmem:[%s7 + $0x58] sm:$0xf]
        %v5232 = vld [vmem:[%s7 + $0x5c] sm:$0xf]
        %v5233 = vld [vmem:[%s7 + $0x60] sm:$0xf]
        %v5234 = vld [vmem:[%s7 + $0x64] sm:$0xf]
        %v5235 = vld [vmem:[%s7 + $0x68] sm:$0xf]
        %v5236 = vld [vmem:[%s7 + $0x6c] sm:$0xf]
        %v5237 = vld [vmem:[%s7 + $0x70] sm:$0xf]
        %v5238 = vld [vmem:[%s7 + $0x74] sm:$0xf]
        %v5239 = vld [vmem:[%s7 + $0x78] sm:$0xf]
        %v5240 = vld [vmem:[%s7 + $0x7c] sm:$0xf]
        %v5241 = vld [vmem:[%s7 + $0x80] sm:$0xf]
        %v5242 = vld [vmem:[%s7 + $0x84] sm:$0xf]
        %v5243 = vld [vmem:[%s7 + $0x88] sm:$0xf]
        %v5244 = vld [vmem:[%s7 + $0x8c] sm:$0xf]
        %v5245 = vld [vmem:[%s7 + $0x90] sm:$0xf]
        %v5246 = vld [vmem:[%s7 + $0x94] sm:$0xf]
        %v5247 = vld [vmem:[%s7 + $0x98] sm:$0xf]
        %v5248 = vld [vmem:[%s7 + $0x9c] sm:$0xf]
        %v5249 = vld [vmem:[%s7 + $0xa0] sm:$0xf]
        %v5250 = vld [vmem:[%s7 + $0xa4] sm:$0xf]
        %v5251 = vld [vmem:[%s7 + $0xa8] sm:$0xf]
        %v5252 = vld [vmem:[%s7 + $0xac] sm:$0xf]
        %v5253 = vld [vmem:[%s7 + $0xb0] sm:$0xf]
        %v5254 = vld [vmem:[%s7 + $0xb4] sm:$0xf]
        %v5255 = vld [vmem:[%s7 + $0xb8] sm:$0xf]
        %v5256 = vld [vmem:[%s7 + $0xbc] sm:$0xf]
        %v5257 = vld [vmem:[%s7 + $0xc0] sm:$0xf]
        %v5258 = vld [vmem:[%s7 + $0xc4] sm:$0xf]
        %v5259 = vld [vmem:[%s7 + $0xc8] sm:$0xf]
        %v5260 = vld [vmem:[%s7 + $0xcc] sm:$0xf]
        %v5261 = vld [vmem:[%s7 + $0xd0] sm:$0xf]
        %v5262 = vld [vmem:[%s7 + $0xd4] sm:$0xf]
        %v5263 = vld [vmem:[%s7 + $0xd8] sm:$0xf]
        %v5264 = vld [vmem:[%s7 + $0xdc] sm:$0xf]
        %v5265 = vld [vmem:[%s7 + $0xe0] sm:$0xf]
        %v5266 = vld [vmem:[%s7 + $0xe4] sm:$0xf]
        %v5267 = vld [vmem:[%s7 + $0xe8] sm:$0xf]
        %v5268 = vld [vmem:[%s7 + $0xec] sm:$0xf]
        %v5269 = vld [vmem:[%s7 + $0xf0] sm:$0xf]
        %v5270 = vld [vmem:[%s7 + $0xf4] sm:$0xf]
        %v5271 = vld [vmem:[%s7 + $0xf8] sm:$0xf]
        %v5272 = vld [vmem:[%s7 + $0xfc] sm:$0xf]
        %v5273 = vld [vmem:[%s8] sm:$0x1]
        %v5275 = vlaneseq
        %v5276 = vshrl.u32 %v5275, 7
        %v5277 = vsub.s32 0, %v5276
        %v5278 = vrot.slane %v5273, %v5277
        %v5344 = vunpack.c.l.b16 %v5209
        %v5345 = vunpack.c.l.b16 %v5210
        %v5346 = vunpack.c.l.b16 %v5211
        %v5347 = vunpack.c.l.b16 %v5212
        %v5348 = vunpack.c.l.b16 %v5213
        %v5349 = vunpack.c.l.b16 %v5214
        %v5350 = vunpack.c.l.b16 %v5215
        %v5351 = vunpack.c.l.b16 %v5216
        %v5352 = vunpack.c.l.b16 %v5217
        %v5353 = vunpack.c.l.b16 %v5218
        %v5354 = vunpack.c.l.b16 %v5219
        %v5355 = vunpack.c.l.b16 %v5220
        %v5356 = vunpack.c.l.b16 %v5221
        %v5357 = vunpack.c.l.b16 %v5222
        %v5358 = vunpack.c.l.b16 %v5223
        %v5359 = vunpack.c.l.b16 %v5224
        %v5360 = vunpack.c.l.b16 %v5225
        %v5361 = vunpack.c.l.b16 %v5226
        %v5362 = vunpack.c.l.b16 %v5227
        %v5363 = vunpack.c.l.b16 %v5228
        %v5364 = vunpack.c.l.b16 %v5229
        %v5365 = vunpack.c.l.b16 %v5230
        %v5366 = vunpack.c.l.b16 %v5231
        %v5367 = vunpack.c.l.b16 %v5232
        %v5368 = vunpack.c.l.b16 %v5233
        %v5369 = vunpack.c.l.b16 %v5234
        %v5370 = vunpack.c.l.b16 %v5235
        %v5371 = vunpack.c.l.b16 %v5236
        %v5372 = vunpack.c.l.b16 %v5237
        %v5373 = vunpack.c.l.b16 %v5238
        %v5374 = vunpack.c.l.b16 %v5239
        %v5375 = vunpack.c.l.b16 %v5240
        %v5376 = vunpack.c.l.b16 %v5241
        %v5377 = vunpack.c.l.b16 %v5242
        %v5378 = vunpack.c.l.b16 %v5243
        %v5379 = vunpack.c.l.b16 %v5244
        %v5380 = vunpack.c.l.b16 %v5245
        %v5381 = vunpack.c.l.b16 %v5246
        %v5382 = vunpack.c.l.b16 %v5247
        %v5383 = vunpack.c.l.b16 %v5248
        %v5384 = vunpack.c.l.b16 %v5249
        %v5385 = vunpack.c.l.b16 %v5250
        %v5386 = vunpack.c.l.b16 %v5251
        %v5387 = vunpack.c.l.b16 %v5252
        %v5388 = vunpack.c.l.b16 %v5253
        %v5389 = vunpack.c.l.b16 %v5254
        %v5390 = vunpack.c.l.b16 %v5255
        %v5391 = vunpack.c.l.b16 %v5256
        %v5392 = vunpack.c.l.b16 %v5257
        %v5393 = vunpack.c.l.b16 %v5258
        %v5394 = vunpack.c.l.b16 %v5259
        %v5395 = vunpack.c.l.b16 %v5260
        %v5396 = vunpack.c.l.b16 %v5261
        %v5397 = vunpack.c.l.b16 %v5262
        %v5398 = vunpack.c.l.b16 %v5263
        %v5399 = vunpack.c.l.b16 %v5264
        %v5400 = vunpack.c.l.b16 %v5265
        %v5401 = vunpack.c.l.b16 %v5266
        %v5402 = vunpack.c.l.b16 %v5267
        %v5403 = vunpack.c.l.b16 %v5268
        %v5404 = vunpack.c.l.b16 %v5269
        %v5405 = vunpack.c.l.b16 %v5270
        %v5406 = vunpack.c.l.b16 %v5271
        %v5407 = vunpack.c.l.b16 %v5272
        %v5408 = vpack.c.b16 %v5345, %v5344
        %v5409 = vpack.c.b16 %v5347, %v5346
        %v5410 = vpack.c.b16 %v5349, %v5348
        %v5411 = vpack.c.b16 %v5351, %v5350
        %v5412 = vpack.c.b16 %v5353, %v5352
        %v5413 = vpack.c.b16 %v5355, %v5354
        %v5414 = vpack.c.b16 %v5357, %v5356
        %v5415 = vpack.c.b16 %v5359, %v5358
        %v5416 = vpack.c.b16 %v5361, %v5360
        %v5417 = vpack.c.b16 %v5363, %v5362
        %v5418 = vpack.c.b16 %v5365, %v5364
        %v5419 = vpack.c.b16 %v5367, %v5366
        %v5420 = vpack.c.b16 %v5369, %v5368
        %v5421 = vpack.c.b16 %v5371, %v5370
        %v5422 = vpack.c.b16 %v5373, %v5372
        %v5423 = vpack.c.b16 %v5375, %v5374
        %v5424 = vpack.c.b16 %v5377, %v5376
        %v5425 = vpack.c.b16 %v5379, %v5378
        %v5426 = vpack.c.b16 %v5381, %v5380
        %v5427 = vpack.c.b16 %v5383, %v5382
        %v5428 = vpack.c.b16 %v5385, %v5384
        %v5429 = vpack.c.b16 %v5387, %v5386
        %v5430 = vpack.c.b16 %v5389, %v5388
        %v5431 = vpack.c.b16 %v5391, %v5390
        %v5432 = vpack.c.b16 %v5393, %v5392
        %v5433 = vpack.c.b16 %v5395, %v5394
        %v5434 = vpack.c.b16 %v5397, %v5396
        %v5435 = vpack.c.b16 %v5399, %v5398
        %v5436 = vpack.c.b16 %v5401, %v5400
        %v5437 = vpack.c.b16 %v5403, %v5402
        %v5438 = vpack.c.b16 %v5405, %v5404
        %v5439 = vpack.c.b16 %v5407, %v5406
        %5472 = vmatprep.subr.bf16.mxu0 0
        %5473 = vmatpush1.bf16.msra.mxu0 %v5415
        %5474 = vmatprep.subr.bf16.mxu0 0
        %5475 = vmatpush1.bf16.msra.mxu0 %v5414
        %5476 = vmatprep.subr.bf16.mxu0 0
        %5477 = vmatpush1.bf16.msra.mxu0 %v5413
        %5478 = vmatprep.subr.bf16.mxu0 0
        %5479 = vmatpush1.bf16.msra.mxu0 %v5412
        %5480 = vmatprep.subr.bf16.mxu0 0
        %5481 = vmatpush1.bf16.msra.mxu0 %v5411
        %5482 = vmatprep.subr.bf16.mxu0 0
        %5483 = vmatpush1.bf16.msra.mxu0 %v5410
        %5484 = vmatprep.subr.bf16.mxu0 0
        %5485 = vmatpush1.bf16.msra.mxu0 %v5409
        %5486 = vmatprep.subr.bf16.mxu0 0
        %5487 = vmatpush1.bf16.msra.mxu0 %v5408
        %5488 = vmatprep.subr.bf16.mxu0 0
        %5489 = vmatpush2.bf16.msra.mxu0 %v5423
        %5490 = vmatprep.subr.bf16.mxu0 0
        %5491 = vmatpush2.bf16.msra.mxu0 %v5422
        %5492 = vmatprep.subr.bf16.mxu0 0
        %5493 = vmatpush2.bf16.msra.mxu0 %v5421
        %5494 = vmatprep.subr.bf16.mxu0 0
        %5495 = vmatpush2.bf16.msra.mxu0 %v5420
        %5496 = vmatprep.subr.bf16.mxu0 0
        %5497 = vmatpush2.bf16.msra.mxu0 %v5419
        %5498 = vmatprep.subr.bf16.mxu0 0
        %5499 = vmatpush2.bf16.msra.mxu0 %v5418
        %5500 = vmatprep.subr.bf16.mxu0 0
        %5501 = vmatpush2.bf16.msra.mxu0 %v5417
        %5502 = vmatprep.subr.bf16.mxu0 0
        %5503 = vmatpush2.bf16.msra.mxu0 %v5416
        %5504 = vmatprep.mubr.bf16.mxu0 %v5206
        %5505 = vmatmul.mubr.bf16.gmra.mxu0 %v5205
        %v5506 = vpop.f32.mrf.mxu0
        %v5507 = vadd.f32 %v5278, %v5506
        %v5508 = vpop.f32.mrf.mxu0
        %v5509 = vpop.f32.mrf.mxu0
        %v5510 = vadd.f32 %v5278, %v5509
        %v5511 = vpop.f32.mrf.mxu0
        %5512 = vdwg.mxu0
        %5513 = vmatprep.subr.bf16.mxu0 0
        %5514 = vmatpush1.bf16.msra.mxu0 %v5431
        %5515 = vmatprep.subr.bf16.mxu0 0
        %5516 = vmatpush1.bf16.msra.mxu0 %v5430
        %5517 = vmatprep.subr.bf16.mxu0 0
        %5518 = vmatpush1.bf16.msra.mxu0 %v5429
        %5519 = vmatprep.subr.bf16.mxu0 0
        %5520 = vmatpush1.bf16.msra.mxu0 %v5428
        %5521 = vmatprep.subr.bf16.mxu0 0
        %5522 = vmatpush1.bf16.msra.mxu0 %v5427
        %5523 = vmatprep.subr.bf16.mxu0 0
        %5524 = vmatpush1.bf16.msra.mxu0 %v5426
        %5525 = vmatprep.subr.bf16.mxu0 0
        %5526 = vmatpush1.bf16.msra.mxu0 %v5425
        %5527 = vmatprep.subr.bf16.mxu0 0
        %5528 = vmatpush1.bf16.msra.mxu0 %v5424
        %5529 = vmatprep.subr.bf16.mxu0 0
        %5530 = vmatpush2.bf16.msra.mxu0 %v5439
        %5531 = vmatprep.subr.bf16.mxu0 0
        %5532 = vmatpush2.bf16.msra.mxu0 %v5438
        %5533 = vmatprep.subr.bf16.mxu0 0
        %5534 = vmatpush2.bf16.msra.mxu0 %v5437
        %5535 = vmatprep.subr.bf16.mxu0 0
        %5536 = vmatpush2.bf16.msra.mxu0 %v5436
        %5537 = vmatprep.subr.bf16.mxu0 0
        %5538 = vmatpush2.bf16.msra.mxu0 %v5435
        %5539 = vmatprep.subr.bf16.mxu0 0
        %5540 = vmatpush2.bf16.msra.mxu0 %v5434
        %5541 = vmatprep.subr.bf16.mxu0 0
        %5542 = vmatpush2.bf16.msra.mxu0 %v5433
        %5543 = vmatprep.subr.bf16.mxu0 0
        %5544 = vmatpush2.bf16.msra.mxu0 %v5432
        %5545 = vmatprep.mubr.bf16.mxu0 %v5208
        %5546 = vmatmul.mubr.bf16.gmra.mxu0 %v5207
        %v5547 = vpop.f32.mrf.mxu0
        %v5548 = vadd.f32 %v5507, %v5547
        %v5549 = vpop.f32.mrf.mxu0
        %v5550 = vpop.f32.mrf.mxu0
        %v5551 = vadd.f32 %v5510, %v5550
        %v5552 = vpop.f32.mrf.mxu0
        %5553 = vdwg.mxu0
        %v5554 = vmax.f32 %v5548, 0.0
        %v5555 = vmax.f32 %v5551, 0.0
        %v5556 = vpack.c.bf16 %v5555, %v5554
        %v5557 = vld [vmem:[%s9] sm:$0xf]
        %v5558 = vld [vmem:[%s9 + $0x4] sm:$0xf]
        %v5559 = vld [vmem:[%s9 + $0x8] sm:$0xf]
        %v5560 = vld [vmem:[%s9 + $0xc] sm:$0xf]
        %v5561 = vld [vmem:[%s9 + $0x10] sm:$0xf]
        %v5562 = vld [vmem:[%s9 + $0x14] sm:$0xf]
        %v5563 = vld [vmem:[%s9 + $0x18] sm:$0xf]
        %v5564 = vld [vmem:[%s9 + $0x1c] sm:$0xf]
        %v5565 = vld [vmem:[%s10] sm:$0x1]
        %v5567 = vlaneseq
        %v5568 = vshrl.u32 %v5567, 7
        %v5569 = vsub.s32 0, %v5568
        %v5570 = vrot.slane %v5565, %v5569
        %v5580 = vunpack.c.l.b16 %v5557
        %v5581 = vunpack.c.l.b16 %v5558
        %v5582 = vunpack.c.l.b16 %v5559
        %v5583 = vunpack.c.l.b16 %v5560
        %v5584 = vunpack.c.l.b16 %v5561
        %v5585 = vunpack.c.l.b16 %v5562
        %v5586 = vunpack.c.l.b16 %v5563
        %v5587 = vunpack.c.l.b16 %v5564
        %v5588 = vpack.c.b16 %v5581, %v5580
        %v5589 = vpack.c.b16 %v5583, %v5582
        %v5590 = vpack.c.b16 %v5585, %v5584
        %v5591 = vpack.c.b16 %v5587, %v5586
        %v5597 = vsel %vm3535, %v5556, 0
        %5599 = vmatprep.subr.bf16.mxu0 0
        %5600 = vmatpush1.bf16.msra.mxu0 0
        %5601 = vmatprep.subr.bf16.mxu0 0
        %5602 = vmatpush1.bf16.msra.mxu0 0
        %5603 = vmatprep.subr.bf16.mxu0 0
        %5604 = vmatpush1.bf16.msra.mxu0 0
        %5605 = vmatprep.subr.bf16.mxu0 0
        %5606 = vmatpush1.bf16.msra.mxu0 0
        %5607 = vmatprep.subr.bf16.mxu0 0
        %5608 = vmatpush1.bf16.msra.mxu0 %v5591
        %5609 = vmatprep.subr.bf16.mxu0 0
        %5610 = vmatpush1.bf16.msra.mxu0 %v5590
        %5611 = vmatprep.subr.bf16.mxu0 0
        %5612 = vmatpush1.bf16.msra.mxu0 %v5589
        %5613 = vmatprep.subr.bf16.mxu0 0
        %5614 = vmatpush1.bf16.msra.mxu0 %v5588
        %5615 = vmatprep.subr.bf16.mxu0 0
        %5616 = vmatpush2.bf16.msra.mxu0 0
        %5617 = vmatprep.subr.bf16.mxu0 0
        %5618 = vmatpush2.bf16.msra.mxu0 0
        %5619 = vmatprep.subr.bf16.mxu0 0
        %5620 = vmatpush2.bf16.msra.mxu0 0
        %5621 = vmatprep.subr.bf16.mxu0 0
        %5622 = vmatpush2.bf16.msra.mxu0 0
        %5623 = vmatprep.subr.bf16.mxu0 0
        %5624 = vmatpush2.bf16.msra.mxu0 0
        %5625 = vmatprep.subr.bf16.mxu0 0
        %5626 = vmatpush2.bf16.msra.mxu0 0
        %5627 = vmatprep.subr.bf16.mxu0 0
        %5628 = vmatpush2.bf16.msra.mxu0 0
        %5629 = vmatprep.subr.bf16.mxu0 0
        %5630 = vmatpush2.bf16.msra.mxu0 0
        %5631 = vmatprep.mubr.bf16.mxu0 0
        %5632 = vmatmul.mubr.bf16.gmra.mxu0 %v5597
        %v5633 = vpop.f32.mrf.mxu0
        %v5634 = vadd.f32 %v5570, %v5633
        %v5635 = vpop.f32.mrf.mxu0
        %v5636 = vpop.f32.mrf.mxu0
        %v5637 = vadd.f32 %v5570, %v5636
        %v5638 = vpop.f32.mrf.mxu0
        %5639 = vdwg.mxu0
        %v5640 = vlaneseq
        %v5641 = vand.u32 %v5640, 127
        %vm5642 = vcmp.lt.s32.totalorder %v5641, 10
        %v5643 = vsel %vm5642, %v5634, -inf
        %v5644 = vsel %vm5642, %v5637, -inf
        %5645 = vmax.xlane.f32.xlu0 %v5643
        %v5646 = vpop.xlane.xlu0 %5645
        %5647 = vmax.xlane.f32.xlu0 %v5644
        %v5648 = vpop.xlane.xlu0 %5647
        %v5649 = vsub.f32 %v5643, %v5646
        %v5650 = vsub.f32 %v5644, %v5648
        %v5651 = vmul.f32 %v5649, 1.442695
        %v5652 = vpow.pop %v5651
        %v5653 = vmul.f32 %v5650, 1.442695
        %v5654 = vpow.pop %v5653
        %5655 = vadd.xlane.f32.xlu0 %v5652
        %v5656 = vpop.xlane.xlu0 %5655
        %5657 = vadd.xlane.f32.xlu0 %v5654
        %v5658 = vpop.xlane.xlu0 %5657
        %v5659 = vlog2.pop %v5656
        %v5660 = vmul.f32 %v5659, 0.6931472
        %v5661 = vlog2.pop %v5658
        %v5662 = vmul.f32 %v5661, 0.6931472
        %v5663 = vsub.f32 %v5649, %v5660
        %v5664 = vsub.f32 %v5650, %v5662
        %5665 = vst [vmem:[%s651] sm:$0xff] %v5663
        %5666 = vst [vmem:[%s651 + $0x8] sm:$0xff] %v5664
        %s5667 = smul.u32 2, %s22
        %p5668 = scmp.lt.s32.totalorder %s5667, 3
        %s5669 = scalar_select %p5668, %s5667, 3
        %s5670 = smul.addr %s5669, 8
        %s5671 = scalar_lea.vmem %s11, %s5670
        // Predicated region
        $region106: #{_lambda_.1} parent=100 // pred_check
          %p5672 = pneg %p276
        $region107: #{_lambda_.1} parent=100 // pred_check_branch
          %5674 = sbr.rel (%p5672) target = $region109
        $region108: #{_lambda_.1} parent=100 // pred_region
          %s5675 = smul.u32 2, %s22
        $region109: #{_lambda_.1} parent=100 // pred_fallthru
          _
      $region101: #{_lambda_.1} parent=5 // pred_fallthru
        _
      %p5676 = scmp.le.s32.totalorder 2, %s17
      // Predicated region
      $region110: #{_lambda_.1} parent=5 // pred_check
        %p5677 = pneg %p5676
      $region111: #{_lambda_.1} parent=5 // pred_check_branch
        %5679 = sbr.rel (%p5677) target = $region113
      $region112: #{_lambda_.1} parent=5 // pred_region
        %s5680 = ssub.s32 %s17, 2
        // Predicated region
        $region114: #{_lambda_.1} parent=112 // pred_check
          %p5681 = pneg %p282
        $region115: #{_lambda_.1} parent=112 // pred_check_branch
          %5683 = sbr.rel (%p5681) target = $region117
        $region116: #{_lambda_.1} parent=112 // pred_region
          %s5684 = smul.u32 2, %s23
          %p5685 = scmp.lt.s32.totalorder %s5684, 3
          %s5686 = scalar_select %p5685, %s5684, 3
          %s5687 = smul.addr %s5686, 8
          %s5688 = scalar_lea.vmem %s11, %s5687
        $region117: #{_lambda_.1} parent=112 // pred_fallthru
          _
      $region113: #{_lambda_.1} parent=5 // pred_fallthru
        _
    $region6: #{_lambda_.1} parent=1 // loop_footer
      %s21 = sadd.s32 1, %s17
    $region7: #{_lambda_.1} parent=1 // loop_footer_branch
      %16 = sbr.rel target = $region3
    $region8: #{_lambda_.1} parent=1 // loop_exit
      _

</llo_original>
